<compile_context>
chip_gen: v6e
topology: v6e:2x2x1
jax: 0.10.0
libtpu: 0.0.40
codegen_flags: <defaults>
</compile_context>

<pallas_src>
import numpy as np
import jax
import jax.numpy as jnp
from jax import lax
from jax.experimental import pallas as pl
from jax.experimental.pallas import tpu as pltpu

# ---------------- small synthetic configuration ----------------
BATCH = 2
IN_CHANNELS = 3
OUT_CHANNELS = 3            # decoder output_dim (rgb)
RENDER_SIZE = 8             # rendered image size -> num_rays = 64
PLANE_RES = 16              # triplane spatial resolution
F_DIM = 8                   # triplane feature dim (decoder input dim)
HIDDEN = 32                 # MLP hidden dim
DEPTH_SAMPLES = 8           # samples per ray
RAY_START = 1.0
RAY_END = 3.0
BOX_WARP = 4.0
NUM_PLANES = 3

NUM_RAYS = RENDER_SIZE * RENDER_SIZE          # 64 rays
M = NUM_RAYS * DEPTH_SAMPLES                  # 512 points per batch element (sample-major)
HW = PLANE_RES * PLANE_RES

# TODO(synk): sample_stratified's random per-sample jitter omitted (deterministic linspace).
DEPTHS_NP = np.linspace(RAY_START, RAY_END, DEPTH_SAMPLES).astype(np.float32)


def generate_planes_np():
    return np.array([[[1, 0, 0], [0, 1, 0], [0, 0, 1]],
                     [[1, 0, 0], [0, 0, 1], [0, 1, 0]],
                     [[0, 0, 1], [1, 0, 0], [0, 1, 0]]], dtype=np.float32)


INV_PLANE_AXES_NP = np.linalg.inv(generate_planes_np()).astype(np.float32)


# ======================================================================
# Fused Pallas kernel: triplane bilinear sampling (grid_sample, align_corners=False,
# padding_mode='zeros'), mean over planes, 2-layer MLP, sigma/rgb activation, and
# volume rendering -- all per batch element, with points on the lane axis.
# ======================================================================
def _nerf_fused_kernel(coord_ref, feat_ref, w1_ref, b1_ref, w2_ref, b2_ref,
                       rgb_ref, dep_ref, sr_ref):
    # coord_ref : (1, 2*NUM_PLANES, M)  pixel-space coords, rows [2p]=cx_p, [2p+1]=cy_p
    # feat_ref  : (NUM_PLANES, PLANE_RES*F_DIM, PLANE_RES)  feat[p, x*F + c, y] = planes[p,c,y,x]
    # w1_ref    : (HIDDEN, F_DIM)      b1_ref : (HIDDEN, 1)
    # w2_ref    : (1+OUT, HIDDEN)      b2_ref : (1+OUT, 1)
    # rgb_ref   : (1, OUT_CHANNELS, NUM_RAYS)   dep_ref : (1, 1, NUM_RAYS)
    # sr_ref    : VMEM scratch (1+OUT, M): row 0 = raw sigma, rows 1: = activated rgb
    Hp = Wp = PLANE_RES
    F = F_DIM
    R = NUM_RAYS
    S = DEPTH_SAMPLES

    # Bilinear "tent" weights, built separably.  Weight of pixel k for coordinate c is
    # max(0, 1 - |k - c|), which equals grid_sample's bilinear weights with zero padding.
    y_pix = lax.broadcasted_iota(jnp.int32, (Hp, M), 0).astype(jnp.float32)        # (16, M)
    x_pix = jnp.floor(
        lax.broadcasted_iota(jnp.int32, (Wp * F, M), 0).astype(jnp.float32) * (1.0 / F)
    )                                                                               # (128, M)

    acc = jnp.zeros((F, M), jnp.float32)                     # mean-plane features, (F, M)
    for p in range(NUM_PLANES):
        cx = coord_ref[0, 2 * p:2 * p + 1, :]                # (1, M)
        cy = coord_ref[0, 2 * p + 1:2 * p + 2, :]            # (1, M)
        wy = jnp.maximum(1.0 - jnp.abs(y_pix - cy), 0.0)     # (Hp, M)
        wxe = jnp.maximum(1.0 - jnp.abs(x_pix - cx), 0.0)    # (Wp*F, M), row x*F+c = wx[x]
        # contract y on the MXU: t[x*F + c, m] = sum_y planes[p, c, y, x] * wy[y, m]
        t = jnp.dot(feat_ref[p], wy, preferred_element_type=jnp.float32)  # (Wp*F, M)
        u = t * wxe
        # contract x (aligned 8-row vreg groups, pure VALU adds)
        for xi in range(Wp):
            acc = acc + u[xi * F:(xi + 1) * F, :]
    acc = acc * (1.0 / NUM_PLANES)                           # mean over the three planes

    # 2-layer MLP (points on lanes: N = M = 512 fills the MXU columns)
    h = jnp.dot(w1_ref[...], acc, preferred_element_type=jnp.float32) + b1_ref[...]
    h = jnp.maximum(h, 0.0)
    out = jnp.dot(w2_ref[...], h, preferred_element_type=jnp.float32) + b2_ref[...]  # (4, M)

    # rgb = sigmoid(out[1:]) * (1 + 2*0.001) - 0.001 ; sigma = raw out[0]
    act = pl.reciprocal(1.0 + jnp.exp(-out), approx=True) * (1.0 + 2.0 * 0.001) - 0.001
    row = lax.broadcasted_iota(jnp.int32, out.shape, 0)
    sr_ref[...] = jnp.where(row == 0, out, act)

    # ---- volume rendering (softplus density, alpha compositing over S samples) ----
    T = jnp.ones((1, R), jnp.float32)
    rgb_acc = jnp.zeros((OUT_CHANNELS, R), jnp.float32)
    dep_acc = jnp.zeros((1, R), jnp.float32)
    opac = jnp.zeros((1, R), jnp.float32)
    for s in range(S):
        d_s = float(DEPTHS_NP[s])
        d_next = float(DEPTHS_NP[s + 1]) if s < S - 1 else float(RAY_END)
        delta = d_next - d_s
        sig_s = sr_ref[0:1, s * R:(s + 1) * R]               # (1, R)
        rgb_s = sr_ref[1:1 + OUT_CHANNELS, s * R:(s + 1) * R]  # (3, R)
        xs = sig_s - 1.0
        dens = jnp.maximum(xs, 0.0) + jnp.log(1.0 + jnp.exp(-jnp.abs(xs)))  # softplus
        alpha = 1.0 - jnp.exp(-dens * delta)
        w = alpha * T
        rgb_acc = rgb_acc + w * rgb_s
        dep_acc = dep_acc + w * d_s
        opac = opac + w
        T = T * (1.0 - alpha + 1e-10)

    rgb_ref[0] = rgb_acc * 2.0 - 1.0
    dep_ref[0] = dep_acc + (1.0 - opac) * float(RAY_END)


def pallas_pixel_nerf(coord, feat, w1t, b1c, w2t, b2c):
    B = coord.shape[0]
    return pl.pallas_call(
        _nerf_fused_kernel,
        out_shape=(jax.ShapeDtypeStruct((B, OUT_CHANNELS, NUM_RAYS), jnp.float32),
                   jax.ShapeDtypeStruct((B, 1, NUM_RAYS), jnp.float32)),
        grid=(B,),
        in_specs=[
            pl.BlockSpec((1, 2 * NUM_PLANES, M), lambda b: (b, 0, 0)),
            pl.BlockSpec((NUM_PLANES, PLANE_RES * F_DIM, PLANE_RES), lambda b: (0, 0, 0)),
            pl.BlockSpec((HIDDEN, F_DIM), lambda b: (0, 0)),
            pl.BlockSpec((HIDDEN, 1), lambda b: (0, 0)),
            pl.BlockSpec((1 + OUT_CHANNELS, HIDDEN), lambda b: (0, 0)),
            pl.BlockSpec((1 + OUT_CHANNELS, 1), lambda b: (0, 0)),
        ],
        out_specs=(pl.BlockSpec((1, OUT_CHANNELS, NUM_RAYS), lambda b: (b, 0, 0)),
                   pl.BlockSpec((1, 1, NUM_RAYS), lambda b: (b, 0, 0))),
        scratch_shapes=[pltpu.VMEM((1 + OUT_CHANNELS, M), jnp.float32)],
        compiler_params=pltpu.CompilerParams(dimension_semantics=("parallel",)),
    )(coord, feat, w1t, b1c, w2t, b2c)


# ======================================================================
# Plain-JAX glue (ray generation, stratified depths, plane projection)
# ======================================================================
def generate_rays(camera, resolution):
    # camera: (N, 25) = [cam2world (16), intrinsics (9)]
    N = camera.shape[0]
    cam2world = camera[:, :16].reshape(N, 4, 4)
    intrinsics = camera[:, 16:25].reshape(N, 3, 3)
    fx = intrinsics[:, 0, 0][:, None]
    fy = intrinsics[:, 1, 1][:, None]
    cx = intrinsics[:, 0, 2][:, None]
    cy = intrinsics[:, 1, 2][:, None]
    sk = intrinsics[:, 0, 1][:, None]

    ii, jj = jnp.meshgrid(jnp.arange(resolution, dtype=jnp.float32),
                          jnp.arange(resolution, dtype=jnp.float32), indexing="ij")
    R = resolution * resolution
    x_cam = jnp.broadcast_to(((jj + 0.5) / resolution).reshape(-1)[None, :], (N, R))
    y_cam = jnp.broadcast_to(((ii + 0.5) / resolution).reshape(-1)[None, :], (N, R))
    z_cam = jnp.ones((N, R), jnp.float32)

    x_lift = (x_cam - cx + cy * sk / fy - sk * y_cam / fy) / fx * z_cam
    y_lift = (y_cam - cy) / fy * z_cam
    cam_rel = jnp.stack([x_lift, y_lift, z_cam, jnp.ones_like(z_cam)], axis=-1)   # (N,R,4)
    world = jnp.einsum("nij,nrj->nri", cam2world, cam_rel)[..., :3]
    cam_locs = cam2world[:, :3, 3]
    ray_dirs = world - cam_locs[:, None, :]
    ray_dirs = ray_dirs / jnp.linalg.norm(ray_dirs, axis=-1, keepdims=True)
    ray_origins = jnp.broadcast_to(cam_locs[:, None, :], ray_dirs.shape)
    return ray_origins, ray_dirs


@jax.jit
def pixel_nerf_forward(params, x, timesteps, y):
    assert y.shape[-1] == 25, "input y must be camera (25,) for now."
    del timesteps  # fixed_plane encoder ignores x/timesteps (planes are a learned constant)
    B = x.shape[0]

    # rearrange triplane features once: feat[p, x*F + c, y] = planes[p, c, y, x]
    feat = jnp.transpose(params["planes"], (0, 3, 1, 2)).reshape(
        NUM_PLANES, PLANE_RES * F_DIM, PLANE_RES)

    ray_o, ray_d = generate_rays(y, RENDER_SIZE)                    # (B, R, 3)
    depth_vals = jnp.asarray(DEPTHS_NP)
    # sample-major point ordering: m = s * NUM_RAYS + r  (ray-contiguous lanes per sample)
    points = ray_o[:, None, :, :] + depth_vals[None, :, None, None] * ray_d[:, None, :, :]
    points = points.reshape(B, M, 3)

    inv_axes = jnp.asarray(INV_PLANE_AXES_NP)                       # (3, 3, 3)
    proj = jnp.einsum("bmk,pkj->bpmj", (2.0 / BOX_WARP) * points, inv_axes)[..., :2]
    # grid_sample pixel-space coords (align_corners=False)
    cx = (proj[..., 0] + 1.0) * (PLANE_RES * 0.5) - 0.5             # (B, P, M)
    cy = (proj[..., 1] + 1.0) * (PLANE_RES * 0.5) - 0.5
    coord = jnp.stack([cx, cy], axis=2).reshape(B, 2 * NUM_PLANES, M)

    w1t = params["w1"].T                                            # (HIDDEN, F_DIM)
    b1c = params["b1"].reshape(HIDDEN, 1)
    w2t = params["w2"].T                                            # (1+OUT, HIDDEN)
    b2c = params["b2"].reshape(1 + OUT_CHANNELS, 1)

    rgb_out, dep_out = pallas_pixel_nerf(coord, feat, w1t, b1c, w2t, b2c)
    rgb_output = rgb_out.reshape(B, OUT_CHANNELS, RENDER_SIZE, RENDER_SIZE)
    depth_output = dep_out.reshape(B, 1, RENDER_SIZE, RENDER_SIZE)
    return rgb_output, depth_output


# ---------------- pure-JAX reference (independent; for numeric sanity check) ----------------
def reference_forward(params, x, timesteps, y):
    B = x.shape[0]
    feat = jnp.transpose(params["planes"], (0, 2, 3, 1)).reshape(NUM_PLANES, HW, F_DIM)
    ray_o, ray_d = generate_rays(y, RENDER_SIZE)
    depths = jnp.broadcast_to(jnp.asarray(DEPTHS_NP).reshape(1, 1, DEPTH_SAMPLES, 1),
                              (B, NUM_RAYS, DEPTH_SAMPLES, 1))
    points = (ray_o[:, :, None, :] + depths * ray_d[:, :, None, :]).reshape(B, M, 3)

    inv_axes = jnp.asarray(INV_PLANE_AXES_NP)
    proj = jnp.einsum("bmk,pkj->bpmj", (2.0 / BOX_WARP) * points, inv_axes)[..., :2]
    uu = proj[..., 0]
    vv = proj[..., 1]                                  # (B, P, M)
    ix = ((uu + 1.0) * PLANE_RES - 1.0) * 0.5
    iy = ((vv + 1.0) * PLANE_RES - 1.0) * 0.5
    ix0 = jnp.floor(ix)
    iy0 = jnp.floor(iy)
    fx = ix - ix0
    fy = iy - iy0
    ix0i = ix0.astype(jnp.int32)
    iy0i = iy0.astype(jnp.int32)
    plane_idx = jnp.arange(NUM_PLANES)[None, :, None]
    acc = jnp.zeros(uu.shape + (F_DIM,), jnp.float32)
    for dx, dy, w in [(0, 0, (1 - fx) * (1 - fy)), (1, 0, fx * (1 - fy)),
                      (0, 1, (1 - fx) * fy), (1, 1, fx * fy)]:
        cxi = ix0i + dx
        cyi = iy0i + dy
        valid = (cxi >= 0) & (cxi <= PLANE_RES - 1) & (cyi >= 0) & (cyi <= PLANE_RES - 1)
        flat = jnp.clip(cyi * PLANE_RES + cxi, 0, HW - 1)
        g = feat[plane_idx, flat]                      # (B, P, M, F_DIM)
        acc = acc + jnp.where(valid[..., None], w[..., None] * g, 0.0)
    xf = acc.mean(axis=1)                              # (B, M, F_DIM)
    h = jnp.maximum(xf @ params["w1"] + params["b1"], 0.0)
    outm = h @ params["w2"] + params["b2"]
    sigma = outm[..., 0:1].reshape(B, NUM_RAYS, DEPTH_SAMPLES, 1)
    rgb = (jax.nn.sigmoid(outm[..., 1:]) * (1 + 2 * 0.001) - 0.001).reshape(
        B, NUM_RAYS, DEPTH_SAMPLES, OUT_CHANNELS)

    deltas = jnp.concatenate([depths[:, :, 1:] - depths[:, :, :-1],
                              RAY_END - depths[:, :, -1:]], axis=2)
    dens = jax.nn.softplus(sigma - 1.0)
    alpha = 1.0 - jnp.exp(-dens * deltas)
    alpha_shifted = jnp.concatenate([jnp.ones_like(alpha[:, :, :1]), 1 - alpha + 1e-10], axis=2)
    weights = alpha * jnp.cumprod(alpha_shifted, axis=2)[:, :, :-1]
    rgb_out = jnp.sum(weights * rgb, axis=2) * 2 - 1
    depth_out = jnp.sum(weights * depths, axis=2)
    opacity = jnp.sum(weights, axis=2)
    depth_out = depth_out + (1 - opacity) * RAY_END
    rgb_output = jnp.transpose(rgb_out, (0, 2, 1)).reshape(B, OUT_CHANNELS, RENDER_SIZE, RENDER_SIZE)
    depth_output = jnp.transpose(depth_out, (0, 2, 1)).reshape(B, 1, RENDER_SIZE, RENDER_SIZE)
    return rgb_output, depth_output


# ---------------- deterministic parameter / input construction ----------------
def make_params(key):
    k_planes, k_w1, k_b1, k_w2, k_b2 = jax.random.split(key, 5)
    lim1 = 1.0 / np.sqrt(F_DIM)
    lim2 = 1.0 / np.sqrt(HIDDEN)
    return {
        "planes": jax.random.normal(k_planes, (NUM_PLANES, F_DIM, PLANE_RES, PLANE_RES),
                                    jnp.float32),
        "w1": jax.random.uniform(k_w1, (F_DIM, HIDDEN), jnp.float32, -lim1, lim1),
        "b1": jax.random.uniform(k_b1, (1, HIDDEN), jnp.float32, -lim1, lim1),
        "w2": jax.random.uniform(k_w2, (HIDDEN, 1 + OUT_CHANNELS), jnp.float32, -lim2, lim2),
        "b2": jax.random.uniform(k_b2, (1, 1 + OUT_CHANNELS), jnp.float32, -lim2, lim2),
    }


def make_camera(batch):
    cams = []
    for b in range(batch):
        c2w = np.eye(4, dtype=np.float32)
        c2w[0, 3] = 0.1 * b
        c2w[2, 3] = -2.0
        intr = np.array([[1.0, 0.0, 0.5],
                         [0.0, 1.0, 0.5],
                         [0.0, 0.0, 1.0]], dtype=np.float32)
        cams.append(np.concatenate([c2w.reshape(-1), intr.reshape(-1)]))
    return jnp.asarray(np.stack(cams))


if __name__ == "__main__":
    key = jax.random.PRNGKey(0)
    k_params, k_x = jax.random.split(key, 2)
    params = make_params(k_params)

    x = jax.random.normal(k_x, (BATCH, IN_CHANNELS, RENDER_SIZE, RENDER_SIZE), jnp.float32)
    timesteps = jnp.arange(BATCH, dtype=jnp.float32)
    y = make_camera(BATCH)    # (B, 25) camera

    rgb_output, depth_output = pixel_nerf_forward(params, x, timesteps, y)
    jax.block_until_ready(rgb_output)
    jax.block_until_ready(depth_output)

    rgb_ref, depth_ref = reference_forward(params, x, timesteps, y)
    np.testing.assert_allclose(np.asarray(rgb_output), np.asarray(rgb_ref),
                               rtol=2e-3, atol=2e-3)
    np.testing.assert_allclose(np.asarray(depth_output), np.asarray(depth_ref),
                               rtol=2e-3, atol=2e-3)
    print("KERNEL_OK")
</pallas_src>

<mosaic_0001>
module attributes {stable_mosaic.version = 11 : i64} {
  func.func @_nerf_fused_kernel(%arg0: i32, %arg1: memref<1x6x512xf32, #tpu.memory_space<vmem>>, %arg2: memref<3x128x16xf32, #tpu.memory_space<vmem>>, %arg3: memref<32x8xf32, #tpu.memory_space<vmem>>, %arg4: memref<32x1xf32, #tpu.memory_space<vmem>>, %arg5: memref<4x32xf32, #tpu.memory_space<vmem>>, %arg6: memref<4x1xf32, #tpu.memory_space<vmem>>, %arg7: memref<1x3x64xf32, #tpu.memory_space<vmem>>, %arg8: memref<1x1x64xf32, #tpu.memory_space<vmem>>, %arg9: memref<4x512xf32, #tpu.memory_space<vmem>>) attributes {dimension_semantics = [#tpu.dimension_semantics<parallel>], iteration_bounds = array<i64: 2>, scalar_prefetch = 0 : i64, scratch_operands = 1 : i64, tpu.core_type = #tpu.core_type<tc>, window_params = [{transform_indices = @transform_0, window_bounds = array<i64: 1, 6, 512>}, {pipeline_mode = #tpu.pipeline_mode<synchronous>, transform_indices = @transform_1, window_bounds = array<i64: 3, 128, 16>}, {pipeline_mode = #tpu.pipeline_mode<synchronous>, transform_indices = @transform_2, window_bounds = array<i64: 32, 8>}, {pipeline_mode = #tpu.pipeline_mode<synchronous>, transform_indices = @transform_3, window_bounds = array<i64: 32, 1>}, {pipeline_mode = #tpu.pipeline_mode<synchronous>, transform_indices = @transform_4, window_bounds = array<i64: 4, 32>}, {pipeline_mode = #tpu.pipeline_mode<synchronous>, transform_indices = @transform_5, window_bounds = array<i64: 4, 1>}, {transform_indices = @transform_6, window_bounds = array<i64: 1, 3, 64>}, {transform_indices = @transform_7, window_bounds = array<i64: 1, 1, 64>}]} {
    %0 = tpu.iota {dimensions = array<i32: 0>} : vector<16x512xi32>
    %1 = arith.sitofp %0 : vector<16x512xi32> to vector<16x512xf32>
    %2 = tpu.iota {dimensions = array<i32: 0>} : vector<128x512xi32>
    %3 = arith.sitofp %2 : vector<128x512xi32> to vector<128x512xf32>
    %cst = arith.constant 1.250000e-01 : f32
    %4 = vector.broadcast %cst : f32 to vector<128x512xf32>
    %5 = arith.mulf %3, %4 : vector<128x512xf32>
    %6 = math.floor %5 : vector<128x512xf32>
    %cst_0 = arith.constant 0.000000e+00 : f32
    %7 = vector.broadcast %cst_0 : f32 to vector<8x512xf32>
    %c0 = arith.constant 0 : index
    %c0_1 = arith.constant 0 : index
    %c0_2 = arith.constant 0 : index
    %8 = vector.load %arg1[%c0, %c0_1, %c0_2] : memref<1x6x512xf32, #tpu.memory_space<vmem>>, vector<1x1x512xf32>
    %9 = vector.shape_cast %8 : vector<1x1x512xf32> to vector<1x512xf32>
    %c0_3 = arith.constant 0 : index
    %c1 = arith.constant 1 : index
    %c0_4 = arith.constant 0 : index
    %10 = vector.load %arg1[%c0_3, %c1, %c0_4] : memref<1x6x512xf32, #tpu.memory_space<vmem>>, vector<1x1x512xf32>
    %11 = vector.shape_cast %10 : vector<1x1x512xf32> to vector<1x512xf32>
    %12 = vector.broadcast %11 : vector<1x512xf32> to vector<16x512xf32>
    %13 = arith.subf %1, %12 : vector<16x512xf32>
    %14 = math.absf %13 : vector<16x512xf32>
    %cst_5 = arith.constant 1.000000e+00 : f32
    %15 = vector.broadcast %cst_5 : f32 to vector<16x512xf32>
    %16 = arith.subf %15, %14 : vector<16x512xf32>
    %cst_6 = arith.constant 0.000000e+00 : f32
    %17 = vector.broadcast %cst_6 : f32 to vector<16x512xf32>
    %18 = arith.maximumf %16, %17 : vector<16x512xf32>
    %19 = vector.broadcast %9 : vector<1x512xf32> to vector<128x512xf32>
    %20 = arith.subf %6, %19 : vector<128x512xf32>
    %21 = math.absf %20 : vector<128x512xf32>
    %cst_7 = arith.constant 1.000000e+00 : f32
    %22 = vector.broadcast %cst_7 : f32 to vector<128x512xf32>
    %23 = arith.subf %22, %21 : vector<128x512xf32>
    %cst_8 = arith.constant 0.000000e+00 : f32
    %24 = vector.broadcast %cst_8 : f32 to vector<128x512xf32>
    %25 = arith.maximumf %23, %24 : vector<128x512xf32>
    %c0_9 = arith.constant 0 : index
    %c0_10 = arith.constant 0 : index
    %c0_11 = arith.constant 0 : index
    %26 = vector.load %arg2[%c0_9, %c0_10, %c0_11] : memref<3x128x16xf32, #tpu.memory_space<vmem>>, vector<1x128x16xf32>
    %27 = vector.shape_cast %26 : vector<1x128x16xf32> to vector<128x16xf32>
    %cst_12 = arith.constant dense<0.000000e+00> : vector<128x512xf32>
    %28 = tpu.matmul %27, %18, %cst_12 {dimension_numbers = #tpu.dot_dimension_numbers<[1], [0], [0], [1], [0, 0, 1, 1], [], []>} : vector<128x16xf32>, vector<16x512xf32>, vector<128x512xf32> -> vector<128x512xf32>
    %29 = arith.mulf %28, %25 : vector<128x512xf32>
    %30 = vector.extract_strided_slice %29 {offsets = [0, 0], sizes = [8, 512], strides = [1, 1]} : vector<128x512xf32> to vector<8x512xf32>
    %31 = arith.addf %7, %30 : vector<8x512xf32>
    %32 = vector.extract_strided_slice %29 {offsets = [8, 0], sizes = [8, 512], strides = [1, 1]} : vector<128x512xf32> to vector<8x512xf32>
    %33 = arith.addf %31, %32 : vector<8x512xf32>
    %34 = vector.extract_strided_slice %29 {offsets = [16, 0], sizes = [8, 512], strides = [1, 1]} : vector<128x512xf32> to vector<8x512xf32>
    %35 = arith.addf %33, %34 : vector<8x512xf32>
    %36 = vector.extract_strided_slice %29 {offsets = [24, 0], sizes = [8, 512], strides = [1, 1]} : vector<128x512xf32> to vector<8x512xf32>
    %37 = arith.addf %35, %36 : vector<8x512xf32>
    %38 = vector.extract_strided_slice %29 {offsets = [32, 0], sizes = [8, 512], strides = [1, 1]} : vector<128x512xf32> to vector<8x512xf32>
    %39 = arith.addf %37, %38 : vector<8x512xf32>
    %40 = vector.extract_strided_slice %29 {offsets = [40, 0], sizes = [8, 512], strides = [1, 1]} : vector<128x512xf32> to vector<8x512xf32>
    %41 = arith.addf %39, %40 : vector<8x512xf32>
    %42 = vector.extract_strided_slice %29 {offsets = [48, 0], sizes = [8, 512], strides = [1, 1]} : vector<128x512xf32> to vector<8x512xf32>
    %43 = arith.addf %41, %42 : vector<8x512xf32>
    %44 = vector.extract_strided_slice %29 {offsets = [56, 0], sizes = [8, 512], strides = [1, 1]} : vector<128x512xf32> to vector<8x512xf32>
    %45 = arith.addf %43, %44 : vector<8x512xf32>
    %46 = vector.extract_strided_slice %29 {offsets = [64, 0], sizes = [8, 512], strides = [1, 1]} : vector<128x512xf32> to vector<8x512xf32>
    %47 = arith.addf %45, %46 : vector<8x512xf32>
    %48 = vector.extract_strided_slice %29 {offsets = [72, 0], sizes = [8, 512], strides = [1, 1]} : vector<128x512xf32> to vector<8x512xf32>
    %49 = arith.addf %47, %48 : vector<8x512xf32>
    %50 = vector.extract_strided_slice %29 {offsets = [80, 0], sizes = [8, 512], strides = [1, 1]} : vector<128x512xf32> to vector<8x512xf32>
    %51 = arith.addf %49, %50 : vector<8x512xf32>
    %52 = vector.extract_strided_slice %29 {offsets = [88, 0], sizes = [8, 512], strides = [1, 1]} : vector<128x512xf32> to vector<8x512xf32>
    %53 = arith.addf %51, %52 : vector<8x512xf32>
    %54 = vector.extract_strided_slice %29 {offsets = [96, 0], sizes = [8, 512], strides = [1, 1]} : vector<128x512xf32> to vector<8x512xf32>
    %55 = arith.addf %53, %54 : vector<8x512xf32>
    %56 = vector.extract_strided_slice %29 {offsets = [104, 0], sizes = [8, 512], strides = [1, 1]} : vector<128x512xf32> to vector<8x512xf32>
    %57 = arith.addf %55, %56 : vector<8x512xf32>
    %58 = vector.extract_strided_slice %29 {offsets = [112, 0], sizes = [8, 512], strides = [1, 1]} : vector<128x512xf32> to vector<8x512xf32>
    %59 = arith.addf %57, %58 : vector<8x512xf32>
    %60 = vector.extract_strided_slice %29 {offsets = [120, 0], sizes = [8, 512], strides = [1, 1]} : vector<128x512xf32> to vector<8x512xf32>
    %61 = arith.addf %59, %60 : vector<8x512xf32>
    %c0_13 = arith.constant 0 : index
    %c2 = arith.constant 2 : index
    %c0_14 = arith.constant 0 : index
    %62 = vector.load %arg1[%c0_13, %c2, %c0_14] : memref<1x6x512xf32, #tpu.memory_space<vmem>>, vector<1x1x512xf32>
    %63 = vector.shape_cast %62 : vector<1x1x512xf32> to vector<1x512xf32>
    %c0_15 = arith.constant 0 : index
    %c3 = arith.constant 3 : index
    %c0_16 = arith.constant 0 : index
    %64 = vector.load %arg1[%c0_15, %c3, %c0_16] : memref<1x6x512xf32, #tpu.memory_space<vmem>>, vector<1x1x512xf32>
    %65 = vector.shape_cast %64 : vector<1x1x512xf32> to vector<1x512xf32>
    %66 = vector.broadcast %65 : vector<1x512xf32> to vector<16x512xf32>
    %67 = arith.subf %1, %66 : vector<16x512xf32>
    %68 = math.absf %67 : vector<16x512xf32>
    %cst_17 = arith.constant 1.000000e+00 : f32
    %69 = vector.broadcast %cst_17 : f32 to vector<16x512xf32>
    %70 = arith.subf %69, %68 : vector<16x512xf32>
    %cst_18 = arith.constant 0.000000e+00 : f32
    %71 = vector.broadcast %cst_18 : f32 to vector<16x512xf32>
    %72 = arith.maximumf %70, %71 : vector<16x512xf32>
    %73 = vector.broadcast %63 : vector<1x512xf32> to vector<128x512xf32>
    %74 = arith.subf %6, %73 : vector<128x512xf32>
    %75 = math.absf %74 : vector<128x512xf32>
    %cst_19 = arith.constant 1.000000e+00 : f32
    %76 = vector.broadcast %cst_19 : f32 to vector<128x512xf32>
    %77 = arith.subf %76, %75 : vector<128x512xf32>
    %cst_20 = arith.constant 0.000000e+00 : f32
    %78 = vector.broadcast %cst_20 : f32 to vector<128x512xf32>
    %79 = arith.maximumf %77, %78 : vector<128x512xf32>
    %c1_21 = arith.constant 1 : index
    %c0_22 = arith.constant 0 : index
    %c0_23 = arith.constant 0 : index
    %80 = vector.load %arg2[%c1_21, %c0_22, %c0_23] : memref<3x128x16xf32, #tpu.memory_space<vmem>>, vector<1x128x16xf32>
    %81 = vector.shape_cast %80 : vector<1x128x16xf32> to vector<128x16xf32>
    %cst_24 = arith.constant dense<0.000000e+00> : vector<128x512xf32>
    %82 = tpu.matmul %81, %72, %cst_24 {dimension_numbers = #tpu.dot_dimension_numbers<[1], [0], [0], [1], [0, 0, 1, 1], [], []>} : vector<128x16xf32>, vector<16x512xf32>, vector<128x512xf32> -> vector<128x512xf32>
    %83 = arith.mulf %82, %79 : vector<128x512xf32>
    %84 = vector.extract_strided_slice %83 {offsets = [0, 0], sizes = [8, 512], strides = [1, 1]} : vector<128x512xf32> to vector<8x512xf32>
    %85 = arith.addf %61, %84 : vector<8x512xf32>
    %86 = vector.extract_strided_slice %83 {offsets = [8, 0], sizes = [8, 512], strides = [1, 1]} : vector<128x512xf32> to vector<8x512xf32>
    %87 = arith.addf %85, %86 : vector<8x512xf32>
    %88 = vector.extract_strided_slice %83 {offsets = [16, 0], sizes = [8, 512], strides = [1, 1]} : vector<128x512xf32> to vector<8x512xf32>
    %89 = arith.addf %87, %88 : vector<8x512xf32>
    %90 = vector.extract_strided_slice %83 {offsets = [24, 0], sizes = [8, 512], strides = [1, 1]} : vector<128x512xf32> to vector<8x512xf32>
    %91 = arith.addf %89, %90 : vector<8x512xf32>
    %92 = vector.extract_strided_slice %83 {offsets = [32, 0], sizes = [8, 512], strides = [1, 1]} : vector<128x512xf32> to vector<8x512xf32>
    %93 = arith.addf %91, %92 : vector<8x512xf32>
    %94 = vector.extract_strided_slice %83 {offsets = [40, 0], sizes = [8, 512], strides = [1, 1]} : vector<128x512xf32> to vector<8x512xf32>
    %95 = arith.addf %93, %94 : vector<8x512xf32>
    %96 = vector.extract_strided_slice %83 {offsets = [48, 0], sizes = [8, 512], strides = [1, 1]} : vector<128x512xf32> to vector<8x512xf32>
    %97 = arith.addf %95, %96 : vector<8x512xf32>
    %98 = vector.extract_strided_slice %83 {offsets = [56, 0], sizes = [8, 512], strides = [1, 1]} : vector<128x512xf32> to vector<8x512xf32>
    %99 = arith.addf %97, %98 : vector<8x512xf32>
    %100 = vector.extract_strided_slice %83 {offsets = [64, 0], sizes = [8, 512], strides = [1, 1]} : vector<128x512xf32> to vector<8x512xf32>
    %101 = arith.addf %99, %100 : vector<8x512xf32>
    %102 = vector.extract_strided_slice %83 {offsets = [72, 0], sizes = [8, 512], strides = [1, 1]} : vector<128x512xf32> to vector<8x512xf32>
    %103 = arith.addf %101, %102 : vector<8x512xf32>
    %104 = vector.extract_strided_slice %83 {offsets = [80, 0], sizes = [8, 512], strides = [1, 1]} : vector<128x512xf32> to vector<8x512xf32>
    %105 = arith.addf %103, %104 : vector<8x512xf32>
    %106 = vector.extract_strided_slice %83 {offsets = [88, 0], sizes = [8, 512], strides = [1, 1]} : vector<128x512xf32> to vector<8x512xf32>
    %107 = arith.addf %105, %106 : vector<8x512xf32>
    %108 = vector.extract_strided_slice %83 {offsets = [96, 0], sizes = [8, 512], strides = [1, 1]} : vector<128x512xf32> to vector<8x512xf32>
    %109 = arith.addf %107, %108 : vector<8x512xf32>
    %110 = vector.extract_strided_slice %83 {offsets = [104, 0], sizes = [8, 512], strides = [1, 1]} : vector<128x512xf32> to vector<8x512xf32>
    %111 = arith.addf %109, %110 : vector<8x512xf32>
    %112 = vector.extract_strided_slice %83 {offsets = [112, 0], sizes = [8, 512], strides = [1, 1]} : vector<128x512xf32> to vector<8x512xf32>
    %113 = arith.addf %111, %112 : vector<8x512xf32>
    %114 = vector.extract_strided_slice %83 {offsets = [120, 0], sizes = [8, 512], strides = [1, 1]} : vector<128x512xf32> to vector<8x512xf32>
    %115 = arith.addf %113, %114 : vector<8x512xf32>
    %c0_25 = arith.constant 0 : index
    %c4 = arith.constant 4 : index
    %c0_26 = arith.constant 0 : index
    %116 = vector.load %arg1[%c0_25, %c4, %c0_26] : memref<1x6x512xf32, #tpu.memory_space<vmem>>, vector<1x1x512xf32>
    %117 = vector.shape_cast %116 : vector<1x1x512xf32> to vector<1x512xf32>
    %c0_27 = arith.constant 0 : index
    %c5 = arith.constant 5 : index
    %c0_28 = arith.constant 0 : index
    %118 = vector.load %arg1[%c0_27, %c5, %c0_28] : memref<1x6x512xf32, #tpu.memory_space<vmem>>, vector<1x1x512xf32>
    %119 = vector.shape_cast %118 : vector<1x1x512xf32> to vector<1x512xf32>
    %120 = vector.broadcast %119 : vector<1x512xf32> to vector<16x512xf32>
    %121 = arith.subf %1, %120 : vector<16x512xf32>
    %122 = math.absf %121 : vector<16x512xf32>
    %cst_29 = arith.constant 1.000000e+00 : f32
    %123 = vector.broadcast %cst_29 : f32 to vector<16x512xf32>
    %124 = arith.subf %123, %122 : vector<16x512xf32>
    %cst_30 = arith.constant 0.000000e+00 : f32
    %125 = vector.broadcast %cst_30 : f32 to vector<16x512xf32>
    %126 = arith.maximumf %124, %125 : vector<16x512xf32>
    %127 = vector.broadcast %117 : vector<1x512xf32> to vector<128x512xf32>
    %128 = arith.subf %6, %127 : vector<128x512xf32>
    %129 = math.absf %128 : vector<128x512xf32>
    %cst_31 = arith.constant 1.000000e+00 : f32
    %130 = vector.broadcast %cst_31 : f32 to vector<128x512xf32>
    %131 = arith.subf %130, %129 : vector<128x512xf32>
    %cst_32 = arith.constant 0.000000e+00 : f32
    %132 = vector.broadcast %cst_32 : f32 to vector<128x512xf32>
    %133 = arith.maximumf %131, %132 : vector<128x512xf32>
    %c2_33 = arith.constant 2 : index
    %c0_34 = arith.constant 0 : index
    %c0_35 = arith.constant 0 : index
    %134 = vector.load %arg2[%c2_33, %c0_34, %c0_35] : memref<3x128x16xf32, #tpu.memory_space<vmem>>, vector<1x128x16xf32>
    %135 = vector.shape_cast %134 : vector<1x128x16xf32> to vector<128x16xf32>
    %cst_36 = arith.constant dense<0.000000e+00> : vector<128x512xf32>
    %136 = tpu.matmul %135, %126, %cst_36 {dimension_numbers = #tpu.dot_dimension_numbers<[1], [0], [0], [1], [0, 0, 1, 1], [], []>} : vector<128x16xf32>, vector<16x512xf32>, vector<128x512xf32> -> vector<128x512xf32>
    %137 = arith.mulf %136, %133 : vector<128x512xf32>
    %138 = vector.extract_strided_slice %137 {offsets = [0, 0], sizes = [8, 512], strides = [1, 1]} : vector<128x512xf32> to vector<8x512xf32>
    %139 = arith.addf %115, %138 : vector<8x512xf32>
    %140 = vector.extract_strided_slice %137 {offsets = [8, 0], sizes = [8, 512], strides = [1, 1]} : vector<128x512xf32> to vector<8x512xf32>
    %141 = arith.addf %139, %140 : vector<8x512xf32>
    %142 = vector.extract_strided_slice %137 {offsets = [16, 0], sizes = [8, 512], strides = [1, 1]} : vector<128x512xf32> to vector<8x512xf32>
    %143 = arith.addf %141, %142 : vector<8x512xf32>
    %144 = vector.extract_strided_slice %137 {offsets = [24, 0], sizes = [8, 512], strides = [1, 1]} : vector<128x512xf32> to vector<8x512xf32>
    %145 = arith.addf %143, %144 : vector<8x512xf32>
    %146 = vector.extract_strided_slice %137 {offsets = [32, 0], sizes = [8, 512], strides = [1, 1]} : vector<128x512xf32> to vector<8x512xf32>
    %147 = arith.addf %145, %146 : vector<8x512xf32>
    %148 = vector.extract_strided_slice %137 {offsets = [40, 0], sizes = [8, 512], strides = [1, 1]} : vector<128x512xf32> to vector<8x512xf32>
    %149 = arith.addf %147, %148 : vector<8x512xf32>
    %150 = vector.extract_strided_slice %137 {offsets = [48, 0], sizes = [8, 512], strides = [1, 1]} : vector<128x512xf32> to vector<8x512xf32>
    %151 = arith.addf %149, %150 : vector<8x512xf32>
    %152 = vector.extract_strided_slice %137 {offsets = [56, 0], sizes = [8, 512], strides = [1, 1]} : vector<128x512xf32> to vector<8x512xf32>
    %153 = arith.addf %151, %152 : vector<8x512xf32>
    %154 = vector.extract_strided_slice %137 {offsets = [64, 0], sizes = [8, 512], strides = [1, 1]} : vector<128x512xf32> to vector<8x512xf32>
    %155 = arith.addf %153, %154 : vector<8x512xf32>
    %156 = vector.extract_strided_slice %137 {offsets = [72, 0], sizes = [8, 512], strides = [1, 1]} : vector<128x512xf32> to vector<8x512xf32>
    %157 = arith.addf %155, %156 : vector<8x512xf32>
    %158 = vector.extract_strided_slice %137 {offsets = [80, 0], sizes = [8, 512], strides = [1, 1]} : vector<128x512xf32> to vector<8x512xf32>
    %159 = arith.addf %157, %158 : vector<8x512xf32>
    %160 = vector.extract_strided_slice %137 {offsets = [88, 0], sizes = [8, 512], strides = [1, 1]} : vector<128x512xf32> to vector<8x512xf32>
    %161 = arith.addf %159, %160 : vector<8x512xf32>
    %162 = vector.extract_strided_slice %137 {offsets = [96, 0], sizes = [8, 512], strides = [1, 1]} : vector<128x512xf32> to vector<8x512xf32>
    %163 = arith.addf %161, %162 : vector<8x512xf32>
    %164 = vector.extract_strided_slice %137 {offsets = [104, 0], sizes = [8, 512], strides = [1, 1]} : vector<128x512xf32> to vector<8x512xf32>
    %165 = arith.addf %163, %164 : vector<8x512xf32>
    %166 = vector.extract_strided_slice %137 {offsets = [112, 0], sizes = [8, 512], strides = [1, 1]} : vector<128x512xf32> to vector<8x512xf32>
    %167 = arith.addf %165, %166 : vector<8x512xf32>
    %168 = vector.extract_strided_slice %137 {offsets = [120, 0], sizes = [8, 512], strides = [1, 1]} : vector<128x512xf32> to vector<8x512xf32>
    %169 = arith.addf %167, %168 : vector<8x512xf32>
    %cst_37 = arith.constant 0.333333343 : f32
    %170 = vector.broadcast %cst_37 : f32 to vector<8x512xf32>
    %171 = arith.mulf %169, %170 : vector<8x512xf32>
    %c0_38 = arith.constant 0 : index
    %c0_39 = arith.constant 0 : index
    %172 = vector.load %arg3[%c0_38, %c0_39] : memref<32x8xf32, #tpu.memory_space<vmem>>, vector<32x8xf32>
    %cst_40 = arith.constant dense<0.000000e+00> : vector<32x512xf32>
    %173 = tpu.matmul %172, %171, %cst_40 {dimension_numbers = #tpu.dot_dimension_numbers<[1], [0], [0], [1], [0, 0, 1, 1], [], []>} : vector<32x8xf32>, vector<8x512xf32>, vector<32x512xf32> -> vector<32x512xf32>
    %c0_41 = arith.constant 0 : index
    %c0_42 = arith.constant 0 : index
    %174 = vector.load %arg4[%c0_41, %c0_42] : memref<32x1xf32, #tpu.memory_space<vmem>>, vector<32x1xf32>
    %175 = vector.broadcast %174 : vector<32x1xf32> to vector<32x512xf32>
    %176 = arith.addf %173, %175 : vector<32x512xf32>
    %cst_43 = arith.constant 0.000000e+00 : f32
    %177 = vector.broadcast %cst_43 : f32 to vector<32x512xf32>
    %178 = arith.maximumf %176, %177 : vector<32x512xf32>
    %c0_44 = arith.constant 0 : index
    %c0_45 = arith.constant 0 : index
    %179 = vector.load %arg5[%c0_44, %c0_45] : memref<4x32xf32, #tpu.memory_space<vmem>>, vector<4x32xf32>
    %cst_46 = arith.constant dense<0.000000e+00> : vector<4x512xf32>
    %180 = tpu.matmul %179, %178, %cst_46 {dimension_numbers = #tpu.dot_dimension_numbers<[1], [0], [0], [1], [0, 0, 1, 1], [], []>} : vector<4x32xf32>, vector<32x512xf32>, vector<4x512xf32> -> vector<4x512xf32>
    %c0_47 = arith.constant 0 : index
    %c0_48 = arith.constant 0 : index
    %181 = vector.load %arg6[%c0_47, %c0_48] : memref<4x1xf32, #tpu.memory_space<vmem>>, vector<4x1xf32>
    %182 = vector.broadcast %181 : vector<4x1xf32> to vector<4x512xf32>
    %183 = arith.addf %180, %182 : vector<4x512xf32>
    %cst_49 = arith.constant 0.000000e+00 : f32
    %184 = vector.broadcast %cst_49 : f32 to vector<4x512xf32>
    %185 = arith.subf %184, %183 : vector<4x512xf32>
    %186 = math.exp %185 : vector<4x512xf32>
    %cst_50 = arith.constant 1.000000e+00 : f32
    %187 = vector.broadcast %cst_50 : f32 to vector<4x512xf32>
    %188 = arith.addf %187, %186 : vector<4x512xf32>
    %189 = tpu.reciprocal %188 {approx = true} : vector<4x512xf32> -> vector<4x512xf32>
    %cst_51 = arith.constant 1.002000e+00 : f32
    %190 = vector.broadcast %cst_51 : f32 to vector<4x512xf32>
    %191 = arith.mulf %189, %190 : vector<4x512xf32>
    %cst_52 = arith.constant 1.000000e-03 : f32
    %192 = vector.broadcast %cst_52 : f32 to vector<4x512xf32>
    %193 = arith.subf %191, %192 : vector<4x512xf32>
    %194 = tpu.iota {dimensions = array<i32: 0>} : vector<4x512xi32>
    %c0_i32 = arith.constant 0 : i32
    %195 = vector.broadcast %c0_i32 : i32 to vector<4x512xi32>
    %196 = arith.cmpi eq, %194, %195 : vector<4x512xi32>
    %197 = arith.select %196, %183, %193 : vector<4x512xi1>, vector<4x512xf32>
    %c0_53 = arith.constant 0 : index
    %c0_54 = arith.constant 0 : index
    %198 = vector.load %arg9[%c0_53, %c0_54] : memref<4x512xf32, #tpu.memory_space<vmem>>, vector<4x512xf32>
    tpu.vector_store %arg9[%c0_53, %c0_54], %197 {strides = array<i32>} : memref<4x512xf32, #tpu.memory_space<vmem>>, vector<4x512xf32>,
    %cst_55 = arith.constant 1.000000e+00 : f32
    %199 = vector.broadcast %cst_55 : f32 to vector<1x64xf32>
    %cst_56 = arith.constant 0.000000e+00 : f32
    %200 = vector.broadcast %cst_56 : f32 to vector<3x64xf32>
    %cst_57 = arith.constant 0.000000e+00 : f32
    %201 = vector.broadcast %cst_57 : f32 to vector<1x64xf32>
    %cst_58 = arith.constant 0.000000e+00 : f32
    %202 = vector.broadcast %cst_58 : f32 to vector<1x64xf32>
    %c0_59 = arith.constant 0 : index
    %c0_60 = arith.constant 0 : index
    %203 = vector.load %arg9[%c0_59, %c0_60] : memref<4x512xf32, #tpu.memory_space<vmem>>, vector<1x64xf32>
    %c1_61 = arith.constant 1 : index
    %c0_62 = arith.constant 0 : index
    %204 = vector.load %arg9[%c1_61, %c0_62] : memref<4x512xf32, #tpu.memory_space<vmem>>, vector<3x64xf32>
    %cst_63 = arith.constant 1.000000e+00 : f32
    %205 = vector.broadcast %cst_63 : f32 to vector<1x64xf32>
    %206 = arith.subf %203, %205 : vector<1x64xf32>
    %cst_64 = arith.constant 0.000000e+00 : f32
    %207 = vector.broadcast %cst_64 : f32 to vector<1x64xf32>
    %208 = arith.maximumf %206, %207 : vector<1x64xf32>
    %209 = math.absf %206 : vector<1x64xf32>
    %cst_65 = arith.constant 0.000000e+00 : f32
    %210 = vector.broadcast %cst_65 : f32 to vector<1x64xf32>
    %211 = arith.subf %210, %209 : vector<1x64xf32>
    %212 = math.exp %211 : vector<1x64xf32>
    %cst_66 = arith.constant 1.000000e+00 : f32
    %213 = vector.broadcast %cst_66 : f32 to vector<1x64xf32>
    %214 = arith.addf %213, %212 : vector<1x64xf32>
    %215 = math.log %214 : vector<1x64xf32>
    %216 = arith.addf %208, %215 : vector<1x64xf32>
    %cst_67 = arith.constant 0.000000e+00 : f32
    %217 = vector.broadcast %cst_67 : f32 to vector<1x64xf32>
    %218 = arith.subf %217, %216 : vector<1x64xf32>
    %cst_68 = arith.constant 0.285714269 : f32
    %219 = vector.broadcast %cst_68 : f32 to vector<1x64xf32>
    %220 = arith.mulf %218, %219 : vector<1x64xf32>
    %221 = math.exp %220 : vector<1x64xf32>
    %cst_69 = arith.constant 1.000000e+00 : f32
    %222 = vector.broadcast %cst_69 : f32 to vector<1x64xf32>
    %223 = arith.subf %222, %221 : vector<1x64xf32>
    %224 = arith.mulf %223, %199 : vector<1x64xf32>
    %225 = vector.broadcast %224 : vector<1x64xf32> to vector<3x64xf32>
    %226 = arith.mulf %225, %204 : vector<3x64xf32>
    %227 = arith.addf %200, %226 : vector<3x64xf32>
    %cst_70 = arith.constant 1.000000e+00 : f32
    %228 = vector.broadcast %cst_70 : f32 to vector<1x64xf32>
    %229 = arith.mulf %224, %228 : vector<1x64xf32>
    %230 = arith.addf %201, %229 : vector<1x64xf32>
    %231 = arith.addf %202, %224 : vector<1x64xf32>
    %cst_71 = arith.constant 1.000000e+00 : f32
    %232 = vector.broadcast %cst_71 : f32 to vector<1x64xf32>
    %233 = arith.subf %232, %223 : vector<1x64xf32>
    %cst_72 = arith.constant 1.000000e-10 : f32
    %234 = vector.broadcast %cst_72 : f32 to vector<1x64xf32>
    %235 = arith.addf %233, %234 : vector<1x64xf32>
    %236 = arith.mulf %199, %235 : vector<1x64xf32>
    %c0_73 = arith.constant 0 : index
    %c64 = arith.constant 64 : index
    %237 = vector.load %arg9[%c0_73, %c64] : memref<4x512xf32, #tpu.memory_space<vmem>>, vector<1x64xf32>
    %c1_74 = arith.constant 1 : index
    %c64_75 = arith.constant 64 : index
    %238 = vector.load %arg9[%c1_74, %c64_75] : memref<4x512xf32, #tpu.memory_space<vmem>>, vector<3x64xf32>
    %cst_76 = arith.constant 1.000000e+00 : f32
    %239 = vector.broadcast %cst_76 : f32 to vector<1x64xf32>
    %240 = arith.subf %237, %239 : vector<1x64xf32>
    %cst_77 = arith.constant 0.000000e+00 : f32
    %241 = vector.broadcast %cst_77 : f32 to vector<1x64xf32>
    %242 = arith.maximumf %240, %241 : vector<1x64xf32>
    %243 = math.absf %240 : vector<1x64xf32>
    %cst_78 = arith.constant 0.000000e+00 : f32
    %244 = vector.broadcast %cst_78 : f32 to vector<1x64xf32>
    %245 = arith.subf %244, %243 : vector<1x64xf32>
    %246 = math.exp %245 : vector<1x64xf32>
    %cst_79 = arith.constant 1.000000e+00 : f32
    %247 = vector.broadcast %cst_79 : f32 to vector<1x64xf32>
    %248 = arith.addf %247, %246 : vector<1x64xf32>
    %249 = math.log %248 : vector<1x64xf32>
    %250 = arith.addf %242, %249 : vector<1x64xf32>
    %cst_80 = arith.constant 0.000000e+00 : f32
    %251 = vector.broadcast %cst_80 : f32 to vector<1x64xf32>
    %252 = arith.subf %251, %250 : vector<1x64xf32>
    %cst_81 = arith.constant 0.285714269 : f32
    %253 = vector.broadcast %cst_81 : f32 to vector<1x64xf32>
    %254 = arith.mulf %252, %253 : vector<1x64xf32>
    %255 = math.exp %254 : vector<1x64xf32>
    %cst_82 = arith.constant 1.000000e+00 : f32
    %256 = vector.broadcast %cst_82 : f32 to vector<1x64xf32>
    %257 = arith.subf %256, %255 : vector<1x64xf32>
    %258 = arith.mulf %257, %236 : vector<1x64xf32>
    %259 = vector.broadcast %258 : vector<1x64xf32> to vector<3x64xf32>
    %260 = arith.mulf %259, %238 : vector<3x64xf32>
    %261 = arith.addf %227, %260 : vector<3x64xf32>
    %cst_83 = arith.constant 1.28571427 : f32
    %262 = vector.broadcast %cst_83 : f32 to vector<1x64xf32>
    %263 = arith.mulf %258, %262 : vector<1x64xf32>
    %264 = arith.addf %230, %263 : vector<1x64xf32>
    %265 = arith.addf %231, %258 : vector<1x64xf32>
    %cst_84 = arith.constant 1.000000e+00 : f32
    %266 = vector.broadcast %cst_84 : f32 to vector<1x64xf32>
    %267 = arith.subf %266, %257 : vector<1x64xf32>
    %cst_85 = arith.constant 1.000000e-10 : f32
    %268 = vector.broadcast %cst_85 : f32 to vector<1x64xf32>
    %269 = arith.addf %267, %268 : vector<1x64xf32>
    %270 = arith.mulf %236, %269 : vector<1x64xf32>
    %c0_86 = arith.constant 0 : index
    %c128 = arith.constant 128 : index
    %271 = vector.load %arg9[%c0_86, %c128] : memref<4x512xf32, #tpu.memory_space<vmem>>, vector<1x64xf32>
    %c1_87 = arith.constant 1 : index
    %c128_88 = arith.constant 128 : index
    %272 = vector.load %arg9[%c1_87, %c128_88] : memref<4x512xf32, #tpu.memory_space<vmem>>, vector<3x64xf32>
    %cst_89 = arith.constant 1.000000e+00 : f32
    %273 = vector.broadcast %cst_89 : f32 to vector<1x64xf32>
    %274 = arith.subf %271, %273 : vector<1x64xf32>
    %cst_90 = arith.constant 0.000000e+00 : f32
    %275 = vector.broadcast %cst_90 : f32 to vector<1x64xf32>
    %276 = arith.maximumf %274, %275 : vector<1x64xf32>
    %277 = math.absf %274 : vector<1x64xf32>
    %cst_91 = arith.constant 0.000000e+00 : f32
    %278 = vector.broadcast %cst_91 : f32 to vector<1x64xf32>
    %279 = arith.subf %278, %277 : vector<1x64xf32>
    %280 = math.exp %279 : vector<1x64xf32>
    %cst_92 = arith.constant 1.000000e+00 : f32
    %281 = vector.broadcast %cst_92 : f32 to vector<1x64xf32>
    %282 = arith.addf %281, %280 : vector<1x64xf32>
    %283 = math.log %282 : vector<1x64xf32>
    %284 = arith.addf %276, %283 : vector<1x64xf32>
    %cst_93 = arith.constant 0.000000e+00 : f32
    %285 = vector.broadcast %cst_93 : f32 to vector<1x64xf32>
    %286 = arith.subf %285, %284 : vector<1x64xf32>
    %cst_94 = arith.constant 0.285714269 : f32
    %287 = vector.broadcast %cst_94 : f32 to vector<1x64xf32>
    %288 = arith.mulf %286, %287 : vector<1x64xf32>
    %289 = math.exp %288 : vector<1x64xf32>
    %cst_95 = arith.constant 1.000000e+00 : f32
    %290 = vector.broadcast %cst_95 : f32 to vector<1x64xf32>
    %291 = arith.subf %290, %289 : vector<1x64xf32>
    %292 = arith.mulf %291, %270 : vector<1x64xf32>
    %293 = vector.broadcast %292 : vector<1x64xf32> to vector<3x64xf32>
    %294 = arith.mulf %293, %272 : vector<3x64xf32>
    %295 = arith.addf %261, %294 : vector<3x64xf32>
    %cst_96 = arith.constant 1.57142854 : f32
    %296 = vector.broadcast %cst_96 : f32 to vector<1x64xf32>
    %297 = arith.mulf %292, %296 : vector<1x64xf32>
    %298 = arith.addf %264, %297 : vector<1x64xf32>
    %299 = arith.addf %265, %292 : vector<1x64xf32>
    %cst_97 = arith.constant 1.000000e+00 : f32
    %300 = vector.broadcast %cst_97 : f32 to vector<1x64xf32>
    %301 = arith.subf %300, %291 : vector<1x64xf32>
    %cst_98 = arith.constant 1.000000e-10 : f32
    %302 = vector.broadcast %cst_98 : f32 to vector<1x64xf32>
    %303 = arith.addf %301, %302 : vector<1x64xf32>
    %304 = arith.mulf %270, %303 : vector<1x64xf32>
    %c0_99 = arith.constant 0 : index
    %c192 = arith.constant 192 : index
    %305 = vector.load %arg9[%c0_99, %c192] : memref<4x512xf32, #tpu.memory_space<vmem>>, vector<1x64xf32>
    %c1_100 = arith.constant 1 : index
    %c192_101 = arith.constant 192 : index
    %306 = vector.load %arg9[%c1_100, %c192_101] : memref<4x512xf32, #tpu.memory_space<vmem>>, vector<3x64xf32>
    %cst_102 = arith.constant 1.000000e+00 : f32
    %307 = vector.broadcast %cst_102 : f32 to vector<1x64xf32>
    %308 = arith.subf %305, %307 : vector<1x64xf32>
    %cst_103 = arith.constant 0.000000e+00 : f32
    %309 = vector.broadcast %cst_103 : f32 to vector<1x64xf32>
    %310 = arith.maximumf %308, %309 : vector<1x64xf32>
    %311 = math.absf %308 : vector<1x64xf32>
    %cst_104 = arith.constant 0.000000e+00 : f32
    %312 = vector.broadcast %cst_104 : f32 to vector<1x64xf32>
    %313 = arith.subf %312, %311 : vector<1x64xf32>
    %314 = math.exp %313 : vector<1x64xf32>
    %cst_105 = arith.constant 1.000000e+00 : f32
    %315 = vector.broadcast %cst_105 : f32 to vector<1x64xf32>
    %316 = arith.addf %315, %314 : vector<1x64xf32>
    %317 = math.log %316 : vector<1x64xf32>
    %318 = arith.addf %310, %317 : vector<1x64xf32>
    %cst_106 = arith.constant 0.000000e+00 : f32
    %319 = vector.broadcast %cst_106 : f32 to vector<1x64xf32>
    %320 = arith.subf %319, %318 : vector<1x64xf32>
    %cst_107 = arith.constant 0.285714269 : f32
    %321 = vector.broadcast %cst_107 : f32 to vector<1x64xf32>
    %322 = arith.mulf %320, %321 : vector<1x64xf32>
    %323 = math.exp %322 : vector<1x64xf32>
    %cst_108 = arith.constant 1.000000e+00 : f32
    %324 = vector.broadcast %cst_108 : f32 to vector<1x64xf32>
    %325 = arith.subf %324, %323 : vector<1x64xf32>
    %326 = arith.mulf %325, %304 : vector<1x64xf32>
    %327 = vector.broadcast %326 : vector<1x64xf32> to vector<3x64xf32>
    %328 = arith.mulf %327, %306 : vector<3x64xf32>
    %329 = arith.addf %295, %328 : vector<3x64xf32>
    %cst_109 = arith.constant 1.85714281 : f32
    %330 = vector.broadcast %cst_109 : f32 to vector<1x64xf32>
    %331 = arith.mulf %326, %330 : vector<1x64xf32>
    %332 = arith.addf %298, %331 : vector<1x64xf32>
    %333 = arith.addf %299, %326 : vector<1x64xf32>
    %cst_110 = arith.constant 1.000000e+00 : f32
    %334 = vector.broadcast %cst_110 : f32 to vector<1x64xf32>
    %335 = arith.subf %334, %325 : vector<1x64xf32>
    %cst_111 = arith.constant 1.000000e-10 : f32
    %336 = vector.broadcast %cst_111 : f32 to vector<1x64xf32>
    %337 = arith.addf %335, %336 : vector<1x64xf32>
    %338 = arith.mulf %304, %337 : vector<1x64xf32>
    %c0_112 = arith.constant 0 : index
    %c256 = arith.constant 256 : index
    %339 = vector.load %arg9[%c0_112, %c256] : memref<4x512xf32, #tpu.memory_space<vmem>>, vector<1x64xf32>
    %c1_113 = arith.constant 1 : index
    %c256_114 = arith.constant 256 : index
    %340 = vector.load %arg9[%c1_113, %c256_114] : memref<4x512xf32, #tpu.memory_space<vmem>>, vector<3x64xf32>
    %cst_115 = arith.constant 1.000000e+00 : f32
    %341 = vector.broadcast %cst_115 : f32 to vector<1x64xf32>
    %342 = arith.subf %339, %341 : vector<1x64xf32>
    %cst_116 = arith.constant 0.000000e+00 : f32
    %343 = vector.broadcast %cst_116 : f32 to vector<1x64xf32>
    %344 = arith.maximumf %342, %343 : vector<1x64xf32>
    %345 = math.absf %342 : vector<1x64xf32>
    %cst_117 = arith.constant 0.000000e+00 : f32
    %346 = vector.broadcast %cst_117 : f32 to vector<1x64xf32>
    %347 = arith.subf %346, %345 : vector<1x64xf32>
    %348 = math.exp %347 : vector<1x64xf32>
    %cst_118 = arith.constant 1.000000e+00 : f32
    %349 = vector.broadcast %cst_118 : f32 to vector<1x64xf32>
    %350 = arith.addf %349, %348 : vector<1x64xf32>
    %351 = math.log %350 : vector<1x64xf32>
    %352 = arith.addf %344, %351 : vector<1x64xf32>
    %cst_119 = arith.constant 0.000000e+00 : f32
    %353 = vector.broadcast %cst_119 : f32 to vector<1x64xf32>
    %354 = arith.subf %353, %352 : vector<1x64xf32>
    %cst_120 = arith.constant 0.285714388 : f32
    %355 = vector.broadcast %cst_120 : f32 to vector<1x64xf32>
    %356 = arith.mulf %354, %355 : vector<1x64xf32>
    %357 = math.exp %356 : vector<1x64xf32>
    %cst_121 = arith.constant 1.000000e+00 : f32
    %358 = vector.broadcast %cst_121 : f32 to vector<1x64xf32>
    %359 = arith.subf %358, %357 : vector<1x64xf32>
    %360 = arith.mulf %359, %338 : vector<1x64xf32>
    %361 = vector.broadcast %360 : vector<1x64xf32> to vector<3x64xf32>
    %362 = arith.mulf %361, %340 : vector<3x64xf32>
    %363 = arith.addf %329, %362 : vector<3x64xf32>
    %cst_122 = arith.constant 2.14285707 : f32
    %364 = vector.broadcast %cst_122 : f32 to vector<1x64xf32>
    %365 = arith.mulf %360, %364 : vector<1x64xf32>
    %366 = arith.addf %332, %365 : vector<1x64xf32>
    %367 = arith.addf %333, %360 : vector<1x64xf32>
    %cst_123 = arith.constant 1.000000e+00 : f32
    %368 = vector.broadcast %cst_123 : f32 to vector<1x64xf32>
    %369 = arith.subf %368, %359 : vector<1x64xf32>
    %cst_124 = arith.constant 1.000000e-10 : f32
    %370 = vector.broadcast %cst_124 : f32 to vector<1x64xf32>
    %371 = arith.addf %369, %370 : vector<1x64xf32>
    %372 = arith.mulf %338, %371 : vector<1x64xf32>
    %c0_125 = arith.constant 0 : index
    %c320 = arith.constant 320 : index
    %373 = vector.load %arg9[%c0_125, %c320] : memref<4x512xf32, #tpu.memory_space<vmem>>, vector<1x64xf32>
    %c1_126 = arith.constant 1 : index
    %c320_127 = arith.constant 320 : index
    %374 = vector.load %arg9[%c1_126, %c320_127] : memref<4x512xf32, #tpu.memory_space<vmem>>, vector<3x64xf32>
    %cst_128 = arith.constant 1.000000e+00 : f32
    %375 = vector.broadcast %cst_128 : f32 to vector<1x64xf32>
    %376 = arith.subf %373, %375 : vector<1x64xf32>
    %cst_129 = arith.constant 0.000000e+00 : f32
    %377 = vector.broadcast %cst_129 : f32 to vector<1x64xf32>
    %378 = arith.maximumf %376, %377 : vector<1x64xf32>
    %379 = math.absf %376 : vector<1x64xf32>
    %cst_130 = arith.constant 0.000000e+00 : f32
    %380 = vector.broadcast %cst_130 : f32 to vector<1x64xf32>
    %381 = arith.subf %380, %379 : vector<1x64xf32>
    %382 = math.exp %381 : vector<1x64xf32>
    %cst_131 = arith.constant 1.000000e+00 : f32
    %383 = vector.broadcast %cst_131 : f32 to vector<1x64xf32>
    %384 = arith.addf %383, %382 : vector<1x64xf32>
    %385 = math.log %384 : vector<1x64xf32>
    %386 = arith.addf %378, %385 : vector<1x64xf32>
    %cst_132 = arith.constant 0.000000e+00 : f32
    %387 = vector.broadcast %cst_132 : f32 to vector<1x64xf32>
    %388 = arith.subf %387, %386 : vector<1x64xf32>
    %cst_133 = arith.constant 0.285714149 : f32
    %389 = vector.broadcast %cst_133 : f32 to vector<1x64xf32>
    %390 = arith.mulf %388, %389 : vector<1x64xf32>
    %391 = math.exp %390 : vector<1x64xf32>
    %cst_134 = arith.constant 1.000000e+00 : f32
    %392 = vector.broadcast %cst_134 : f32 to vector<1x64xf32>
    %393 = arith.subf %392, %391 : vector<1x64xf32>
    %394 = arith.mulf %393, %372 : vector<1x64xf32>
    %395 = vector.broadcast %394 : vector<1x64xf32> to vector<3x64xf32>
    %396 = arith.mulf %395, %374 : vector<3x64xf32>
    %397 = arith.addf %363, %396 : vector<3x64xf32>
    %cst_135 = arith.constant 2.42857146 : f32
    %398 = vector.broadcast %cst_135 : f32 to vector<1x64xf32>
    %399 = arith.mulf %394, %398 : vector<1x64xf32>
    %400 = arith.addf %366, %399 : vector<1x64xf32>
    %401 = arith.addf %367, %394 : vector<1x64xf32>
    %cst_136 = arith.constant 1.000000e+00 : f32
    %402 = vector.broadcast %cst_136 : f32 to vector<1x64xf32>
    %403 = arith.subf %402, %393 : vector<1x64xf32>
    %cst_137 = arith.constant 1.000000e-10 : f32
    %404 = vector.broadcast %cst_137 : f32 to vector<1x64xf32>
    %405 = arith.addf %403, %404 : vector<1x64xf32>
    %406 = arith.mulf %372, %405 : vector<1x64xf32>
    %c0_138 = arith.constant 0 : index
    %c384 = arith.constant 384 : index
    %407 = vector.load %arg9[%c0_138, %c384] : memref<4x512xf32, #tpu.memory_space<vmem>>, vector<1x64xf32>
    %c1_139 = arith.constant 1 : index
    %c384_140 = arith.constant 384 : index
    %408 = vector.load %arg9[%c1_139, %c384_140] : memref<4x512xf32, #tpu.memory_space<vmem>>, vector<3x64xf32>
    %cst_141 = arith.constant 1.000000e+00 : f32
    %409 = vector.broadcast %cst_141 : f32 to vector<1x64xf32>
    %410 = arith.subf %407, %409 : vector<1x64xf32>
    %cst_142 = arith.constant 0.000000e+00 : f32
    %411 = vector.broadcast %cst_142 : f32 to vector<1x64xf32>
    %412 = arith.maximumf %410, %411 : vector<1x64xf32>
    %413 = math.absf %410 : vector<1x64xf32>
    %cst_143 = arith.constant 0.000000e+00 : f32
    %414 = vector.broadcast %cst_143 : f32 to vector<1x64xf32>
    %415 = arith.subf %414, %413 : vector<1x64xf32>
    %416 = math.exp %415 : vector<1x64xf32>
    %cst_144 = arith.constant 1.000000e+00 : f32
    %417 = vector.broadcast %cst_144 : f32 to vector<1x64xf32>
    %418 = arith.addf %417, %416 : vector<1x64xf32>
    %419 = math.log %418 : vector<1x64xf32>
    %420 = arith.addf %412, %419 : vector<1x64xf32>
    %cst_145 = arith.constant 0.000000e+00 : f32
    %421 = vector.broadcast %cst_145 : f32 to vector<1x64xf32>
    %422 = arith.subf %421, %420 : vector<1x64xf32>
    %cst_146 = arith.constant 0.285714388 : f32
    %423 = vector.broadcast %cst_146 : f32 to vector<1x64xf32>
    %424 = arith.mulf %422, %423 : vector<1x64xf32>
    %425 = math.exp %424 : vector<1x64xf32>
    %cst_147 = arith.constant 1.000000e+00 : f32
    %426 = vector.broadcast %cst_147 : f32 to vector<1x64xf32>
    %427 = arith.subf %426, %425 : vector<1x64xf32>
    %428 = arith.mulf %427, %406 : vector<1x64xf32>
    %429 = vector.broadcast %428 : vector<1x64xf32> to vector<3x64xf32>
    %430 = arith.mulf %429, %408 : vector<3x64xf32>
    %431 = arith.addf %397, %430 : vector<3x64xf32>
    %cst_148 = arith.constant 2.71428561 : f32
    %432 = vector.broadcast %cst_148 : f32 to vector<1x64xf32>
    %433 = arith.mulf %428, %432 : vector<1x64xf32>
    %434 = arith.addf %400, %433 : vector<1x64xf32>
    %435 = arith.addf %401, %428 : vector<1x64xf32>
    %cst_149 = arith.constant 1.000000e+00 : f32
    %436 = vector.broadcast %cst_149 : f32 to vector<1x64xf32>
    %437 = arith.subf %436, %427 : vector<1x64xf32>
    %cst_150 = arith.constant 1.000000e-10 : f32
    %438 = vector.broadcast %cst_150 : f32 to vector<1x64xf32>
    %439 = arith.addf %437, %438 : vector<1x64xf32>
    %440 = arith.mulf %406, %439 : vector<1x64xf32>
    %c0_151 = arith.constant 0 : index
    %c448 = arith.constant 448 : index
    %441 = vector.load %arg9[%c0_151, %c448] : memref<4x512xf32, #tpu.memory_space<vmem>>, vector<1x64xf32>
    %c1_152 = arith.constant 1 : index
    %c448_153 = arith.constant 448 : index
    %442 = vector.load %arg9[%c1_152, %c448_153] : memref<4x512xf32, #tpu.memory_space<vmem>>, vector<3x64xf32>
    %cst_154 = arith.constant 1.000000e+00 : f32
    %443 = vector.broadcast %cst_154 : f32 to vector<1x64xf32>
    %444 = arith.subf %441, %443 : vector<1x64xf32>
    %cst_155 = arith.constant 0.000000e+00 : f32
    %445 = vector.broadcast %cst_155 : f32 to vector<1x64xf32>
    %446 = arith.maximumf %444, %445 : vector<1x64xf32>
    %447 = math.absf %444 : vector<1x64xf32>
    %cst_156 = arith.constant 0.000000e+00 : f32
    %448 = vector.broadcast %cst_156 : f32 to vector<1x64xf32>
    %449 = arith.subf %448, %447 : vector<1x64xf32>
    %450 = math.exp %449 : vector<1x64xf32>
    %cst_157 = arith.constant 1.000000e+00 : f32
    %451 = vector.broadcast %cst_157 : f32 to vector<1x64xf32>
    %452 = arith.addf %451, %450 : vector<1x64xf32>
    %453 = math.log %452 : vector<1x64xf32>
    %454 = arith.addf %446, %453 : vector<1x64xf32>
    %cst_158 = arith.constant 0.000000e+00 : f32
    %455 = vector.broadcast %cst_158 : f32 to vector<1x64xf32>
    %456 = arith.subf %455, %454 : vector<1x64xf32>
    %cst_159 = arith.constant 0.000000e+00 : f32
    %457 = vector.broadcast %cst_159 : f32 to vector<1x64xf32>
    %458 = arith.mulf %456, %457 : vector<1x64xf32>
    %459 = math.exp %458 : vector<1x64xf32>
    %cst_160 = arith.constant 1.000000e+00 : f32
    %460 = vector.broadcast %cst_160 : f32 to vector<1x64xf32>
    %461 = arith.subf %460, %459 : vector<1x64xf32>
    %462 = arith.mulf %461, %440 : vector<1x64xf32>
    %463 = vector.broadcast %462 : vector<1x64xf32> to vector<3x64xf32>
    %464 = arith.mulf %463, %442 : vector<3x64xf32>
    %465 = arith.addf %431, %464 : vector<3x64xf32>
    %cst_161 = arith.constant 3.000000e+00 : f32
    %466 = vector.broadcast %cst_161 : f32 to vector<1x64xf32>
    %467 = arith.mulf %462, %466 : vector<1x64xf32>
    %468 = arith.addf %434, %467 : vector<1x64xf32>
    %469 = arith.addf %435, %462 : vector<1x64xf32>
    %cst_162 = arith.constant 2.000000e+00 : f32
    %470 = vector.broadcast %cst_162 : f32 to vector<3x64xf32>
    %471 = arith.mulf %465, %470 : vector<3x64xf32>
    %cst_163 = arith.constant 1.000000e+00 : f32
    %472 = vector.broadcast %cst_163 : f32 to vector<3x64xf32>
    %473 = arith.subf %471, %472 : vector<3x64xf32>
    %c0_164 = arith.constant 0 : index
    %c0_165 = arith.constant 0 : index
    %c0_166 = arith.constant 0 : index
    %474 = vector.load %arg7[%c0_164, %c0_165, %c0_166] : memref<1x3x64xf32, #tpu.memory_space<vmem>>, vector<1x3x64xf32>
    %475 = vector.shape_cast %474 : vector<1x3x64xf32> to vector<3x64xf32>
    %476 = vector.shape_cast %473 : vector<3x64xf32> to vector<1x3x64xf32>
    tpu.vector_store %arg7[%c0_164, %c0_165, %c0_166], %476 {strides = array<i32>} : memref<1x3x64xf32, #tpu.memory_space<vmem>>, vector<1x3x64xf32>,
    %cst_167 = arith.constant 1.000000e+00 : f32
    %477 = vector.broadcast %cst_167 : f32 to vector<1x64xf32>
    %478 = arith.subf %477, %469 : vector<1x64xf32>
    %cst_168 = arith.constant 3.000000e+00 : f32
    %479 = vector.broadcast %cst_168 : f32 to vector<1x64xf32>
    %480 = arith.mulf %478, %479 : vector<1x64xf32>
    %481 = arith.addf %468, %480 : vector<1x64xf32>
    %c0_169 = arith.constant 0 : index
    %c0_170 = arith.constant 0 : index
    %c0_171 = arith.constant 0 : index
    %482 = vector.load %arg8[%c0_169, %c0_170, %c0_171] : memref<1x1x64xf32, #tpu.memory_space<vmem>>, vector<1x1x64xf32>
    %483 = vector.shape_cast %482 : vector<1x1x64xf32> to vector<1x64xf32>
    %484 = vector.shape_cast %481 : vector<1x64xf32> to vector<1x1x64xf32>
    tpu.vector_store %arg8[%c0_169, %c0_170, %c0_171], %484 {strides = array<i32>} : memref<1x1x64xf32, #tpu.memory_space<vmem>>, vector<1x1x64xf32>,
    return
  }
  func.func @transform_0(%arg0: i32) -> (i32, i32, i32) {
    %c0_i32 = arith.constant 0 : i32
    %c0_i32_0 = arith.constant 0 : i32
    %c0_i32_1 = arith.constant 0 : i32
    return %arg0, %c0_i32, %c0_i32_0 : i32, i32, i32
  }
  func.func @transform_1(%arg0: i32) -> (i32, i32, i32) {
    %c0_i32 = arith.constant 0 : i32
    %c0_i32_0 = arith.constant 0 : i32
    %c0_i32_1 = arith.constant 0 : i32
    %c0_i32_2 = arith.constant 0 : i32
    return %c0_i32, %c0_i32_0, %c0_i32_1 : i32, i32, i32
  }
  func.func @transform_2(%arg0: i32) -> (i32, i32) {
    %c0_i32 = arith.constant 0 : i32
    %c0_i32_0 = arith.constant 0 : i32
    %c0_i32_1 = arith.constant 0 : i32
    return %c0_i32, %c0_i32_0 : i32, i32
  }
  func.func @transform_3(%arg0: i32) -> (i32, i32) {
    %c0_i32 = arith.constant 0 : i32
    %c0_i32_0 = arith.constant 0 : i32
    %c0_i32_1 = arith.constant 0 : i32
    return %c0_i32, %c0_i32_0 : i32, i32
  }
  func.func @transform_4(%arg0: i32) -> (i32, i32) {
    %c0_i32 = arith.constant 0 : i32
    %c0_i32_0 = arith.constant 0 : i32
    %c0_i32_1 = arith.constant 0 : i32
    return %c0_i32, %c0_i32_0 : i32, i32
  }
  func.func @transform_5(%arg0: i32) -> (i32, i32) {
    %c0_i32 = arith.constant 0 : i32
    %c0_i32_0 = arith.constant 0 : i32
    %c0_i32_1 = arith.constant 0 : i32
    return %c0_i32, %c0_i32_0 : i32, i32
  }
  func.func @transform_6(%arg0: i32) -> (i32, i32, i32) {
    %c0_i32 = arith.constant 0 : i32
    %c0_i32_0 = arith.constant 0 : i32
    %c0_i32_1 = arith.constant 0 : i32
    return %arg0, %c0_i32, %c0_i32_0 : i32, i32, i32
  }
  func.func @transform_7(%arg0: i32) -> (i32, i32, i32) {
    %c0_i32 = arith.constant 0 : i32
    %c0_i32_0 = arith.constant 0 : i32
    %c0_i32_1 = arith.constant 0 : i32
    return %arg0, %c0_i32, %c0_i32_0 : i32, i32, i32
  }
}

</mosaic_0001>

<llo_original>
// kernel: pixel_nerf_forward.1
$region0: #{pixel_nerf_forward.1}
  #allocation0 [shape = 'u32[]', space=smem, size = 0x4, offset = 0x4, fixed_abs, tag = 'smem constant byte address 0x4 - core index']
  #allocation1 [shape = 'u32[144,128]{1,0:T(1,128)}', space=vmem, size = 0x12000, scoped, tag = 'internal scratch']
  #allocation2 [shape = 'f32[4,512]{1,0:T(4,128)}', space=vmem, size = 0x2000, scoped, tag = 'scratch operand']
  %s0 = inlined_call_operand.vmem [shape: f32[2,6,512], index: 0, kind: input, shape index: {}]
  %s1 = inlined_call_operand.vmem [shape: f32[3,128,16], index: 1, kind: input, shape index: {}]
  %s2 = inlined_call_operand.vmem [shape: f32[32,8], index: 2, kind: input, shape index: {}]
  %s3 = inlined_call_operand.vmem [shape: f32[32,1], index: 3, kind: input, shape index: {}]
  %s4 = inlined_call_operand.vmem [shape: f32[4,32], index: 4, kind: input, shape index: {}]
  %s5 = inlined_call_operand.vmem [shape: f32[4,1], index: 5, kind: input, shape index: {}]
  %s6 = inlined_call_operand.vmem [shape: f32[2,3,64], index: 6, kind: output, shape index: {0}]
  %s7 = inlined_call_operand.vmem [shape: f32[2,1,64], index: 7, kind: output, shape index: {1}]
  %8 = xla_tuple %s6, %s7
  %s9 = sld [smem:[#allocation0]]
  $region65: #{pixel_nerf_forward.1} parent=0
    _
  %s11 = ssub.s32 1, %s9
  %s12 = scalar_select 0, %s11, %s9
  loop: start=0, step=1, limit=4
  $region2: #{pixel_nerf_forward.1} parent=0 // loop_pre_header
    _
  $region3: #{pixel_nerf_forward.1} parent=0 // loop_header
    %s14 = sphi 0, %s18
    %p15 = scmp.ge.s32.totalorder %s14, 4
    %s24 = sphi 0, %s26
    %s27 = sphi 0, %s24
    %s28 = sphi 0, %s27
    %s44 = sphi 0, %s28
    %s48 = sphi 0, %s48
    %s50 = sphi 0, %s48
    %s51 = sphi 0, %s50
    %s65 = sphi 0, %s51
    %s69 = sphi 0, %s69
    %s71 = sphi 0, %s69
    %s72 = sphi 0, %s71
    %s86 = sphi 0, %s72
    %s90 = sphi 0, %s90
    %s92 = sphi 0, %s90
    %s93 = sphi 0, %s92
    %s107 = sphi 0, %s93
    %s111 = sphi 0, %s111
    %s113 = sphi 0, %s111
    %s114 = sphi 0, %s113
    %s128 = sphi 0, %s114
    %s132 = sphi 0, %s132
    %s134 = sphi 0, %s132
    %s135 = sphi 0, %s134
    %s149 = sphi 0, %s135
    %s155 = sphi 0, %s157
    %s158 = sphi 0, %s155
    %s159 = sphi 0, %s158
    %s175 = sphi 0, %s159
    %s181 = sphi 0, %s183
    %s184 = sphi 0, %s181
    %s185 = sphi 0, %s184
    %s201 = sphi 0, %s185
  $region4: #{pixel_nerf_forward.1} parent=0 // loop_header_branch
    %17 = sbr.rel (%p15) target = $region8
  $region5: #{pixel_nerf_forward.1} parent=0 // loop_body
    %s19 = ssub.s32 %s14, 1
    %s20 = ssub.s32 %s14, 2
    %s21 = sadd.s32 %s14, 1
    %s22 = ssub.s32 %s14, %s21
    %p23 = scmp.eq.s32.totalorder %s22, 0
    %s25 = sadd.s32 %s24, 1
    %s26 = scalar_select %p23, %s24, %s25
    %p29 = pneg %p23
    %p30 = scmp.eq.s32.totalorder %s14, 1
    %p31 = por %p29, %p30
    %p32 = scmp.ne.s32.totalorder %s24, %s27
    %p33 = scmp.eq.s32.totalorder %s14, 0
    %p34 = por %p32, %p33
    %p35 = scmp.ne.s32.totalorder %s24, %s27
    %p36 = scmp.eq.s32.totalorder %s19, 1
    %p37 = por %p35, %p36
    %p38 = scmp.ne.s32.totalorder %s27, %s28
    %p39 = scmp.eq.s32.totalorder %s19, 0
    %p40 = por %p38, %p39
    %p41 = scmp.ne.s32.totalorder %s27, %s28
    %p42 = scmp.eq.s32.totalorder %s20, 1
    %p43 = por %p41, %p42
    %p45 = scmp.ne.s32.totalorder %s28, %s44
    %p46 = scmp.eq.s32.totalorder %s20, 0
    %p47 = por %p45, %p46
    %s49 = sadd.s32 %s48, 1
    %p52 = scmp.eq.s32.totalorder %s14, 1
    %p53 = scmp.ne.s32.totalorder %s48, %s50
    %p54 = scmp.eq.s32.totalorder %s14, 0
    %p55 = por %p53, %p54
    %p56 = scmp.ne.s32.totalorder %s48, %s50
    %p57 = scmp.eq.s32.totalorder %s19, 1
    %p58 = por %p56, %p57
    %p59 = scmp.ne.s32.totalorder %s50, %s51
    %p60 = scmp.eq.s32.totalorder %s19, 0
    %p61 = por %p59, %p60
    %p62 = scmp.ne.s32.totalorder %s50, %s51
    %p63 = scmp.eq.s32.totalorder %s20, 1
    %p64 = por %p62, %p63
    %p66 = scmp.ne.s32.totalorder %s51, %s65
    %p67 = scmp.eq.s32.totalorder %s20, 0
    %p68 = por %p66, %p67
    %s70 = sadd.s32 %s69, 1
    %p73 = scmp.eq.s32.totalorder %s14, 1
    %p74 = scmp.ne.s32.totalorder %s69, %s71
    %p75 = scmp.eq.s32.totalorder %s14, 0
    %p76 = por %p74, %p75
    %p77 = scmp.ne.s32.totalorder %s69, %s71
    %p78 = scmp.eq.s32.totalorder %s19, 1
    %p79 = por %p77, %p78
    %p80 = scmp.ne.s32.totalorder %s71, %s72
    %p81 = scmp.eq.s32.totalorder %s19, 0
    %p82 = por %p80, %p81
    %p83 = scmp.ne.s32.totalorder %s71, %s72
    %p84 = scmp.eq.s32.totalorder %s20, 1
    %p85 = por %p83, %p84
    %p87 = scmp.ne.s32.totalorder %s72, %s86
    %p88 = scmp.eq.s32.totalorder %s20, 0
    %p89 = por %p87, %p88
    %s91 = sadd.s32 %s90, 1
    %p94 = scmp.eq.s32.totalorder %s14, 1
    %p95 = scmp.ne.s32.totalorder %s90, %s92
    %p96 = scmp.eq.s32.totalorder %s14, 0
    %p97 = por %p95, %p96
    %p98 = scmp.ne.s32.totalorder %s90, %s92
    %p99 = scmp.eq.s32.totalorder %s19, 1
    %p100 = por %p98, %p99
    %p101 = scmp.ne.s32.totalorder %s92, %s93
    %p102 = scmp.eq.s32.totalorder %s19, 0
    %p103 = por %p101, %p102
    %p104 = scmp.ne.s32.totalorder %s92, %s93
    %p105 = scmp.eq.s32.totalorder %s20, 1
    %p106 = por %p104, %p105
    %p108 = scmp.ne.s32.totalorder %s93, %s107
    %p109 = scmp.eq.s32.totalorder %s20, 0
    %p110 = por %p108, %p109
    %s112 = sadd.s32 %s111, 1
    %p115 = scmp.eq.s32.totalorder %s14, 1
    %p116 = scmp.ne.s32.totalorder %s111, %s113
    %p117 = scmp.eq.s32.totalorder %s14, 0
    %p118 = por %p116, %p117
    %p119 = scmp.ne.s32.totalorder %s111, %s113
    %p120 = scmp.eq.s32.totalorder %s19, 1
    %p121 = por %p119, %p120
    %p122 = scmp.ne.s32.totalorder %s113, %s114
    %p123 = scmp.eq.s32.totalorder %s19, 0
    %p124 = por %p122, %p123
    %p125 = scmp.ne.s32.totalorder %s113, %s114
    %p126 = scmp.eq.s32.totalorder %s20, 1
    %p127 = por %p125, %p126
    %p129 = scmp.ne.s32.totalorder %s114, %s128
    %p130 = scmp.eq.s32.totalorder %s20, 0
    %p131 = por %p129, %p130
    %s133 = sadd.s32 %s132, 1
    %p136 = scmp.eq.s32.totalorder %s14, 1
    %p137 = scmp.ne.s32.totalorder %s132, %s134
    %p138 = scmp.eq.s32.totalorder %s14, 0
    %p139 = por %p137, %p138
    %p140 = scmp.ne.s32.totalorder %s132, %s134
    %p141 = scmp.eq.s32.totalorder %s19, 1
    %p142 = por %p140, %p141
    %p143 = scmp.ne.s32.totalorder %s134, %s135
    %p144 = scmp.eq.s32.totalorder %s19, 0
    %p145 = por %p143, %p144
    %p146 = scmp.ne.s32.totalorder %s134, %s135
    %p147 = scmp.eq.s32.totalorder %s20, 1
    %p148 = por %p146, %p147
    %p150 = scmp.ne.s32.totalorder %s135, %s149
    %p151 = scmp.eq.s32.totalorder %s20, 0
    %p152 = por %p150, %p151
    %s153 = ssub.s32 %s14, %s21
    %p154 = scmp.eq.s32.totalorder %s153, 0
    %s156 = sadd.s32 %s155, 1
    %s157 = scalar_select %p154, %s155, %s156
    %p160 = pneg %p154
    %p161 = scmp.eq.s32.totalorder %s14, 1
    %p162 = por %p160, %p161
    %p163 = scmp.ne.s32.totalorder %s155, %s158
    %p164 = scmp.eq.s32.totalorder %s14, 0
    %p165 = por %p163, %p164
    %p166 = scmp.ne.s32.totalorder %s155, %s158
    %p167 = scmp.eq.s32.totalorder %s19, 1
    %p168 = por %p166, %p167
    %p169 = scmp.ne.s32.totalorder %s158, %s159
    %p170 = scmp.eq.s32.totalorder %s19, 0
    %p171 = por %p169, %p170
    %p172 = scmp.ne.s32.totalorder %s158, %s159
    %p173 = scmp.eq.s32.totalorder %s20, 1
    %p174 = por %p172, %p173
    %p176 = scmp.ne.s32.totalorder %s159, %s175
    %p177 = scmp.eq.s32.totalorder %s20, 0
    %p178 = por %p176, %p177
    %s179 = ssub.s32 %s14, %s21
    %p180 = scmp.eq.s32.totalorder %s179, 0
    %s182 = sadd.s32 %s181, 1
    %s183 = scalar_select %p180, %s181, %s182
    %p186 = pneg %p180
    %p187 = scmp.eq.s32.totalorder %s14, 1
    %p188 = por %p186, %p187
    %p189 = scmp.ne.s32.totalorder %s181, %s184
    %p190 = scmp.eq.s32.totalorder %s14, 0
    %p191 = por %p189, %p190
    %p192 = scmp.ne.s32.totalorder %s181, %s184
    %p193 = scmp.eq.s32.totalorder %s19, 1
    %p194 = por %p192, %p193
    %p195 = scmp.ne.s32.totalorder %s184, %s185
    %p196 = scmp.eq.s32.totalorder %s19, 0
    %p197 = por %p195, %p196
    %p198 = scmp.ne.s32.totalorder %s184, %s185
    %p199 = scmp.eq.s32.totalorder %s20, 1
    %p200 = por %p198, %p199
    %p202 = scmp.ne.s32.totalorder %s185, %s201
    %p203 = scmp.eq.s32.totalorder %s20, 0
    %p204 = por %p202, %p203
    %p205 = scmp.le.s32.totalorder 1, %s14
    %p206 = scmp.lt.s32.totalorder %s14, 3
    %p207 = pnand %p205, %p206
    %p208 = pneg %p207
    // Predicated region
    $region9: #{pixel_nerf_forward.1} parent=5 // pred_check
      _
    $region10: #{pixel_nerf_forward.1} parent=5 // pred_check_branch
      %210 = sbr.rel (%p207) target = $region12
    $region11: #{pixel_nerf_forward.1} parent=5 // pred_region
      %s211 = ssub.s32 %s14, 1
      // Predicated region
      $region13: #{pixel_nerf_forward.1} parent=11 // pred_check
        %p212 = pneg %p61
      $region14: #{pixel_nerf_forward.1} parent=11 // pred_check_branch
        %214 = sbr.rel (%p212) target = $region16
      $region15: #{pixel_nerf_forward.1} parent=11 // pred_region
        _
      $region16: #{pixel_nerf_forward.1} parent=11 // pred_fallthru
        _
      // Predicated region
      $region17: #{pixel_nerf_forward.1} parent=11 // pred_check
        %p215 = pneg %p82
      $region18: #{pixel_nerf_forward.1} parent=11 // pred_check_branch
        %217 = sbr.rel (%p215) target = $region20
      $region19: #{pixel_nerf_forward.1} parent=11 // pred_region
        _
      $region20: #{pixel_nerf_forward.1} parent=11 // pred_fallthru
        _
      // Predicated region
      $region21: #{pixel_nerf_forward.1} parent=11 // pred_check
        %p218 = pneg %p103
      $region22: #{pixel_nerf_forward.1} parent=11 // pred_check_branch
        %220 = sbr.rel (%p218) target = $region24
      $region23: #{pixel_nerf_forward.1} parent=11 // pred_region
        _
      $region24: #{pixel_nerf_forward.1} parent=11 // pred_fallthru
        _
      // Predicated region
      $region25: #{pixel_nerf_forward.1} parent=11 // pred_check
        %p221 = pneg %p124
      $region26: #{pixel_nerf_forward.1} parent=11 // pred_check_branch
        %223 = sbr.rel (%p221) target = $region28
      $region27: #{pixel_nerf_forward.1} parent=11 // pred_region
        _
      $region28: #{pixel_nerf_forward.1} parent=11 // pred_fallthru
        _
      // Predicated region
      $region29: #{pixel_nerf_forward.1} parent=11 // pred_check
        %p224 = pneg %p145
      $region30: #{pixel_nerf_forward.1} parent=11 // pred_check_branch
        %226 = sbr.rel (%p224) target = $region32
      $region31: #{pixel_nerf_forward.1} parent=11 // pred_region
        _
      $region32: #{pixel_nerf_forward.1} parent=11 // pred_fallthru
        _
    $region12: #{pixel_nerf_forward.1} parent=5 // pred_fallthru
      _
    %p227 = scmp.lt.s32.totalorder %s14, 2
    // Predicated region
    $region33: #{pixel_nerf_forward.1} parent=5 // pred_check
      %p228 = pneg %p227
    $region34: #{pixel_nerf_forward.1} parent=5 // pred_check_branch
      %230 = sbr.rel (%p228) target = $region36
    $region35: #{pixel_nerf_forward.1} parent=5 // pred_region
      // Predicated region
      $region37: #{pixel_nerf_forward.1} parent=35 // pred_check
        %p231 = pneg %p34
      $region38: #{pixel_nerf_forward.1} parent=35 // pred_check_branch
        %233 = sbr.rel (%p231) target = $region40
      $region39: #{pixel_nerf_forward.1} parent=35 // pred_region
        %p234 = scmp.lt.s32.totalorder %s14, 1
        %s235 = scalar_select %p234, %s14, 1
        %s236 = smul.addr %s235, 4
        %s237 = smul.addr %s236, 8
        %s238 = scalar_lea.vmem %s0, %s237
      $region40: #{pixel_nerf_forward.1} parent=35 // pred_fallthru
        _
    $region36: #{pixel_nerf_forward.1} parent=5 // pred_fallthru
      _
    %p239 = scmp.le.s32.totalorder 1, %s14
    %p240 = scmp.lt.s32.totalorder %s14, 3
    %p241 = pnand %p239, %p240
    %p242 = pneg %p241
    // Predicated region
    $region41: #{pixel_nerf_forward.1} parent=5 // pred_check
      _
    $region42: #{pixel_nerf_forward.1} parent=5 // pred_check_branch
      %244 = sbr.rel (%p241) target = $region44
    $region43: #{pixel_nerf_forward.1} parent=5 // pred_region
      %s245 = ssub.s32 %s14, 1
      %p246 = scmp.lt.s32.totalorder %s19, 1
      %s247 = scalar_select %p246, %s19, 1
      %s248 = smul.addr %s247, 4
      %s249 = smul.addr %s248, 8
      %s250 = scalar_lea.vmem %s0, %s249
      %p251 = pneg %p40
      %p252 = pneg %p37
      %p253 = pneg %p61
      %p254 = pneg %p58
      %p255 = pneg %p82
      %p256 = pneg %p79
      %p257 = pneg %p103
      %p258 = pneg %p100
      %p259 = pneg %p124
      %p260 = pneg %p121
      %p261 = pneg %p145
      %p262 = pneg %p142
      %p263 = pneg %p171
      %p264 = pneg %p168
      %p265 = scmp.lt.s32.totalorder %s19, 1
      %s266 = scalar_select %p265, %s19, 1
      %s267 = smul.addr %s266, 4
      %s268 = scalar_lea.vmem %s6, %s267
      %p269 = pneg %p197
      %p270 = pneg %p194
      %p271 = scmp.lt.s32.totalorder %s19, 1
      %s272 = scalar_select %p271, %s19, 1
      %s273 = scalar_lea.vmem %s7, %s272
      %p274 = scmp.lt.s32.totalorder %s19, 1
      %s275 = scalar_select %p274, %s19, 1
      %s276 = smul.addr %s275, 4
      %s277 = smul.addr %s276, 8
      %s278 = scalar_lea.vmem %s0, %s277
      %p279 = scmp.lt.s32.totalorder %s19, 1
      %s280 = scalar_select %p279, %s19, 1
      %s281 = smul.addr %s280, 4
      %s282 = scalar_lea.vmem %s6, %s281
      %p283 = scmp.lt.s32.totalorder %s19, 1
      %s284 = scalar_select %p283, %s19, 1
      %s285 = scalar_lea.vmem %s7, %s284
      %v286 = vlaneseq
      %v287 = vshrl.u32 %v286, 7
      %v288 = vadd.s32 %v287, 8
      %v289 = vcvt.s32.f32 %v287
      %v290 = vcvt.s32.f32 %v288
      %v291 = vadd.s32 %v287, 16
      %v292 = vadd.s32 %v287, 24
      %v293 = vadd.s32 %v287, 32
      %v294 = vadd.s32 %v287, 40
      %v295 = vadd.s32 %v287, 48
      %v296 = vadd.s32 %v287, 56
      %v297 = vadd.s32 %v287, 64
      %v298 = vadd.s32 %v287, 72
      %v299 = vadd.s32 %v287, 80
      %v300 = vadd.s32 %v287, 88
      %v301 = vadd.s32 %v287, 96
      %v302 = vadd.s32 %v287, 104
      %v303 = vadd.s32 %v287, 112
      %v304 = vadd.s32 %v287, 120
      %v305 = vcvt.s32.f32 %v291
      %v306 = vcvt.s32.f32 %v292
      %v307 = vcvt.s32.f32 %v293
      %v308 = vcvt.s32.f32 %v294
      %v309 = vcvt.s32.f32 %v295
      %v310 = vcvt.s32.f32 %v296
      %v311 = vcvt.s32.f32 %v297
      %v312 = vcvt.s32.f32 %v298
      %v313 = vcvt.s32.f32 %v299
      %v314 = vcvt.s32.f32 %v300
      %v315 = vcvt.s32.f32 %v301
      %v316 = vcvt.s32.f32 %v302
      %v317 = vcvt.s32.f32 %v303
      %v318 = vcvt.s32.f32 %v304
      %v319 = vmul.f32 %v289, 0.125
      %v320 = vmul.f32 %v290, 0.125
      %v321 = vmul.f32 %v305, 0.125
      %v322 = vmul.f32 %v306, 0.125
      %v323 = vmul.f32 %v307, 0.125
      %v324 = vmul.f32 %v308, 0.125
      %v325 = vmul.f32 %v309, 0.125
      %v326 = vmul.f32 %v310, 0.125
      %v327 = vmul.f32 %v311, 0.125
      %v328 = vmul.f32 %v312, 0.125
      %v329 = vmul.f32 %v313, 0.125
      %v330 = vmul.f32 %v314, 0.125
      %v331 = vmul.f32 %v315, 0.125
      %v332 = vmul.f32 %v316, 0.125
      %v333 = vmul.f32 %v317, 0.125
      %v334 = vmul.f32 %v318, 0.125
      %v335 = vfloor.f32 %v319
      %v336 = vfloor.f32 %v320
      %v337 = vfloor.f32 %v321
      %v338 = vfloor.f32 %v322
      %v339 = vfloor.f32 %v323
      %v340 = vfloor.f32 %v324
      %v341 = vfloor.f32 %v325
      %v342 = vfloor.f32 %v326
      %v343 = vfloor.f32 %v327
      %v344 = vfloor.f32 %v328
      %v345 = vfloor.f32 %v329
      %v346 = vfloor.f32 %v330
      %v347 = vfloor.f32 %v331
      %v348 = vfloor.f32 %v332
      %v349 = vfloor.f32 %v333
      %v350 = vfloor.f32 %v334
      %v351 = vld [vmem:[%s278] ss:$8 sm:$0xf]
      %s352 = scalar_lea.vmem %s278, 1
      %v353 = vld [vmem:[%s352] ss:$8 sm:$0xf]
      %v355 = vlaneseq
      %v356 = vshrl.u32 %v355, 7
      %v357 = vsub.s32 0, %v356
      %v358 = vrot.slane %v353, %v357
      %v359 = vlaneseq
      %v360 = vshrl.u32 %v359, 7
      %v361 = vsub.s32 1, %v360
      %v362 = vrot.slane %v353, %v361
      %v363 = vlaneseq
      %v364 = vshrl.u32 %v363, 7
      %v365 = vsub.s32 2, %v364
      %v366 = vrot.slane %v353, %v365
      %v367 = vlaneseq
      %v368 = vshrl.u32 %v367, 7
      %v369 = vsub.s32 3, %v368
      %v370 = vrot.slane %v353, %v369
      %v375 = vsub.f32 %v289, %v358
      %v376 = vsub.f32 %v289, %v362
      %v377 = vsub.f32 %v289, %v366
      %v378 = vsub.f32 %v289, %v370
      %v379 = vsub.f32 %v290, %v358
      %v380 = vsub.f32 %v290, %v362
      %v381 = vsub.f32 %v290, %v366
      %v382 = vsub.f32 %v290, %v370
      %v383 = vand.u32 2147483647, %v375
      %v384 = vand.u32 2147483647, %v376
      %v385 = vand.u32 2147483647, %v377
      %v386 = vand.u32 2147483647, %v378
      %v387 = vand.u32 2147483647, %v379
      %v388 = vand.u32 2147483647, %v380
      %v389 = vand.u32 2147483647, %v381
      %v390 = vand.u32 2147483647, %v382
      %v391 = vsub.f32 1.0, %v383
      %v392 = vsub.f32 1.0, %v384
      %v393 = vsub.f32 1.0, %v385
      %v394 = vsub.f32 1.0, %v386
      %v395 = vsub.f32 1.0, %v387
      %v396 = vsub.f32 1.0, %v388
      %v397 = vsub.f32 1.0, %v389
      %v398 = vsub.f32 1.0, %v390
      %v399 = vmax.f32 %v391, 0.0
      %v400 = vmax.f32 %v392, 0.0
      %v401 = vmax.f32 %v393, 0.0
      %v402 = vmax.f32 %v394, 0.0
      %v403 = vmax.f32 %v395, 0.0
      %v404 = vmax.f32 %v396, 0.0
      %v405 = vmax.f32 %v397, 0.0
      %v406 = vmax.f32 %v398, 0.0
      %v408 = vlaneseq
      %v409 = vshrl.u32 %v408, 7
      %v410 = vsub.s32 0, %v409
      %v411 = vrot.slane %v351, %v410
      %v412 = vlaneseq
      %v413 = vshrl.u32 %v412, 7
      %v414 = vsub.s32 1, %v413
      %v415 = vrot.slane %v351, %v414
      %v416 = vlaneseq
      %v417 = vshrl.u32 %v416, 7
      %v418 = vsub.s32 2, %v417
      %v419 = vrot.slane %v351, %v418
      %v420 = vlaneseq
      %v421 = vshrl.u32 %v420, 7
      %v422 = vsub.s32 3, %v421
      %v423 = vrot.slane %v351, %v422
      %v428 = vsub.f32 %v335, %v411
      %v429 = vsub.f32 %v335, %v415
      %v430 = vsub.f32 %v335, %v419
      %v431 = vsub.f32 %v335, %v423
      %v432 = vsub.f32 %v336, %v411
      %v433 = vsub.f32 %v336, %v415
      %v434 = vsub.f32 %v336, %v419
      %v435 = vsub.f32 %v336, %v423
      %v436 = vsub.f32 %v337, %v411
      %v437 = vsub.f32 %v337, %v415
      %v438 = vsub.f32 %v337, %v419
      %v439 = vsub.f32 %v337, %v423
      %v440 = vsub.f32 %v338, %v411
      %v441 = vsub.f32 %v338, %v415
      %v442 = vsub.f32 %v338, %v419
      %v443 = vsub.f32 %v338, %v423
      %v444 = vsub.f32 %v339, %v411
      %v445 = vsub.f32 %v339, %v415
      %v446 = vsub.f32 %v339, %v419
      %v447 = vsub.f32 %v339, %v423
      %v448 = vsub.f32 %v340, %v411
      %v449 = vsub.f32 %v340, %v415
      %v450 = vsub.f32 %v340, %v419
      %v451 = vsub.f32 %v340, %v423
      %v452 = vsub.f32 %v341, %v411
      %v453 = vsub.f32 %v341, %v415
      %v454 = vsub.f32 %v341, %v419
      %v455 = vsub.f32 %v341, %v423
      %v456 = vsub.f32 %v342, %v411
      %v457 = vsub.f32 %v342, %v415
      %v458 = vsub.f32 %v342, %v419
      %v459 = vsub.f32 %v342, %v423
      %v460 = vsub.f32 %v343, %v411
      %v461 = vsub.f32 %v343, %v415
      %v462 = vsub.f32 %v343, %v419
      %v463 = vsub.f32 %v343, %v423
      %v464 = vsub.f32 %v344, %v411
      %v465 = vsub.f32 %v344, %v415
      %v466 = vsub.f32 %v344, %v419
      %v467 = vsub.f32 %v344, %v423
      %v468 = vsub.f32 %v345, %v411
      %v469 = vsub.f32 %v345, %v415
      %v470 = vsub.f32 %v345, %v419
      %v471 = vsub.f32 %v345, %v423
      %v472 = vsub.f32 %v346, %v411
      %v473 = vsub.f32 %v346, %v415
      %v474 = vsub.f32 %v346, %v419
      %v475 = vsub.f32 %v346, %v423
      %v476 = vsub.f32 %v347, %v411
      %v477 = vsub.f32 %v347, %v415
      %v478 = vsub.f32 %v347, %v419
      %v479 = vsub.f32 %v347, %v423
      %v480 = vsub.f32 %v348, %v411
      %v481 = vsub.f32 %v348, %v415
      %v482 = vsub.f32 %v348, %v419
      %v483 = vsub.f32 %v348, %v423
      %v484 = vsub.f32 %v349, %v411
      %v485 = vsub.f32 %v349, %v415
      %v486 = vsub.f32 %v349, %v419
      %v487 = vsub.f32 %v349, %v423
      %v488 = vsub.f32 %v350, %v411
      %v489 = vsub.f32 %v350, %v415
      %v490 = vsub.f32 %v350, %v419
      %v491 = vsub.f32 %v350, %v423
      %v492 = vand.u32 2147483647, %v428
      %v493 = vand.u32 2147483647, %v429
      %v494 = vand.u32 2147483647, %v430
      %v495 = vand.u32 2147483647, %v431
      %v496 = vand.u32 2147483647, %v432
      %v497 = vand.u32 2147483647, %v433
      %v498 = vand.u32 2147483647, %v434
      %v499 = vand.u32 2147483647, %v435
      %v500 = vand.u32 2147483647, %v436
      %v501 = vand.u32 2147483647, %v437
      %v502 = vand.u32 2147483647, %v438
      %v503 = vand.u32 2147483647, %v439
      %v504 = vand.u32 2147483647, %v440
      %v505 = vand.u32 2147483647, %v441
      %v506 = vand.u32 2147483647, %v442
      %v507 = vand.u32 2147483647, %v443
      %v508 = vand.u32 2147483647, %v444
      %v509 = vand.u32 2147483647, %v445
      %v510 = vand.u32 2147483647, %v446
      %v511 = vand.u32 2147483647, %v447
      %v512 = vand.u32 2147483647, %v448
      %v513 = vand.u32 2147483647, %v449
      %v514 = vand.u32 2147483647, %v450
      %v515 = vand.u32 2147483647, %v451
      %v516 = vand.u32 2147483647, %v452
      %v517 = vand.u32 2147483647, %v453
      %v518 = vand.u32 2147483647, %v454
      %v519 = vand.u32 2147483647, %v455
      %v520 = vand.u32 2147483647, %v456
      %v521 = vand.u32 2147483647, %v457
      %v522 = vand.u32 2147483647, %v458
      %v523 = vand.u32 2147483647, %v459
      %v524 = vand.u32 2147483647, %v460
      %v525 = vand.u32 2147483647, %v461
      %v526 = vand.u32 2147483647, %v462
      %v527 = vand.u32 2147483647, %v463
      %v528 = vand.u32 2147483647, %v464
      %v529 = vand.u32 2147483647, %v465
      %v530 = vand.u32 2147483647, %v466
      %v531 = vand.u32 2147483647, %v467
      %v532 = vand.u32 2147483647, %v468
      %v533 = vand.u32 2147483647, %v469
      %v534 = vand.u32 2147483647, %v470
      %v535 = vand.u32 2147483647, %v471
      %v536 = vand.u32 2147483647, %v472
      %v537 = vand.u32 2147483647, %v473
      %v538 = vand.u32 2147483647, %v474
      %v539 = vand.u32 2147483647, %v475
      %v540 = vand.u32 2147483647, %v476
      %v541 = vand.u32 2147483647, %v477
      %v542 = vand.u32 2147483647, %v478
      %v543 = vand.u32 2147483647, %v479
      %v544 = vand.u32 2147483647, %v480
      %v545 = vand.u32 2147483647, %v481
      %v546 = vand.u32 2147483647, %v482
      %v547 = vand.u32 2147483647, %v483
      %v548 = vand.u32 2147483647, %v484
      %v549 = vand.u32 2147483647, %v485
      %v550 = vand.u32 2147483647, %v486
      %v551 = vand.u32 2147483647, %v487
      %v552 = vand.u32 2147483647, %v488
      %v553 = vand.u32 2147483647, %v489
      %v554 = vand.u32 2147483647, %v490
      %v555 = vand.u32 2147483647, %v491
      %v556 = vsub.f32 1.0, %v492
      %v557 = vsub.f32 1.0, %v493
      %v558 = vsub.f32 1.0, %v494
      %v559 = vsub.f32 1.0, %v495
      %v560 = vsub.f32 1.0, %v496
      %v561 = vsub.f32 1.0, %v497
      %v562 = vsub.f32 1.0, %v498
      %v563 = vsub.f32 1.0, %v499
      %v564 = vsub.f32 1.0, %v500
      %v565 = vsub.f32 1.0, %v501
      %v566 = vsub.f32 1.0, %v502
      %v567 = vsub.f32 1.0, %v503
      %v568 = vsub.f32 1.0, %v504
      %v569 = vsub.f32 1.0, %v505
      %v570 = vsub.f32 1.0, %v506
      %v571 = vsub.f32 1.0, %v507
      %v572 = vsub.f32 1.0, %v508
      %v573 = vsub.f32 1.0, %v509
      %v574 = vsub.f32 1.0, %v510
      %v575 = vsub.f32 1.0, %v511
      %v576 = vsub.f32 1.0, %v512
      %v577 = vsub.f32 1.0, %v513
      %v578 = vsub.f32 1.0, %v514
      %v579 = vsub.f32 1.0, %v515
      %v580 = vsub.f32 1.0, %v516
      %v581 = vsub.f32 1.0, %v517
      %v582 = vsub.f32 1.0, %v518
      %v583 = vsub.f32 1.0, %v519
      %v584 = vsub.f32 1.0, %v520
      %v585 = vsub.f32 1.0, %v521
      %v586 = vsub.f32 1.0, %v522
      %v587 = vsub.f32 1.0, %v523
      %v588 = vsub.f32 1.0, %v524
      %v589 = vsub.f32 1.0, %v525
      %v590 = vsub.f32 1.0, %v526
      %v591 = vsub.f32 1.0, %v527
      %v592 = vsub.f32 1.0, %v528
      %v593 = vsub.f32 1.0, %v529
      %v594 = vsub.f32 1.0, %v530
      %v595 = vsub.f32 1.0, %v531
      %v596 = vsub.f32 1.0, %v532
      %v597 = vsub.f32 1.0, %v533
      %v598 = vsub.f32 1.0, %v534
      %v599 = vsub.f32 1.0, %v535
      %v600 = vsub.f32 1.0, %v536
      %v601 = vsub.f32 1.0, %v537
      %v602 = vsub.f32 1.0, %v538
      %v603 = vsub.f32 1.0, %v539
      %v604 = vsub.f32 1.0, %v540
      %v605 = vsub.f32 1.0, %v541
      %v606 = vsub.f32 1.0, %v542
      %v607 = vsub.f32 1.0, %v543
      %v608 = vsub.f32 1.0, %v544
      %v609 = vsub.f32 1.0, %v545
      %v610 = vsub.f32 1.0, %v546
      %v611 = vsub.f32 1.0, %v547
      %v612 = vsub.f32 1.0, %v548
      %v613 = vsub.f32 1.0, %v549
      %v614 = vsub.f32 1.0, %v550
      %v615 = vsub.f32 1.0, %v551
      %v616 = vsub.f32 1.0, %v552
      %v617 = vsub.f32 1.0, %v553
      %v618 = vsub.f32 1.0, %v554
      %v619 = vsub.f32 1.0, %v555
      %v620 = vmax.f32 %v556, 0.0
      %v621 = vmax.f32 %v557, 0.0
      %v622 = vmax.f32 %v558, 0.0
      %v623 = vmax.f32 %v559, 0.0
      %v624 = vmax.f32 %v560, 0.0
      %v625 = vmax.f32 %v561, 0.0
      %v626 = vmax.f32 %v562, 0.0
      %v627 = vmax.f32 %v563, 0.0
      %v628 = vmax.f32 %v564, 0.0
      %v629 = vmax.f32 %v565, 0.0
      %v630 = vmax.f32 %v566, 0.0
      %v631 = vmax.f32 %v567, 0.0
      %v632 = vmax.f32 %v568, 0.0
      %v633 = vmax.f32 %v569, 0.0
      %v634 = vmax.f32 %v570, 0.0
      %v635 = vmax.f32 %v571, 0.0
      %v636 = vmax.f32 %v572, 0.0
      %v637 = vmax.f32 %v573, 0.0
      %v638 = vmax.f32 %v574, 0.0
      %v639 = vmax.f32 %v575, 0.0
      %v640 = vmax.f32 %v576, 0.0
      %v641 = vmax.f32 %v577, 0.0
      %v642 = vmax.f32 %v578, 0.0
      %v643 = vmax.f32 %v579, 0.0
      %v644 = vmax.f32 %v580, 0.0
      %v645 = vmax.f32 %v581, 0.0
      %v646 = vmax.f32 %v582, 0.0
      %v647 = vmax.f32 %v583, 0.0
      %v648 = vmax.f32 %v584, 0.0
      %v649 = vmax.f32 %v585, 0.0
      %v650 = vmax.f32 %v586, 0.0
      %v651 = vmax.f32 %v587, 0.0
      %v652 = vmax.f32 %v588, 0.0
      %v653 = vmax.f32 %v589, 0.0
      %v654 = vmax.f32 %v590, 0.0
      %v655 = vmax.f32 %v591, 0.0
      %v656 = vmax.f32 %v592, 0.0
      %v657 = vmax.f32 %v593, 0.0
      %v658 = vmax.f32 %v594, 0.0
      %v659 = vmax.f32 %v595, 0.0
      %v660 = vmax.f32 %v596, 0.0
      %v661 = vmax.f32 %v597, 0.0
      %v662 = vmax.f32 %v598, 0.0
      %v663 = vmax.f32 %v599, 0.0
      %v664 = vmax.f32 %v600, 0.0
      %v665 = vmax.f32 %v601, 0.0
      %v666 = vmax.f32 %v602, 0.0
      %v667 = vmax.f32 %v603, 0.0
      %v668 = vmax.f32 %v604, 0.0
      %v669 = vmax.f32 %v605, 0.0
      %v670 = vmax.f32 %v606, 0.0
      %v671 = vmax.f32 %v607, 0.0
      %v672 = vmax.f32 %v608, 0.0
      %v673 = vmax.f32 %v609, 0.0
      %v674 = vmax.f32 %v610, 0.0
      %v675 = vmax.f32 %v611, 0.0
      %v676 = vmax.f32 %v612, 0.0
      %v677 = vmax.f32 %v613, 0.0
      %v678 = vmax.f32 %v614, 0.0
      %v679 = vmax.f32 %v615, 0.0
      %v680 = vmax.f32 %v616, 0.0
      %v681 = vmax.f32 %v617, 0.0
      %v682 = vmax.f32 %v618, 0.0
      %v683 = vmax.f32 %v619, 0.0
      %v684 = vld [vmem:[%s1] sm:$0xff]
      %v685 = vld [vmem:[%s1 + $0x8] sm:$0xff]
      %v686 = vld [vmem:[%s1 + $0x10] sm:$0xff]
      %v687 = vld [vmem:[%s1 + $0x18] sm:$0xff]
      %v688 = vld [vmem:[%s1 + $0x20] sm:$0xff]
      %v689 = vld [vmem:[%s1 + $0x28] sm:$0xff]
      %v690 = vld [vmem:[%s1 + $0x30] sm:$0xff]
      %v691 = vld [vmem:[%s1 + $0x38] sm:$0xff]
      %v692 = vld [vmem:[%s1 + $0x40] sm:$0xff]
      %v693 = vld [vmem:[%s1 + $0x48] sm:$0xff]
      %v694 = vld [vmem:[%s1 + $0x50] sm:$0xff]
      %v695 = vld [vmem:[%s1 + $0x58] sm:$0xff]
      %v696 = vld [vmem:[%s1 + $0x60] sm:$0xff]
      %v697 = vld [vmem:[%s1 + $0x68] sm:$0xff]
      %v698 = vld [vmem:[%s1 + $0x70] sm:$0xff]
      %v699 = vld [vmem:[%s1 + $0x78] sm:$0xff]
      %vm700 = vcmask 130048
      %v702 = vsel %vm700, %v684, 0
      %v705 = vsel %vm700, %v685, 0
      %v708 = vsel %vm700, %v686, 0
      %v711 = vsel %vm700, %v687, 0
      %v714 = vsel %vm700, %v688, 0
      %v717 = vsel %vm700, %v689, 0
      %v720 = vsel %vm700, %v690, 0
      %v723 = vsel %vm700, %v691, 0
      %v726 = vsel %vm700, %v692, 0
      %v729 = vsel %vm700, %v693, 0
      %v732 = vsel %vm700, %v694, 0
      %v735 = vsel %vm700, %v695, 0
      %v738 = vsel %vm700, %v696, 0
      %v741 = vsel %vm700, %v697, 0
      %v744 = vsel %vm700, %v698, 0
      %v747 = vsel %vm700, %v699, 0
      %749 = vmatprep.subr.mxu0 0.0
      %750 = vmatpush1.msra.mxu0 0.0
      %751 = vmatprep.subr.mxu0 0.0
      %752 = vmatpush1.msra.mxu0 0.0
      %753 = vmatprep.subr.mxu0 0.0
      %754 = vmatpush1.msra.mxu0 0.0
      %755 = vmatprep.subr.mxu0 0.0
      %756 = vmatpush1.msra.mxu0 0.0
      %757 = vmatprep.subr.mxu0 0.0
      %758 = vmatpush1.msra.mxu0 0.0
      %759 = vmatprep.subr.mxu0 0.0
      %760 = vmatpush1.msra.mxu0 0.0
      %761 = vmatprep.subr.mxu0 0.0
      %762 = vmatpush1.msra.mxu0 0.0
      %763 = vmatprep.subr.mxu0 0.0
      %764 = vmatpush1.msra.mxu0 0.0
      %765 = vmatprep.subr.mxu0 0.0
      %766 = vmatpush1.msra.mxu0 0.0
      %767 = vmatprep.subr.mxu0 0.0
      %768 = vmatpush1.msra.mxu0 0.0
      %769 = vmatprep.subr.mxu0 0.0
      %770 = vmatpush1.msra.mxu0 0.0
      %771 = vmatprep.subr.mxu0 0.0
      %772 = vmatpush1.msra.mxu0 0.0
      %773 = vmatprep.subr.mxu0 0.0
      %774 = vmatpush1.msra.mxu0 0.0
      %775 = vmatprep.subr.mxu0 0.0
      %776 = vmatpush1.msra.mxu0 0.0
      %777 = vmatprep.subr.mxu0 %v404
      %778 = vmatpush1.msra.mxu0 %v403
      %779 = vmatprep.subr.mxu0 %v400
      %780 = vmatpush1.msra.mxu0 %v399
      %781 = vmatprep.subr.mxu0 0.0
      %782 = vmatpush2.msra.mxu0 0.0
      %783 = vmatprep.subr.mxu0 0.0
      %784 = vmatpush2.msra.mxu0 0.0
      %785 = vmatprep.subr.mxu0 0.0
      %786 = vmatpush2.msra.mxu0 0.0
      %787 = vmatprep.subr.mxu0 0.0
      %788 = vmatpush2.msra.mxu0 0.0
      %789 = vmatprep.subr.mxu0 0.0
      %790 = vmatpush2.msra.mxu0 0.0
      %791 = vmatprep.subr.mxu0 0.0
      %792 = vmatpush2.msra.mxu0 0.0
      %793 = vmatprep.subr.mxu0 0.0
      %794 = vmatpush2.msra.mxu0 0.0
      %795 = vmatprep.subr.mxu0 0.0
      %796 = vmatpush2.msra.mxu0 0.0
      %797 = vmatprep.subr.mxu0 0.0
      %798 = vmatpush2.msra.mxu0 0.0
      %799 = vmatprep.subr.mxu0 0.0
      %800 = vmatpush2.msra.mxu0 0.0
      %801 = vmatprep.subr.mxu0 0.0
      %802 = vmatpush2.msra.mxu0 0.0
      %803 = vmatprep.subr.mxu0 0.0
      %804 = vmatpush2.msra.mxu0 0.0
      %805 = vmatprep.subr.mxu0 0.0
      %806 = vmatpush2.msra.mxu0 0.0
      %807 = vmatprep.subr.mxu0 0.0
      %808 = vmatpush2.msra.mxu0 0.0
      %809 = vmatprep.subr.mxu0 0.0
      %810 = vmatpush2.msra.mxu0 0.0
      %811 = vmatprep.subr.mxu0 0.0
      %812 = vmatpush2.msra.mxu0 0.0
      %813 = vmatprep.mubr.f32.mxu0 0.0
      %814 = vmatmul.mubr.f32.gmra.mxu0 %v702
      %v815 = vpop.f32.mrf.mxu0
      %v816 = vadd.f32 0.0, %v815
      %v817 = vpop.f32.mrf.mxu0
      %v818 = vadd.f32 0.0, %v817
      %819 = vmatprep.mubr.f32.mxu0 0.0
      %820 = vmatmul.mubr.f32.gmra.mxu0 %v705
      %v821 = vpop.f32.mrf.mxu0
      %v822 = vadd.f32 0.0, %v821
      %v823 = vpop.f32.mrf.mxu0
      %v824 = vadd.f32 0.0, %v823
      %825 = vmatprep.mubr.f32.mxu0 0.0
      %826 = vmatmul.mubr.f32.gmra.mxu0 %v708
      %v827 = vpop.f32.mrf.mxu0
      %v828 = vadd.f32 0.0, %v827
      %v829 = vpop.f32.mrf.mxu0
      %v830 = vadd.f32 0.0, %v829
      %831 = vmatprep.mubr.f32.mxu0 0.0
      %832 = vmatmul.mubr.f32.gmra.mxu0 %v711
      %v833 = vpop.f32.mrf.mxu0
      %v834 = vadd.f32 0.0, %v833
      %v835 = vpop.f32.mrf.mxu0
      %v836 = vadd.f32 0.0, %v835
      %837 = vmatprep.mubr.f32.mxu0 0.0
      %838 = vmatmul.mubr.f32.gmra.mxu0 %v714
      %v839 = vpop.f32.mrf.mxu0
      %v840 = vadd.f32 0.0, %v839
      %v841 = vpop.f32.mrf.mxu0
      %v842 = vadd.f32 0.0, %v841
      %843 = vmatprep.mubr.f32.mxu0 0.0
      %844 = vmatmul.mubr.f32.gmra.mxu0 %v717
      %v845 = vpop.f32.mrf.mxu0
      %v846 = vadd.f32 0.0, %v845
      %v847 = vpop.f32.mrf.mxu0
      %v848 = vadd.f32 0.0, %v847
      %849 = vmatprep.mubr.f32.mxu0 0.0
      %850 = vmatmul.mubr.f32.gmra.mxu0 %v720
      %v851 = vpop.f32.mrf.mxu0
      %v852 = vadd.f32 0.0, %v851
      %v853 = vpop.f32.mrf.mxu0
      %v854 = vadd.f32 0.0, %v853
      %855 = vmatprep.mubr.f32.mxu0 0.0
      %856 = vmatmul.mubr.f32.gmra.mxu0 %v723
      %v857 = vpop.f32.mrf.mxu0
      %v858 = vadd.f32 0.0, %v857
      %v859 = vpop.f32.mrf.mxu0
      %v860 = vadd.f32 0.0, %v859
      %861 = vmatprep.mubr.f32.mxu0 0.0
      %862 = vmatmul.mubr.f32.gmra.mxu0 %v726
      %v863 = vpop.f32.mrf.mxu0
      %v864 = vadd.f32 0.0, %v863
      %v865 = vpop.f32.mrf.mxu0
      %v866 = vadd.f32 0.0, %v865
      %867 = vmatprep.mubr.f32.mxu0 0.0
      %868 = vmatmul.mubr.f32.gmra.mxu0 %v729
      %v869 = vpop.f32.mrf.mxu0
      %v870 = vadd.f32 0.0, %v869
      %v871 = vpop.f32.mrf.mxu0
      %v872 = vadd.f32 0.0, %v871
      %873 = vmatprep.mubr.f32.mxu0 0.0
      %874 = vmatmul.mubr.f32.gmra.mxu0 %v732
      %v875 = vpop.f32.mrf.mxu0
      %v876 = vadd.f32 0.0, %v875
      %v877 = vpop.f32.mrf.mxu0
      %v878 = vadd.f32 0.0, %v877
      %879 = vmatprep.mubr.f32.mxu0 0.0
      %880 = vmatmul.mubr.f32.gmra.mxu0 %v735
      %v881 = vpop.f32.mrf.mxu0
      %v882 = vadd.f32 0.0, %v881
      %v883 = vpop.f32.mrf.mxu0
      %v884 = vadd.f32 0.0, %v883
      %885 = vmatprep.mubr.f32.mxu0 0.0
      %886 = vmatmul.mubr.f32.gmra.mxu0 %v738
      %v887 = vpop.f32.mrf.mxu0
      %v888 = vadd.f32 0.0, %v887
      %v889 = vpop.f32.mrf.mxu0
      %v890 = vadd.f32 0.0, %v889
      %891 = vmatprep.mubr.f32.mxu0 0.0
      %892 = vmatmul.mubr.f32.gmra.mxu0 %v741
      %v893 = vpop.f32.mrf.mxu0
      %v894 = vadd.f32 0.0, %v893
      %v895 = vpop.f32.mrf.mxu0
      %v896 = vadd.f32 0.0, %v895
      %897 = vmatprep.mubr.f32.mxu0 0.0
      %898 = vmatmul.mubr.f32.gmra.mxu0 %v744
      %v899 = vpop.f32.mrf.mxu0
      %v900 = vadd.f32 0.0, %v899
      %v901 = vpop.f32.mrf.mxu0
      %v902 = vadd.f32 0.0, %v901
      %903 = vmatprep.mubr.f32.mxu0 0.0
      %904 = vmatmul.mubr.f32.gmra.mxu0 %v747
      %v905 = vpop.f32.mrf.mxu0
      %v906 = vadd.f32 0.0, %v905
      %v907 = vpop.f32.mrf.mxu0
      %v908 = vadd.f32 0.0, %v907
      %909 = vdwg.mxu0
      %910 = vmatprep.subr.mxu0 0.0
      %911 = vmatpush1.msra.mxu0 0.0
      %912 = vmatprep.subr.mxu0 0.0
      %913 = vmatpush1.msra.mxu0 0.0
      %914 = vmatprep.subr.mxu0 0.0
      %915 = vmatpush1.msra.mxu0 0.0
      %916 = vmatprep.subr.mxu0 0.0
      %917 = vmatpush1.msra.mxu0 0.0
      %918 = vmatprep.subr.mxu0 0.0
      %919 = vmatpush1.msra.mxu0 0.0
      %920 = vmatprep.subr.mxu0 0.0
      %921 = vmatpush1.msra.mxu0 0.0
      %922 = vmatprep.subr.mxu0 0.0
      %923 = vmatpush1.msra.mxu0 0.0
      %924 = vmatprep.subr.mxu0 0.0
      %925 = vmatpush1.msra.mxu0 0.0
      %926 = vmatprep.subr.mxu0 0.0
      %927 = vmatpush1.msra.mxu0 0.0
      %928 = vmatprep.subr.mxu0 0.0
      %929 = vmatpush1.msra.mxu0 0.0
      %930 = vmatprep.subr.mxu0 0.0
      %931 = vmatpush1.msra.mxu0 0.0
      %932 = vmatprep.subr.mxu0 0.0
      %933 = vmatpush1.msra.mxu0 0.0
      %934 = vmatprep.subr.mxu0 0.0
      %935 = vmatpush1.msra.mxu0 0.0
      %936 = vmatprep.subr.mxu0 0.0
      %937 = vmatpush1.msra.mxu0 0.0
      %938 = vmatprep.subr.mxu0 %v406
      %939 = vmatpush1.msra.mxu0 %v405
      %940 = vmatprep.subr.mxu0 %v402
      %941 = vmatpush1.msra.mxu0 %v401
      %942 = vmatprep.subr.mxu0 0.0
      %943 = vmatpush2.msra.mxu0 0.0
      %944 = vmatprep.subr.mxu0 0.0
      %945 = vmatpush2.msra.mxu0 0.0
      %946 = vmatprep.subr.mxu0 0.0
      %947 = vmatpush2.msra.mxu0 0.0
      %948 = vmatprep.subr.mxu0 0.0
      %949 = vmatpush2.msra.mxu0 0.0
      %950 = vmatprep.subr.mxu0 0.0
      %951 = vmatpush2.msra.mxu0 0.0
      %952 = vmatprep.subr.mxu0 0.0
      %953 = vmatpush2.msra.mxu0 0.0
      %954 = vmatprep.subr.mxu0 0.0
      %955 = vmatpush2.msra.mxu0 0.0
      %956 = vmatprep.subr.mxu0 0.0
      %957 = vmatpush2.msra.mxu0 0.0
      %958 = vmatprep.subr.mxu0 0.0
      %959 = vmatpush2.msra.mxu0 0.0
      %960 = vmatprep.subr.mxu0 0.0
      %961 = vmatpush2.msra.mxu0 0.0
      %962 = vmatprep.subr.mxu0 0.0
      %963 = vmatpush2.msra.mxu0 0.0
      %964 = vmatprep.subr.mxu0 0.0
      %965 = vmatpush2.msra.mxu0 0.0
      %966 = vmatprep.subr.mxu0 0.0
      %967 = vmatpush2.msra.mxu0 0.0
      %968 = vmatprep.subr.mxu0 0.0
      %969 = vmatpush2.msra.mxu0 0.0
      %970 = vmatprep.subr.mxu0 0.0
      %971 = vmatpush2.msra.mxu0 0.0
      %972 = vmatprep.subr.mxu0 0.0
      %973 = vmatpush2.msra.mxu0 0.0
      %974 = vmatprep.mubr.f32.mxu0 0.0
      %975 = vmatmul.mubr.f32.gmra.mxu0 %v702
      %v976 = vpop.f32.mrf.mxu0
      %v977 = vadd.f32 0.0, %v976
      %v978 = vpop.f32.mrf.mxu0
      %v979 = vadd.f32 0.0, %v978
      %980 = vmatprep.mubr.f32.mxu0 0.0
      %981 = vmatmul.mubr.f32.gmra.mxu0 %v705
      %v982 = vpop.f32.mrf.mxu0
      %v983 = vadd.f32 0.0, %v982
      %v984 = vpop.f32.mrf.mxu0
      %v985 = vadd.f32 0.0, %v984
      %986 = vmatprep.mubr.f32.mxu0 0.0
      %987 = vmatmul.mubr.f32.gmra.mxu0 %v708
      %v988 = vpop.f32.mrf.mxu0
      %v989 = vadd.f32 0.0, %v988
      %v990 = vpop.f32.mrf.mxu0
      %v991 = vadd.f32 0.0, %v990
      %992 = vmatprep.mubr.f32.mxu0 0.0
      %993 = vmatmul.mubr.f32.gmra.mxu0 %v711
      %v994 = vpop.f32.mrf.mxu0
      %v995 = vadd.f32 0.0, %v994
      %v996 = vpop.f32.mrf.mxu0
      %v997 = vadd.f32 0.0, %v996
      %998 = vmatprep.mubr.f32.mxu0 0.0
      %999 = vmatmul.mubr.f32.gmra.mxu0 %v714
      %v1000 = vpop.f32.mrf.mxu0
      %v1001 = vadd.f32 0.0, %v1000
      %v1002 = vpop.f32.mrf.mxu0
      %v1003 = vadd.f32 0.0, %v1002
      %1004 = vmatprep.mubr.f32.mxu0 0.0
      %1005 = vmatmul.mubr.f32.gmra.mxu0 %v717
      %v1006 = vpop.f32.mrf.mxu0
      %v1007 = vadd.f32 0.0, %v1006
      %v1008 = vpop.f32.mrf.mxu0
      %v1009 = vadd.f32 0.0, %v1008
      %1010 = vmatprep.mubr.f32.mxu0 0.0
      %1011 = vmatmul.mubr.f32.gmra.mxu0 %v720
      %v1012 = vpop.f32.mrf.mxu0
      %v1013 = vadd.f32 0.0, %v1012
      %v1014 = vpop.f32.mrf.mxu0
      %v1015 = vadd.f32 0.0, %v1014
      %1016 = vmatprep.mubr.f32.mxu0 0.0
      %1017 = vmatmul.mubr.f32.gmra.mxu0 %v723
      %v1018 = vpop.f32.mrf.mxu0
      %v1019 = vadd.f32 0.0, %v1018
      %v1020 = vpop.f32.mrf.mxu0
      %v1021 = vadd.f32 0.0, %v1020
      %1022 = vmatprep.mubr.f32.mxu0 0.0
      %1023 = vmatmul.mubr.f32.gmra.mxu0 %v726
      %v1024 = vpop.f32.mrf.mxu0
      %v1025 = vadd.f32 0.0, %v1024
      %v1026 = vpop.f32.mrf.mxu0
      %v1027 = vadd.f32 0.0, %v1026
      %1028 = vmatprep.mubr.f32.mxu0 0.0
      %1029 = vmatmul.mubr.f32.gmra.mxu0 %v729
      %v1030 = vpop.f32.mrf.mxu0
      %v1031 = vadd.f32 0.0, %v1030
      %v1032 = vpop.f32.mrf.mxu0
      %v1033 = vadd.f32 0.0, %v1032
      %1034 = vmatprep.mubr.f32.mxu0 0.0
      %1035 = vmatmul.mubr.f32.gmra.mxu0 %v732
      %v1036 = vpop.f32.mrf.mxu0
      %v1037 = vadd.f32 0.0, %v1036
      %v1038 = vpop.f32.mrf.mxu0
      %v1039 = vadd.f32 0.0, %v1038
      %1040 = vmatprep.mubr.f32.mxu0 0.0
      %1041 = vmatmul.mubr.f32.gmra.mxu0 %v735
      %v1042 = vpop.f32.mrf.mxu0
      %v1043 = vadd.f32 0.0, %v1042
      %v1044 = vpop.f32.mrf.mxu0
      %v1045 = vadd.f32 0.0, %v1044
      %1046 = vmatprep.mubr.f32.mxu0 0.0
      %1047 = vmatmul.mubr.f32.gmra.mxu0 %v738
      %v1048 = vpop.f32.mrf.mxu0
      %v1049 = vadd.f32 0.0, %v1048
      %v1050 = vpop.f32.mrf.mxu0
      %v1051 = vadd.f32 0.0, %v1050
      %1052 = vmatprep.mubr.f32.mxu0 0.0
      %1053 = vmatmul.mubr.f32.gmra.mxu0 %v741
      %v1054 = vpop.f32.mrf.mxu0
      %v1055 = vadd.f32 0.0, %v1054
      %v1056 = vpop.f32.mrf.mxu0
      %v1057 = vadd.f32 0.0, %v1056
      %1058 = vmatprep.mubr.f32.mxu0 0.0
      %1059 = vmatmul.mubr.f32.gmra.mxu0 %v744
      %v1060 = vpop.f32.mrf.mxu0
      %v1061 = vadd.f32 0.0, %v1060
      %v1062 = vpop.f32.mrf.mxu0
      %v1063 = vadd.f32 0.0, %v1062
      %1064 = vmatprep.mubr.f32.mxu0 0.0
      %1065 = vmatmul.mubr.f32.gmra.mxu0 %v747
      %v1066 = vpop.f32.mrf.mxu0
      %v1067 = vadd.f32 0.0, %v1066
      %v1068 = vpop.f32.mrf.mxu0
      %v1069 = vadd.f32 0.0, %v1068
      %1070 = vdwg.mxu0
      %v1071 = vmul.f32 %v816, %v620
      %v1072 = vmul.f32 %v818, %v621
      %v1073 = vmul.f32 %v977, %v622
      %v1074 = vmul.f32 %v979, %v623
      %v1075 = vmul.f32 %v822, %v624
      %v1076 = vmul.f32 %v824, %v625
      %v1077 = vmul.f32 %v983, %v626
      %v1078 = vmul.f32 %v985, %v627
      %v1079 = vmul.f32 %v828, %v628
      %v1080 = vmul.f32 %v830, %v629
      %v1081 = vmul.f32 %v989, %v630
      %v1082 = vmul.f32 %v991, %v631
      %v1083 = vmul.f32 %v834, %v632
      %v1084 = vmul.f32 %v836, %v633
      %v1085 = vmul.f32 %v995, %v634
      %v1086 = vmul.f32 %v997, %v635
      %v1087 = vmul.f32 %v840, %v636
      %v1088 = vmul.f32 %v842, %v637
      %v1089 = vmul.f32 %v1001, %v638
      %v1090 = vmul.f32 %v1003, %v639
      %v1091 = vmul.f32 %v846, %v640
      %v1092 = vmul.f32 %v848, %v641
      %v1093 = vmul.f32 %v1007, %v642
      %v1094 = vmul.f32 %v1009, %v643
      %v1095 = vmul.f32 %v852, %v644
      %v1096 = vmul.f32 %v854, %v645
      %v1097 = vmul.f32 %v1013, %v646
      %v1098 = vmul.f32 %v1015, %v647
      %v1099 = vmul.f32 %v858, %v648
      %v1100 = vmul.f32 %v860, %v649
      %v1101 = vmul.f32 %v1019, %v650
      %v1102 = vmul.f32 %v1021, %v651
      %v1103 = vmul.f32 %v864, %v652
      %v1104 = vmul.f32 %v866, %v653
      %v1105 = vmul.f32 %v1025, %v654
      %v1106 = vmul.f32 %v1027, %v655
      %v1107 = vmul.f32 %v870, %v656
      %v1108 = vmul.f32 %v872, %v657
      %v1109 = vmul.f32 %v1031, %v658
      %v1110 = vmul.f32 %v1033, %v659
      %v1111 = vmul.f32 %v876, %v660
      %v1112 = vmul.f32 %v878, %v661
      %v1113 = vmul.f32 %v1037, %v662
      %v1114 = vmul.f32 %v1039, %v663
      %v1115 = vmul.f32 %v882, %v664
      %v1116 = vmul.f32 %v884, %v665
      %v1117 = vmul.f32 %v1043, %v666
      %v1118 = vmul.f32 %v1045, %v667
      %v1119 = vmul.f32 %v888, %v668
      %v1120 = vmul.f32 %v890, %v669
      %v1121 = vmul.f32 %v1049, %v670
      %v1122 = vmul.f32 %v1051, %v671
      %v1123 = vmul.f32 %v894, %v672
      %v1124 = vmul.f32 %v896, %v673
      %v1125 = vmul.f32 %v1055, %v674
      %v1126 = vmul.f32 %v1057, %v675
      %v1127 = vmul.f32 %v900, %v676
      %v1128 = vmul.f32 %v902, %v677
      %v1129 = vmul.f32 %v1061, %v678
      %v1130 = vmul.f32 %v1063, %v679
      %v1131 = vmul.f32 %v906, %v680
      %v1132 = vmul.f32 %v908, %v681
      %v1133 = vmul.f32 %v1067, %v682
      %v1134 = vmul.f32 %v1069, %v683
      %v1135 = vadd.f32 %v1071, 0.0
      %v1136 = vadd.f32 %v1072, 0.0
      %v1137 = vadd.f32 %v1073, 0.0
      %v1138 = vadd.f32 %v1074, 0.0
      %v1139 = vadd.f32 %v1135, %v1075
      %v1140 = vadd.f32 %v1136, %v1076
      %v1141 = vadd.f32 %v1137, %v1077
      %v1142 = vadd.f32 %v1138, %v1078
      %v1143 = vadd.f32 %v1139, %v1079
      %v1144 = vadd.f32 %v1140, %v1080
      %v1145 = vadd.f32 %v1141, %v1081
      %v1146 = vadd.f32 %v1142, %v1082
      %v1147 = vadd.f32 %v1143, %v1083
      %v1148 = vadd.f32 %v1144, %v1084
      %v1149 = vadd.f32 %v1145, %v1085
      %v1150 = vadd.f32 %v1146, %v1086
      %v1151 = vadd.f32 %v1147, %v1087
      %v1152 = vadd.f32 %v1148, %v1088
      %v1153 = vadd.f32 %v1149, %v1089
      %v1154 = vadd.f32 %v1150, %v1090
      %v1155 = vadd.f32 %v1151, %v1091
      %v1156 = vadd.f32 %v1152, %v1092
      %v1157 = vadd.f32 %v1153, %v1093
      %v1158 = vadd.f32 %v1154, %v1094
      %v1159 = vadd.f32 %v1155, %v1095
      %v1160 = vadd.f32 %v1156, %v1096
      %v1161 = vadd.f32 %v1157, %v1097
      %v1162 = vadd.f32 %v1158, %v1098
      %v1163 = vadd.f32 %v1159, %v1099
      %v1164 = vadd.f32 %v1160, %v1100
      %v1165 = vadd.f32 %v1161, %v1101
      %v1166 = vadd.f32 %v1162, %v1102
      %v1167 = vadd.f32 %v1163, %v1103
      %v1168 = vadd.f32 %v1164, %v1104
      %v1169 = vadd.f32 %v1165, %v1105
      %v1170 = vadd.f32 %v1166, %v1106
      %v1171 = vadd.f32 %v1167, %v1107
      %v1172 = vadd.f32 %v1168, %v1108
      %v1173 = vadd.f32 %v1169, %v1109
      %v1174 = vadd.f32 %v1170, %v1110
      %v1175 = vadd.f32 %v1171, %v1111
      %v1176 = vadd.f32 %v1172, %v1112
      %v1177 = vadd.f32 %v1173, %v1113
      %v1178 = vadd.f32 %v1174, %v1114
      %v1179 = vadd.f32 %v1175, %v1115
      %v1180 = vadd.f32 %v1176, %v1116
      %v1181 = vadd.f32 %v1177, %v1117
      %v1182 = vadd.f32 %v1178, %v1118
      %v1183 = vadd.f32 %v1179, %v1119
      %v1184 = vadd.f32 %v1180, %v1120
      %v1185 = vadd.f32 %v1181, %v1121
      %v1186 = vadd.f32 %v1182, %v1122
      %v1187 = vadd.f32 %v1183, %v1123
      %v1188 = vadd.f32 %v1184, %v1124
      %v1189 = vadd.f32 %v1185, %v1125
      %v1190 = vadd.f32 %v1186, %v1126
      %v1191 = vadd.f32 %v1187, %v1127
      %v1192 = vadd.f32 %v1188, %v1128
      %v1193 = vadd.f32 %v1189, %v1129
      %v1194 = vadd.f32 %v1190, %v1130
      %v1195 = vadd.f32 %v1191, %v1131
      %v1196 = vadd.f32 %v1192, %v1132
      %v1197 = vadd.f32 %v1193, %v1133
      %v1198 = vadd.f32 %v1194, %v1134
      %s1199 = scalar_lea.vmem %s278, 2
      %v1200 = vld [vmem:[%s1199] ss:$8 sm:$0xf]
      %s1201 = scalar_lea.vmem %s278, 3
      %v1202 = vld [vmem:[%s1201] ss:$8 sm:$0xf]
      %v1204 = vlaneseq
      %v1205 = vshrl.u32 %v1204, 7
      %v1206 = vsub.s32 0, %v1205
      %v1207 = vrot.slane %v1202, %v1206
      %v1208 = vlaneseq
      %v1209 = vshrl.u32 %v1208, 7
      %v1210 = vsub.s32 1, %v1209
      %v1211 = vrot.slane %v1202, %v1210
      %v1212 = vlaneseq
      %v1213 = vshrl.u32 %v1212, 7
      %v1214 = vsub.s32 2, %v1213
      %v1215 = vrot.slane %v1202, %v1214
      %v1216 = vlaneseq
      %v1217 = vshrl.u32 %v1216, 7
      %v1218 = vsub.s32 3, %v1217
      %v1219 = vrot.slane %v1202, %v1218
      %v1224 = vsub.f32 %v289, %v1207
      %v1225 = vsub.f32 %v289, %v1211
      %v1226 = vsub.f32 %v289, %v1215
      %v1227 = vsub.f32 %v289, %v1219
      %v1228 = vsub.f32 %v290, %v1207
      %v1229 = vsub.f32 %v290, %v1211
      %v1230 = vsub.f32 %v290, %v1215
      %v1231 = vsub.f32 %v290, %v1219
      %v1232 = vand.u32 2147483647, %v1224
      %v1233 = vand.u32 2147483647, %v1225
      %v1234 = vand.u32 2147483647, %v1226
      %v1235 = vand.u32 2147483647, %v1227
      %v1236 = vand.u32 2147483647, %v1228
      %v1237 = vand.u32 2147483647, %v1229
      %v1238 = vand.u32 2147483647, %v1230
      %v1239 = vand.u32 2147483647, %v1231
      %v1240 = vsub.f32 1.0, %v1232
      %v1241 = vsub.f32 1.0, %v1233
      %v1242 = vsub.f32 1.0, %v1234
      %v1243 = vsub.f32 1.0, %v1235
      %v1244 = vsub.f32 1.0, %v1236
      %v1245 = vsub.f32 1.0, %v1237
      %v1246 = vsub.f32 1.0, %v1238
      %v1247 = vsub.f32 1.0, %v1239
      %v1248 = vmax.f32 %v1240, 0.0
      %v1249 = vmax.f32 %v1241, 0.0
      %v1250 = vmax.f32 %v1242, 0.0
      %v1251 = vmax.f32 %v1243, 0.0
      %v1252 = vmax.f32 %v1244, 0.0
      %v1253 = vmax.f32 %v1245, 0.0
      %v1254 = vmax.f32 %v1246, 0.0
      %v1255 = vmax.f32 %v1247, 0.0
      %v1257 = vlaneseq
      %v1258 = vshrl.u32 %v1257, 7
      %v1259 = vsub.s32 0, %v1258
      %v1260 = vrot.slane %v1200, %v1259
      %v1261 = vlaneseq
      %v1262 = vshrl.u32 %v1261, 7
      %v1263 = vsub.s32 1, %v1262
      %v1264 = vrot.slane %v1200, %v1263
      %v1265 = vlaneseq
      %v1266 = vshrl.u32 %v1265, 7
      %v1267 = vsub.s32 2, %v1266
      %v1268 = vrot.slane %v1200, %v1267
      %v1269 = vlaneseq
      %v1270 = vshrl.u32 %v1269, 7
      %v1271 = vsub.s32 3, %v1270
      %v1272 = vrot.slane %v1200, %v1271
      %v1277 = vsub.f32 %v335, %v1260
      %v1278 = vsub.f32 %v335, %v1264
      %v1279 = vsub.f32 %v335, %v1268
      %v1280 = vsub.f32 %v335, %v1272
      %v1281 = vsub.f32 %v336, %v1260
      %v1282 = vsub.f32 %v336, %v1264
      %v1283 = vsub.f32 %v336, %v1268
      %v1284 = vsub.f32 %v336, %v1272
      %v1285 = vsub.f32 %v337, %v1260
      %v1286 = vsub.f32 %v337, %v1264
      %v1287 = vsub.f32 %v337, %v1268
      %v1288 = vsub.f32 %v337, %v1272
      %v1289 = vsub.f32 %v338, %v1260
      %v1290 = vsub.f32 %v338, %v1264
      %v1291 = vsub.f32 %v338, %v1268
      %v1292 = vsub.f32 %v338, %v1272
      %v1293 = vsub.f32 %v339, %v1260
      %v1294 = vsub.f32 %v339, %v1264
      %v1295 = vsub.f32 %v339, %v1268
      %v1296 = vsub.f32 %v339, %v1272
      %v1297 = vsub.f32 %v340, %v1260
      %v1298 = vsub.f32 %v340, %v1264
      %v1299 = vsub.f32 %v340, %v1268
      %v1300 = vsub.f32 %v340, %v1272
      %v1301 = vsub.f32 %v341, %v1260
      %v1302 = vsub.f32 %v341, %v1264
      %v1303 = vsub.f32 %v341, %v1268
      %v1304 = vsub.f32 %v341, %v1272
      %v1305 = vsub.f32 %v342, %v1260
      %v1306 = vsub.f32 %v342, %v1264
      %v1307 = vsub.f32 %v342, %v1268
      %v1308 = vsub.f32 %v342, %v1272
      %v1309 = vsub.f32 %v343, %v1260
      %v1310 = vsub.f32 %v343, %v1264
      %v1311 = vsub.f32 %v343, %v1268
      %v1312 = vsub.f32 %v343, %v1272
      %v1313 = vsub.f32 %v344, %v1260
      %v1314 = vsub.f32 %v344, %v1264
      %v1315 = vsub.f32 %v344, %v1268
      %v1316 = vsub.f32 %v344, %v1272
      %v1317 = vsub.f32 %v345, %v1260
      %v1318 = vsub.f32 %v345, %v1264
      %v1319 = vsub.f32 %v345, %v1268
      %v1320 = vsub.f32 %v345, %v1272
      %v1321 = vsub.f32 %v346, %v1260
      %v1322 = vsub.f32 %v346, %v1264
      %v1323 = vsub.f32 %v346, %v1268
      %v1324 = vsub.f32 %v346, %v1272
      %v1325 = vsub.f32 %v347, %v1260
      %v1326 = vsub.f32 %v347, %v1264
      %v1327 = vsub.f32 %v347, %v1268
      %v1328 = vsub.f32 %v347, %v1272
      %v1329 = vsub.f32 %v348, %v1260
      %v1330 = vsub.f32 %v348, %v1264
      %v1331 = vsub.f32 %v348, %v1268
      %v1332 = vsub.f32 %v348, %v1272
      %v1333 = vsub.f32 %v349, %v1260
      %v1334 = vsub.f32 %v349, %v1264
      %v1335 = vsub.f32 %v349, %v1268
      %v1336 = vsub.f32 %v349, %v1272
      %v1337 = vsub.f32 %v350, %v1260
      %v1338 = vsub.f32 %v350, %v1264
      %v1339 = vsub.f32 %v350, %v1268
      %v1340 = vsub.f32 %v350, %v1272
      %v1341 = vand.u32 2147483647, %v1277
      %v1342 = vand.u32 2147483647, %v1278
      %v1343 = vand.u32 2147483647, %v1279
      %v1344 = vand.u32 2147483647, %v1280
      %v1345 = vand.u32 2147483647, %v1281
      %v1346 = vand.u32 2147483647, %v1282
      %v1347 = vand.u32 2147483647, %v1283
      %v1348 = vand.u32 2147483647, %v1284
      %v1349 = vand.u32 2147483647, %v1285
      %v1350 = vand.u32 2147483647, %v1286
      %v1351 = vand.u32 2147483647, %v1287
      %v1352 = vand.u32 2147483647, %v1288
      %v1353 = vand.u32 2147483647, %v1289
      %v1354 = vand.u32 2147483647, %v1290
      %v1355 = vand.u32 2147483647, %v1291
      %v1356 = vand.u32 2147483647, %v1292
      %v1357 = vand.u32 2147483647, %v1293
      %v1358 = vand.u32 2147483647, %v1294
      %v1359 = vand.u32 2147483647, %v1295
      %v1360 = vand.u32 2147483647, %v1296
      %v1361 = vand.u32 2147483647, %v1297
      %v1362 = vand.u32 2147483647, %v1298
      %v1363 = vand.u32 2147483647, %v1299
      %v1364 = vand.u32 2147483647, %v1300
      %v1365 = vand.u32 2147483647, %v1301
      %v1366 = vand.u32 2147483647, %v1302
      %v1367 = vand.u32 2147483647, %v1303
      %v1368 = vand.u32 2147483647, %v1304
      %v1369 = vand.u32 2147483647, %v1305
      %v1370 = vand.u32 2147483647, %v1306
      %v1371 = vand.u32 2147483647, %v1307
      %v1372 = vand.u32 2147483647, %v1308
      %v1373 = vand.u32 2147483647, %v1309
      %v1374 = vand.u32 2147483647, %v1310
      %v1375 = vand.u32 2147483647, %v1311
      %v1376 = vand.u32 2147483647, %v1312
      %v1377 = vand.u32 2147483647, %v1313
      %v1378 = vand.u32 2147483647, %v1314
      %v1379 = vand.u32 2147483647, %v1315
      %v1380 = vand.u32 2147483647, %v1316
      %v1381 = vand.u32 2147483647, %v1317
      %v1382 = vand.u32 2147483647, %v1318
      %v1383 = vand.u32 2147483647, %v1319
      %v1384 = vand.u32 2147483647, %v1320
      %v1385 = vand.u32 2147483647, %v1321
      %v1386 = vand.u32 2147483647, %v1322
      %v1387 = vand.u32 2147483647, %v1323
      %v1388 = vand.u32 2147483647, %v1324
      %v1389 = vand.u32 2147483647, %v1325
      %v1390 = vand.u32 2147483647, %v1326
      %v1391 = vand.u32 2147483647, %v1327
      %v1392 = vand.u32 2147483647, %v1328
      %v1393 = vand.u32 2147483647, %v1329
      %v1394 = vand.u32 2147483647, %v1330
      %v1395 = vand.u32 2147483647, %v1331
      %v1396 = vand.u32 2147483647, %v1332
      %v1397 = vand.u32 2147483647, %v1333
      %v1398 = vand.u32 2147483647, %v1334
      %v1399 = vand.u32 2147483647, %v1335
      %v1400 = vand.u32 2147483647, %v1336
      %v1401 = vand.u32 2147483647, %v1337
      %v1402 = vand.u32 2147483647, %v1338
      %v1403 = vand.u32 2147483647, %v1339
      %v1404 = vand.u32 2147483647, %v1340
      %v1405 = vsub.f32 1.0, %v1341
      %v1406 = vsub.f32 1.0, %v1342
      %v1407 = vsub.f32 1.0, %v1343
      %v1408 = vsub.f32 1.0, %v1344
      %v1409 = vsub.f32 1.0, %v1345
      %v1410 = vsub.f32 1.0, %v1346
      %v1411 = vsub.f32 1.0, %v1347
      %v1412 = vsub.f32 1.0, %v1348
      %v1413 = vsub.f32 1.0, %v1349
      %v1414 = vsub.f32 1.0, %v1350
      %v1415 = vsub.f32 1.0, %v1351
      %v1416 = vsub.f32 1.0, %v1352
      %v1417 = vsub.f32 1.0, %v1353
      %v1418 = vsub.f32 1.0, %v1354
      %v1419 = vsub.f32 1.0, %v1355
      %v1420 = vsub.f32 1.0, %v1356
      %v1421 = vsub.f32 1.0, %v1357
      %v1422 = vsub.f32 1.0, %v1358
      %v1423 = vsub.f32 1.0, %v1359
      %v1424 = vsub.f32 1.0, %v1360
      %v1425 = vsub.f32 1.0, %v1361
      %v1426 = vsub.f32 1.0, %v1362
      %v1427 = vsub.f32 1.0, %v1363
      %v1428 = vsub.f32 1.0, %v1364
      %v1429 = vsub.f32 1.0, %v1365
      %v1430 = vsub.f32 1.0, %v1366
      %v1431 = vsub.f32 1.0, %v1367
      %v1432 = vsub.f32 1.0, %v1368
      %v1433 = vsub.f32 1.0, %v1369
      %v1434 = vsub.f32 1.0, %v1370
      %v1435 = vsub.f32 1.0, %v1371
      %v1436 = vsub.f32 1.0, %v1372
      %v1437 = vsub.f32 1.0, %v1373
      %v1438 = vsub.f32 1.0, %v1374
      %v1439 = vsub.f32 1.0, %v1375
      %v1440 = vsub.f32 1.0, %v1376
      %v1441 = vsub.f32 1.0, %v1377
      %v1442 = vsub.f32 1.0, %v1378
      %v1443 = vsub.f32 1.0, %v1379
      %v1444 = vsub.f32 1.0, %v1380
      %v1445 = vsub.f32 1.0, %v1381
      %v1446 = vsub.f32 1.0, %v1382
      %v1447 = vsub.f32 1.0, %v1383
      %v1448 = vsub.f32 1.0, %v1384
      %v1449 = vsub.f32 1.0, %v1385
      %v1450 = vsub.f32 1.0, %v1386
      %v1451 = vsub.f32 1.0, %v1387
      %v1452 = vsub.f32 1.0, %v1388
      %v1453 = vsub.f32 1.0, %v1389
      %v1454 = vsub.f32 1.0, %v1390
      %v1455 = vsub.f32 1.0, %v1391
      %v1456 = vsub.f32 1.0, %v1392
      %v1457 = vsub.f32 1.0, %v1393
      %v1458 = vsub.f32 1.0, %v1394
      %v1459 = vsub.f32 1.0, %v1395
      %v1460 = vsub.f32 1.0, %v1396
      %v1461 = vsub.f32 1.0, %v1397
      %v1462 = vsub.f32 1.0, %v1398
      %v1463 = vsub.f32 1.0, %v1399
      %v1464 = vsub.f32 1.0, %v1400
      %v1465 = vsub.f32 1.0, %v1401
      %v1466 = vsub.f32 1.0, %v1402
      %v1467 = vsub.f32 1.0, %v1403
      %v1468 = vsub.f32 1.0, %v1404
      %v1469 = vmax.f32 %v1405, 0.0
      %v1470 = vmax.f32 %v1406, 0.0
      %v1471 = vmax.f32 %v1407, 0.0
      %v1472 = vmax.f32 %v1408, 0.0
      %v1473 = vmax.f32 %v1409, 0.0
      %v1474 = vmax.f32 %v1410, 0.0
      %v1475 = vmax.f32 %v1411, 0.0
      %v1476 = vmax.f32 %v1412, 0.0
      %v1477 = vmax.f32 %v1413, 0.0
      %v1478 = vmax.f32 %v1414, 0.0
      %v1479 = vmax.f32 %v1415, 0.0
      %v1480 = vmax.f32 %v1416, 0.0
      %v1481 = vmax.f32 %v1417, 0.0
      %v1482 = vmax.f32 %v1418, 0.0
      %v1483 = vmax.f32 %v1419, 0.0
      %v1484 = vmax.f32 %v1420, 0.0
      %v1485 = vmax.f32 %v1421, 0.0
      %v1486 = vmax.f32 %v1422, 0.0
      %v1487 = vmax.f32 %v1423, 0.0
      %v1488 = vmax.f32 %v1424, 0.0
      %v1489 = vmax.f32 %v1425, 0.0
      %v1490 = vmax.f32 %v1426, 0.0
      %v1491 = vmax.f32 %v1427, 0.0
      %v1492 = vmax.f32 %v1428, 0.0
      %v1493 = vmax.f32 %v1429, 0.0
      %v1494 = vmax.f32 %v1430, 0.0
      %v1495 = vmax.f32 %v1431, 0.0
      %v1496 = vmax.f32 %v1432, 0.0
      %v1497 = vmax.f32 %v1433, 0.0
      %v1498 = vmax.f32 %v1434, 0.0
      %v1499 = vmax.f32 %v1435, 0.0
      %v1500 = vmax.f32 %v1436, 0.0
      %v1501 = vmax.f32 %v1437, 0.0
      %v1502 = vmax.f32 %v1438, 0.0
      %v1503 = vmax.f32 %v1439, 0.0
      %v1504 = vmax.f32 %v1440, 0.0
      %v1505 = vmax.f32 %v1441, 0.0
      %v1506 = vmax.f32 %v1442, 0.0
      %v1507 = vmax.f32 %v1443, 0.0
      %v1508 = vmax.f32 %v1444, 0.0
      %v1509 = vmax.f32 %v1445, 0.0
      %v1510 = vmax.f32 %v1446, 0.0
      %v1511 = vmax.f32 %v1447, 0.0
      %v1512 = vmax.f32 %v1448, 0.0
      %v1513 = vmax.f32 %v1449, 0.0
      %v1514 = vmax.f32 %v1450, 0.0
      %v1515 = vmax.f32 %v1451, 0.0
      %v1516 = vmax.f32 %v1452, 0.0
      %v1517 = vmax.f32 %v1453, 0.0
      %v1518 = vmax.f32 %v1454, 0.0
      %v1519 = vmax.f32 %v1455, 0.0
      %v1520 = vmax.f32 %v1456, 0.0
      %v1521 = vmax.f32 %v1457, 0.0
      %v1522 = vmax.f32 %v1458, 0.0
      %v1523 = vmax.f32 %v1459, 0.0
      %v1524 = vmax.f32 %v1460, 0.0
      %v1525 = vmax.f32 %v1461, 0.0
      %v1526 = vmax.f32 %v1462, 0.0
      %v1527 = vmax.f32 %v1463, 0.0
      %v1528 = vmax.f32 %v1464, 0.0
      %v1529 = vmax.f32 %v1465, 0.0
      %v1530 = vmax.f32 %v1466, 0.0
      %v1531 = vmax.f32 %v1467, 0.0
      %v1532 = vmax.f32 %v1468, 0.0
      %s1533 = scalar_lea.vmem %s1, 128
      %v1534 = vld [vmem:[%s1533] sm:$0xff]
      %v1535 = vld [vmem:[%s1533 + $0x8] sm:$0xff]
      %v1536 = vld [vmem:[%s1533 + $0x10] sm:$0xff]
      %v1537 = vld [vmem:[%s1533 + $0x18] sm:$0xff]
      %v1538 = vld [vmem:[%s1533 + $0x20] sm:$0xff]
      %v1539 = vld [vmem:[%s1533 + $0x28] sm:$0xff]
      %v1540 = vld [vmem:[%s1533 + $0x30] sm:$0xff]
      %v1541 = vld [vmem:[%s1533 + $0x38] sm:$0xff]
      %v1542 = vld [vmem:[%s1533 + $0x40] sm:$0xff]
      %v1543 = vld [vmem:[%s1533 + $0x48] sm:$0xff]
      %v1544 = vld [vmem:[%s1533 + $0x50] sm:$0xff]
      %v1545 = vld [vmem:[%s1533 + $0x58] sm:$0xff]
      %v1546 = vld [vmem:[%s1533 + $0x60] sm:$0xff]
      %v1547 = vld [vmem:[%s1533 + $0x68] sm:$0xff]
      %v1548 = vld [vmem:[%s1533 + $0x70] sm:$0xff]
      %v1549 = vld [vmem:[%s1533 + $0x78] sm:$0xff]
      %v1551 = vsel %vm700, %v1534, 0
      %v1554 = vsel %vm700, %v1535, 0
      %v1557 = vsel %vm700, %v1536, 0
      %v1560 = vsel %vm700, %v1537, 0
      %v1563 = vsel %vm700, %v1538, 0
      %v1566 = vsel %vm700, %v1539, 0
      %v1569 = vsel %vm700, %v1540, 0
      %v1572 = vsel %vm700, %v1541, 0
      %v1575 = vsel %vm700, %v1542, 0
      %v1578 = vsel %vm700, %v1543, 0
      %v1581 = vsel %vm700, %v1544, 0
      %v1584 = vsel %vm700, %v1545, 0
      %v1587 = vsel %vm700, %v1546, 0
      %v1590 = vsel %vm700, %v1547, 0
      %v1593 = vsel %vm700, %v1548, 0
      %v1596 = vsel %vm700, %v1549, 0
      %1598 = vmatprep.subr.mxu0 0.0
      %1599 = vmatpush1.msra.mxu0 0.0
      %1600 = vmatprep.subr.mxu0 0.0
      %1601 = vmatpush1.msra.mxu0 0.0
      %1602 = vmatprep.subr.mxu0 0.0
      %1603 = vmatpush1.msra.mxu0 0.0
      %1604 = vmatprep.subr.mxu0 0.0
      %1605 = vmatpush1.msra.mxu0 0.0
      %1606 = vmatprep.subr.mxu0 0.0
      %1607 = vmatpush1.msra.mxu0 0.0
      %1608 = vmatprep.subr.mxu0 0.0
      %1609 = vmatpush1.msra.mxu0 0.0
      %1610 = vmatprep.subr.mxu0 0.0
      %1611 = vmatpush1.msra.mxu0 0.0
      %1612 = vmatprep.subr.mxu0 0.0
      %1613 = vmatpush1.msra.mxu0 0.0
      %1614 = vmatprep.subr.mxu0 0.0
      %1615 = vmatpush1.msra.mxu0 0.0
      %1616 = vmatprep.subr.mxu0 0.0
      %1617 = vmatpush1.msra.mxu0 0.0
      %1618 = vmatprep.subr.mxu0 0.0
      %1619 = vmatpush1.msra.mxu0 0.0
      %1620 = vmatprep.subr.mxu0 0.0
      %1621 = vmatpush1.msra.mxu0 0.0
      %1622 = vmatprep.subr.mxu0 0.0
      %1623 = vmatpush1.msra.mxu0 0.0
      %1624 = vmatprep.subr.mxu0 0.0
      %1625 = vmatpush1.msra.mxu0 0.0
      %1626 = vmatprep.subr.mxu0 %v1253
      %1627 = vmatpush1.msra.mxu0 %v1252
      %1628 = vmatprep.subr.mxu0 %v1249
      %1629 = vmatpush1.msra.mxu0 %v1248
      %1630 = vmatprep.subr.mxu0 0.0
      %1631 = vmatpush2.msra.mxu0 0.0
      %1632 = vmatprep.subr.mxu0 0.0
      %1633 = vmatpush2.msra.mxu0 0.0
      %1634 = vmatprep.subr.mxu0 0.0
      %1635 = vmatpush2.msra.mxu0 0.0
      %1636 = vmatprep.subr.mxu0 0.0
      %1637 = vmatpush2.msra.mxu0 0.0
      %1638 = vmatprep.subr.mxu0 0.0
      %1639 = vmatpush2.msra.mxu0 0.0
      %1640 = vmatprep.subr.mxu0 0.0
      %1641 = vmatpush2.msra.mxu0 0.0
      %1642 = vmatprep.subr.mxu0 0.0
      %1643 = vmatpush2.msra.mxu0 0.0
      %1644 = vmatprep.subr.mxu0 0.0
      %1645 = vmatpush2.msra.mxu0 0.0
      %1646 = vmatprep.subr.mxu0 0.0
      %1647 = vmatpush2.msra.mxu0 0.0
      %1648 = vmatprep.subr.mxu0 0.0
      %1649 = vmatpush2.msra.mxu0 0.0
      %1650 = vmatprep.subr.mxu0 0.0
      %1651 = vmatpush2.msra.mxu0 0.0
      %1652 = vmatprep.subr.mxu0 0.0
      %1653 = vmatpush2.msra.mxu0 0.0
      %1654 = vmatprep.subr.mxu0 0.0
      %1655 = vmatpush2.msra.mxu0 0.0
      %1656 = vmatprep.subr.mxu0 0.0
      %1657 = vmatpush2.msra.mxu0 0.0
      %1658 = vmatprep.subr.mxu0 0.0
      %1659 = vmatpush2.msra.mxu0 0.0
      %1660 = vmatprep.subr.mxu0 0.0
      %1661 = vmatpush2.msra.mxu0 0.0
      %1662 = vmatprep.mubr.f32.mxu0 0.0
      %1663 = vmatmul.mubr.f32.gmra.mxu0 %v1551
      %v1664 = vpop.f32.mrf.mxu0
      %v1665 = vadd.f32 0.0, %v1664
      %v1666 = vpop.f32.mrf.mxu0
      %v1667 = vadd.f32 0.0, %v1666
      %1668 = vmatprep.mubr.f32.mxu0 0.0
      %1669 = vmatmul.mubr.f32.gmra.mxu0 %v1554
      %v1670 = vpop.f32.mrf.mxu0
      %v1671 = vadd.f32 0.0, %v1670
      %v1672 = vpop.f32.mrf.mxu0
      %v1673 = vadd.f32 0.0, %v1672
      %1674 = vmatprep.mubr.f32.mxu0 0.0
      %1675 = vmatmul.mubr.f32.gmra.mxu0 %v1557
      %v1676 = vpop.f32.mrf.mxu0
      %v1677 = vadd.f32 0.0, %v1676
      %v1678 = vpop.f32.mrf.mxu0
      %v1679 = vadd.f32 0.0, %v1678
      %1680 = vmatprep.mubr.f32.mxu0 0.0
      %1681 = vmatmul.mubr.f32.gmra.mxu0 %v1560
      %v1682 = vpop.f32.mrf.mxu0
      %v1683 = vadd.f32 0.0, %v1682
      %v1684 = vpop.f32.mrf.mxu0
      %v1685 = vadd.f32 0.0, %v1684
      %1686 = vmatprep.mubr.f32.mxu0 0.0
      %1687 = vmatmul.mubr.f32.gmra.mxu0 %v1563
      %v1688 = vpop.f32.mrf.mxu0
      %v1689 = vadd.f32 0.0, %v1688
      %v1690 = vpop.f32.mrf.mxu0
      %v1691 = vadd.f32 0.0, %v1690
      %1692 = vmatprep.mubr.f32.mxu0 0.0
      %1693 = vmatmul.mubr.f32.gmra.mxu0 %v1566
      %v1694 = vpop.f32.mrf.mxu0
      %v1695 = vadd.f32 0.0, %v1694
      %v1696 = vpop.f32.mrf.mxu0
      %v1697 = vadd.f32 0.0, %v1696
      %1698 = vmatprep.mubr.f32.mxu0 0.0
      %1699 = vmatmul.mubr.f32.gmra.mxu0 %v1569
      %v1700 = vpop.f32.mrf.mxu0
      %v1701 = vadd.f32 0.0, %v1700
      %v1702 = vpop.f32.mrf.mxu0
      %v1703 = vadd.f32 0.0, %v1702
      %1704 = vmatprep.mubr.f32.mxu0 0.0
      %1705 = vmatmul.mubr.f32.gmra.mxu0 %v1572
      %v1706 = vpop.f32.mrf.mxu0
      %v1707 = vadd.f32 0.0, %v1706
      %v1708 = vpop.f32.mrf.mxu0
      %v1709 = vadd.f32 0.0, %v1708
      %1710 = vmatprep.mubr.f32.mxu0 0.0
      %1711 = vmatmul.mubr.f32.gmra.mxu0 %v1575
      %v1712 = vpop.f32.mrf.mxu0
      %v1713 = vadd.f32 0.0, %v1712
      %v1714 = vpop.f32.mrf.mxu0
      %v1715 = vadd.f32 0.0, %v1714
      %1716 = vmatprep.mubr.f32.mxu0 0.0
      %1717 = vmatmul.mubr.f32.gmra.mxu0 %v1578
      %v1718 = vpop.f32.mrf.mxu0
      %v1719 = vadd.f32 0.0, %v1718
      %v1720 = vpop.f32.mrf.mxu0
      %v1721 = vadd.f32 0.0, %v1720
      %1722 = vmatprep.mubr.f32.mxu0 0.0
      %1723 = vmatmul.mubr.f32.gmra.mxu0 %v1581
      %v1724 = vpop.f32.mrf.mxu0
      %v1725 = vadd.f32 0.0, %v1724
      %v1726 = vpop.f32.mrf.mxu0
      %v1727 = vadd.f32 0.0, %v1726
      %1728 = vmatprep.mubr.f32.mxu0 0.0
      %1729 = vmatmul.mubr.f32.gmra.mxu0 %v1584
      %v1730 = vpop.f32.mrf.mxu0
      %v1731 = vadd.f32 0.0, %v1730
      %v1732 = vpop.f32.mrf.mxu0
      %v1733 = vadd.f32 0.0, %v1732
      %1734 = vmatprep.mubr.f32.mxu0 0.0
      %1735 = vmatmul.mubr.f32.gmra.mxu0 %v1587
      %v1736 = vpop.f32.mrf.mxu0
      %v1737 = vadd.f32 0.0, %v1736
      %v1738 = vpop.f32.mrf.mxu0
      %v1739 = vadd.f32 0.0, %v1738
      %1740 = vmatprep.mubr.f32.mxu0 0.0
      %1741 = vmatmul.mubr.f32.gmra.mxu0 %v1590
      %v1742 = vpop.f32.mrf.mxu0
      %v1743 = vadd.f32 0.0, %v1742
      %v1744 = vpop.f32.mrf.mxu0
      %v1745 = vadd.f32 0.0, %v1744
      %1746 = vmatprep.mubr.f32.mxu0 0.0
      %1747 = vmatmul.mubr.f32.gmra.mxu0 %v1593
      %v1748 = vpop.f32.mrf.mxu0
      %v1749 = vadd.f32 0.0, %v1748
      %v1750 = vpop.f32.mrf.mxu0
      %v1751 = vadd.f32 0.0, %v1750
      %1752 = vmatprep.mubr.f32.mxu0 0.0
      %1753 = vmatmul.mubr.f32.gmra.mxu0 %v1596
      %v1754 = vpop.f32.mrf.mxu0
      %v1755 = vadd.f32 0.0, %v1754
      %v1756 = vpop.f32.mrf.mxu0
      %v1757 = vadd.f32 0.0, %v1756
      %1758 = vdwg.mxu0
      %1759 = vmatprep.subr.mxu0 0.0
      %1760 = vmatpush1.msra.mxu0 0.0
      %1761 = vmatprep.subr.mxu0 0.0
      %1762 = vmatpush1.msra.mxu0 0.0
      %1763 = vmatprep.subr.mxu0 0.0
      %1764 = vmatpush1.msra.mxu0 0.0
      %1765 = vmatprep.subr.mxu0 0.0
      %1766 = vmatpush1.msra.mxu0 0.0
      %1767 = vmatprep.subr.mxu0 0.0
      %1768 = vmatpush1.msra.mxu0 0.0
      %1769 = vmatprep.subr.mxu0 0.0
      %1770 = vmatpush1.msra.mxu0 0.0
      %1771 = vmatprep.subr.mxu0 0.0
      %1772 = vmatpush1.msra.mxu0 0.0
      %1773 = vmatprep.subr.mxu0 0.0
      %1774 = vmatpush1.msra.mxu0 0.0
      %1775 = vmatprep.subr.mxu0 0.0
      %1776 = vmatpush1.msra.mxu0 0.0
      %1777 = vmatprep.subr.mxu0 0.0
      %1778 = vmatpush1.msra.mxu0 0.0
      %1779 = vmatprep.subr.mxu0 0.0
      %1780 = vmatpush1.msra.mxu0 0.0
      %1781 = vmatprep.subr.mxu0 0.0
      %1782 = vmatpush1.msra.mxu0 0.0
      %1783 = vmatprep.subr.mxu0 0.0
      %1784 = vmatpush1.msra.mxu0 0.0
      %1785 = vmatprep.subr.mxu0 0.0
      %1786 = vmatpush1.msra.mxu0 0.0
      %1787 = vmatprep.subr.mxu0 %v1255
      %1788 = vmatpush1.msra.mxu0 %v1254
      %1789 = vmatprep.subr.mxu0 %v1251
      %1790 = vmatpush1.msra.mxu0 %v1250
      %1791 = vmatprep.subr.mxu0 0.0
      %1792 = vmatpush2.msra.mxu0 0.0
      %1793 = vmatprep.subr.mxu0 0.0
      %1794 = vmatpush2.msra.mxu0 0.0
      %1795 = vmatprep.subr.mxu0 0.0
      %1796 = vmatpush2.msra.mxu0 0.0
      %1797 = vmatprep.subr.mxu0 0.0
      %1798 = vmatpush2.msra.mxu0 0.0
      %1799 = vmatprep.subr.mxu0 0.0
      %1800 = vmatpush2.msra.mxu0 0.0
      %1801 = vmatprep.subr.mxu0 0.0
      %1802 = vmatpush2.msra.mxu0 0.0
      %1803 = vmatprep.subr.mxu0 0.0
      %1804 = vmatpush2.msra.mxu0 0.0
      %1805 = vmatprep.subr.mxu0 0.0
      %1806 = vmatpush2.msra.mxu0 0.0
      %1807 = vmatprep.subr.mxu0 0.0
      %1808 = vmatpush2.msra.mxu0 0.0
      %1809 = vmatprep.subr.mxu0 0.0
      %1810 = vmatpush2.msra.mxu0 0.0
      %1811 = vmatprep.subr.mxu0 0.0
      %1812 = vmatpush2.msra.mxu0 0.0
      %1813 = vmatprep.subr.mxu0 0.0
      %1814 = vmatpush2.msra.mxu0 0.0
      %1815 = vmatprep.subr.mxu0 0.0
      %1816 = vmatpush2.msra.mxu0 0.0
      %1817 = vmatprep.subr.mxu0 0.0
      %1818 = vmatpush2.msra.mxu0 0.0
      %1819 = vmatprep.subr.mxu0 0.0
      %1820 = vmatpush2.msra.mxu0 0.0
      %1821 = vmatprep.subr.mxu0 0.0
      %1822 = vmatpush2.msra.mxu0 0.0
      %1823 = vmatprep.mubr.f32.mxu0 0.0
      %1824 = vmatmul.mubr.f32.gmra.mxu0 %v1551
      %v1825 = vpop.f32.mrf.mxu0
      %v1826 = vadd.f32 0.0, %v1825
      %v1827 = vpop.f32.mrf.mxu0
      %v1828 = vadd.f32 0.0, %v1827
      %1829 = vmatprep.mubr.f32.mxu0 0.0
      %1830 = vmatmul.mubr.f32.gmra.mxu0 %v1554
      %v1831 = vpop.f32.mrf.mxu0
      %v1832 = vadd.f32 0.0, %v1831
      %v1833 = vpop.f32.mrf.mxu0
      %v1834 = vadd.f32 0.0, %v1833
      %1835 = vmatprep.mubr.f32.mxu0 0.0
      %1836 = vmatmul.mubr.f32.gmra.mxu0 %v1557
      %v1837 = vpop.f32.mrf.mxu0
      %v1838 = vadd.f32 0.0, %v1837
      %v1839 = vpop.f32.mrf.mxu0
      %v1840 = vadd.f32 0.0, %v1839
      %1841 = vmatprep.mubr.f32.mxu0 0.0
      %1842 = vmatmul.mubr.f32.gmra.mxu0 %v1560
      %v1843 = vpop.f32.mrf.mxu0
      %v1844 = vadd.f32 0.0, %v1843
      %v1845 = vpop.f32.mrf.mxu0
      %v1846 = vadd.f32 0.0, %v1845
      %1847 = vmatprep.mubr.f32.mxu0 0.0
      %1848 = vmatmul.mubr.f32.gmra.mxu0 %v1563
      %v1849 = vpop.f32.mrf.mxu0
      %v1850 = vadd.f32 0.0, %v1849
      %v1851 = vpop.f32.mrf.mxu0
      %v1852 = vadd.f32 0.0, %v1851
      %1853 = vmatprep.mubr.f32.mxu0 0.0
      %1854 = vmatmul.mubr.f32.gmra.mxu0 %v1566
      %v1855 = vpop.f32.mrf.mxu0
      %v1856 = vadd.f32 0.0, %v1855
      %v1857 = vpop.f32.mrf.mxu0
      %v1858 = vadd.f32 0.0, %v1857
      %1859 = vmatprep.mubr.f32.mxu0 0.0
      %1860 = vmatmul.mubr.f32.gmra.mxu0 %v1569
      %v1861 = vpop.f32.mrf.mxu0
      %v1862 = vadd.f32 0.0, %v1861
      %v1863 = vpop.f32.mrf.mxu0
      %v1864 = vadd.f32 0.0, %v1863
      %1865 = vmatprep.mubr.f32.mxu0 0.0
      %1866 = vmatmul.mubr.f32.gmra.mxu0 %v1572
      %v1867 = vpop.f32.mrf.mxu0
      %v1868 = vadd.f32 0.0, %v1867
      %v1869 = vpop.f32.mrf.mxu0
      %v1870 = vadd.f32 0.0, %v1869
      %1871 = vmatprep.mubr.f32.mxu0 0.0
      %1872 = vmatmul.mubr.f32.gmra.mxu0 %v1575
      %v1873 = vpop.f32.mrf.mxu0
      %v1874 = vadd.f32 0.0, %v1873
      %v1875 = vpop.f32.mrf.mxu0
      %v1876 = vadd.f32 0.0, %v1875
      %1877 = vmatprep.mubr.f32.mxu0 0.0
      %1878 = vmatmul.mubr.f32.gmra.mxu0 %v1578
      %v1879 = vpop.f32.mrf.mxu0
      %v1880 = vadd.f32 0.0, %v1879
      %v1881 = vpop.f32.mrf.mxu0
      %v1882 = vadd.f32 0.0, %v1881
      %1883 = vmatprep.mubr.f32.mxu0 0.0
      %1884 = vmatmul.mubr.f32.gmra.mxu0 %v1581
      %v1885 = vpop.f32.mrf.mxu0
      %v1886 = vadd.f32 0.0, %v1885
      %v1887 = vpop.f32.mrf.mxu0
      %v1888 = vadd.f32 0.0, %v1887
      %1889 = vmatprep.mubr.f32.mxu0 0.0
      %1890 = vmatmul.mubr.f32.gmra.mxu0 %v1584
      %v1891 = vpop.f32.mrf.mxu0
      %v1892 = vadd.f32 0.0, %v1891
      %v1893 = vpop.f32.mrf.mxu0
      %v1894 = vadd.f32 0.0, %v1893
      %1895 = vmatprep.mubr.f32.mxu0 0.0
      %1896 = vmatmul.mubr.f32.gmra.mxu0 %v1587
      %v1897 = vpop.f32.mrf.mxu0
      %v1898 = vadd.f32 0.0, %v1897
      %v1899 = vpop.f32.mrf.mxu0
      %v1900 = vadd.f32 0.0, %v1899
      %1901 = vmatprep.mubr.f32.mxu0 0.0
      %1902 = vmatmul.mubr.f32.gmra.mxu0 %v1590
      %v1903 = vpop.f32.mrf.mxu0
      %v1904 = vadd.f32 0.0, %v1903
      %v1905 = vpop.f32.mrf.mxu0
      %v1906 = vadd.f32 0.0, %v1905
      %1907 = vmatprep.mubr.f32.mxu0 0.0
      %1908 = vmatmul.mubr.f32.gmra.mxu0 %v1593
      %v1909 = vpop.f32.mrf.mxu0
      %v1910 = vadd.f32 0.0, %v1909
      %v1911 = vpop.f32.mrf.mxu0
      %v1912 = vadd.f32 0.0, %v1911
      %1913 = vmatprep.mubr.f32.mxu0 0.0
      %1914 = vmatmul.mubr.f32.gmra.mxu0 %v1596
      %v1915 = vpop.f32.mrf.mxu0
      %v1916 = vadd.f32 0.0, %v1915
      %v1917 = vpop.f32.mrf.mxu0
      %v1918 = vadd.f32 0.0, %v1917
      %1919 = vdwg.mxu0
      %v1920 = vmul.f32 %v1665, %v1469
      %v1921 = vmul.f32 %v1667, %v1470
      %v1922 = vmul.f32 %v1826, %v1471
      %v1923 = vmul.f32 %v1828, %v1472
      %v1924 = vmul.f32 %v1671, %v1473
      %v1925 = vmul.f32 %v1673, %v1474
      %v1926 = vmul.f32 %v1832, %v1475
      %v1927 = vmul.f32 %v1834, %v1476
      %v1928 = vmul.f32 %v1677, %v1477
      %v1929 = vmul.f32 %v1679, %v1478
      %v1930 = vmul.f32 %v1838, %v1479
      %v1931 = vmul.f32 %v1840, %v1480
      %v1932 = vmul.f32 %v1683, %v1481
      %v1933 = vmul.f32 %v1685, %v1482
      %v1934 = vmul.f32 %v1844, %v1483
      %v1935 = vmul.f32 %v1846, %v1484
      %v1936 = vmul.f32 %v1689, %v1485
      %v1937 = vmul.f32 %v1691, %v1486
      %v1938 = vmul.f32 %v1850, %v1487
      %v1939 = vmul.f32 %v1852, %v1488
      %v1940 = vmul.f32 %v1695, %v1489
      %v1941 = vmul.f32 %v1697, %v1490
      %v1942 = vmul.f32 %v1856, %v1491
      %v1943 = vmul.f32 %v1858, %v1492
      %v1944 = vmul.f32 %v1701, %v1493
      %v1945 = vmul.f32 %v1703, %v1494
      %v1946 = vmul.f32 %v1862, %v1495
      %v1947 = vmul.f32 %v1864, %v1496
      %v1948 = vmul.f32 %v1707, %v1497
      %v1949 = vmul.f32 %v1709, %v1498
      %v1950 = vmul.f32 %v1868, %v1499
      %v1951 = vmul.f32 %v1870, %v1500
      %v1952 = vmul.f32 %v1713, %v1501
      %v1953 = vmul.f32 %v1715, %v1502
      %v1954 = vmul.f32 %v1874, %v1503
      %v1955 = vmul.f32 %v1876, %v1504
      %v1956 = vmul.f32 %v1719, %v1505
      %v1957 = vmul.f32 %v1721, %v1506
      %v1958 = vmul.f32 %v1880, %v1507
      %v1959 = vmul.f32 %v1882, %v1508
      %v1960 = vmul.f32 %v1725, %v1509
      %v1961 = vmul.f32 %v1727, %v1510
      %v1962 = vmul.f32 %v1886, %v1511
      %v1963 = vmul.f32 %v1888, %v1512
      %v1964 = vmul.f32 %v1731, %v1513
      %v1965 = vmul.f32 %v1733, %v1514
      %v1966 = vmul.f32 %v1892, %v1515
      %v1967 = vmul.f32 %v1894, %v1516
      %v1968 = vmul.f32 %v1737, %v1517
      %v1969 = vmul.f32 %v1739, %v1518
      %v1970 = vmul.f32 %v1898, %v1519
      %v1971 = vmul.f32 %v1900, %v1520
      %v1972 = vmul.f32 %v1743, %v1521
      %v1973 = vmul.f32 %v1745, %v1522
      %v1974 = vmul.f32 %v1904, %v1523
      %v1975 = vmul.f32 %v1906, %v1524
      %v1976 = vmul.f32 %v1749, %v1525
      %v1977 = vmul.f32 %v1751, %v1526
      %v1978 = vmul.f32 %v1910, %v1527
      %v1979 = vmul.f32 %v1912, %v1528
      %v1980 = vmul.f32 %v1755, %v1529
      %v1981 = vmul.f32 %v1757, %v1530
      %v1982 = vmul.f32 %v1916, %v1531
      %v1983 = vmul.f32 %v1918, %v1532
      %v1984 = vadd.f32 %v1195, %v1920
      %v1985 = vadd.f32 %v1196, %v1921
      %v1986 = vadd.f32 %v1197, %v1922
      %v1987 = vadd.f32 %v1198, %v1923
      %v1988 = vadd.f32 %v1984, %v1924
      %v1989 = vadd.f32 %v1985, %v1925
      %v1990 = vadd.f32 %v1986, %v1926
      %v1991 = vadd.f32 %v1987, %v1927
      %v1992 = vadd.f32 %v1988, %v1928
      %v1993 = vadd.f32 %v1989, %v1929
      %v1994 = vadd.f32 %v1990, %v1930
      %v1995 = vadd.f32 %v1991, %v1931
      %v1996 = vadd.f32 %v1992, %v1932
      %v1997 = vadd.f32 %v1993, %v1933
      %v1998 = vadd.f32 %v1994, %v1934
      %v1999 = vadd.f32 %v1995, %v1935
      %v2000 = vadd.f32 %v1996, %v1936
      %v2001 = vadd.f32 %v1997, %v1937
      %v2002 = vadd.f32 %v1998, %v1938
      %v2003 = vadd.f32 %v1999, %v1939
      %v2004 = vadd.f32 %v2000, %v1940
      %v2005 = vadd.f32 %v2001, %v1941
      %v2006 = vadd.f32 %v2002, %v1942
      %v2007 = vadd.f32 %v2003, %v1943
      %v2008 = vadd.f32 %v2004, %v1944
      %v2009 = vadd.f32 %v2005, %v1945
      %v2010 = vadd.f32 %v2006, %v1946
      %v2011 = vadd.f32 %v2007, %v1947
      %v2012 = vadd.f32 %v2008, %v1948
      %v2013 = vadd.f32 %v2009, %v1949
      %v2014 = vadd.f32 %v2010, %v1950
      %v2015 = vadd.f32 %v2011, %v1951
      %v2016 = vadd.f32 %v2012, %v1952
      %v2017 = vadd.f32 %v2013, %v1953
      %v2018 = vadd.f32 %v2014, %v1954
      %v2019 = vadd.f32 %v2015, %v1955
      %v2020 = vadd.f32 %v2016, %v1956
      %v2021 = vadd.f32 %v2017, %v1957
      %v2022 = vadd.f32 %v2018, %v1958
      %v2023 = vadd.f32 %v2019, %v1959
      %v2024 = vadd.f32 %v2020, %v1960
      %v2025 = vadd.f32 %v2021, %v1961
      %v2026 = vadd.f32 %v2022, %v1962
      %v2027 = vadd.f32 %v2023, %v1963
      %v2028 = vadd.f32 %v2024, %v1964
      %v2029 = vadd.f32 %v2025, %v1965
      %v2030 = vadd.f32 %v2026, %v1966
      %v2031 = vadd.f32 %v2027, %v1967
      %v2032 = vadd.f32 %v2028, %v1968
      %v2033 = vadd.f32 %v2029, %v1969
      %v2034 = vadd.f32 %v2030, %v1970
      %v2035 = vadd.f32 %v2031, %v1971
      %v2036 = vadd.f32 %v2032, %v1972
      %v2037 = vadd.f32 %v2033, %v1973
      %v2038 = vadd.f32 %v2034, %v1974
      %v2039 = vadd.f32 %v2035, %v1975
      %v2040 = vadd.f32 %v2036, %v1976
      %v2041 = vadd.f32 %v2037, %v1977
      %v2042 = vadd.f32 %v2038, %v1978
      %v2043 = vadd.f32 %v2039, %v1979
      %v2044 = vadd.f32 %v2040, %v1980
      %v2045 = vadd.f32 %v2041, %v1981
      %v2046 = vadd.f32 %v2042, %v1982
      %v2047 = vadd.f32 %v2043, %v1983
      %s2048 = scalar_lea.vmem %s278, 4
      %v2049 = vld [vmem:[%s2048] ss:$8 sm:$0xf]
      %s2050 = scalar_lea.vmem %s278, 5
      %v2051 = vld [vmem:[%s2050] ss:$8 sm:$0xf]
      %v2053 = vlaneseq
      %v2054 = vshrl.u32 %v2053, 7
      %v2055 = vsub.s32 0, %v2054
      %v2056 = vrot.slane %v2051, %v2055
      %v2057 = vlaneseq
      %v2058 = vshrl.u32 %v2057, 7
      %v2059 = vsub.s32 1, %v2058
      %v2060 = vrot.slane %v2051, %v2059
      %v2061 = vlaneseq
      %v2062 = vshrl.u32 %v2061, 7
      %v2063 = vsub.s32 2, %v2062
      %v2064 = vrot.slane %v2051, %v2063
      %v2065 = vlaneseq
      %v2066 = vshrl.u32 %v2065, 7
      %v2067 = vsub.s32 3, %v2066
      %v2068 = vrot.slane %v2051, %v2067
      %v2073 = vsub.f32 %v289, %v2056
      %v2074 = vsub.f32 %v289, %v2060
      %v2075 = vsub.f32 %v289, %v2064
      %v2076 = vsub.f32 %v289, %v2068
      %v2077 = vsub.f32 %v290, %v2056
      %v2078 = vsub.f32 %v290, %v2060
      %v2079 = vsub.f32 %v290, %v2064
      %v2080 = vsub.f32 %v290, %v2068
      %v2081 = vand.u32 2147483647, %v2073
      %v2082 = vand.u32 2147483647, %v2074
      %v2083 = vand.u32 2147483647, %v2075
      %v2084 = vand.u32 2147483647, %v2076
      %v2085 = vand.u32 2147483647, %v2077
      %v2086 = vand.u32 2147483647, %v2078
      %v2087 = vand.u32 2147483647, %v2079
      %v2088 = vand.u32 2147483647, %v2080
      %v2089 = vsub.f32 1.0, %v2081
      %v2090 = vsub.f32 1.0, %v2082
      %v2091 = vsub.f32 1.0, %v2083
      %v2092 = vsub.f32 1.0, %v2084
      %v2093 = vsub.f32 1.0, %v2085
      %v2094 = vsub.f32 1.0, %v2086
      %v2095 = vsub.f32 1.0, %v2087
      %v2096 = vsub.f32 1.0, %v2088
      %v2097 = vmax.f32 %v2089, 0.0
      %v2098 = vmax.f32 %v2090, 0.0
      %v2099 = vmax.f32 %v2091, 0.0
      %v2100 = vmax.f32 %v2092, 0.0
      %v2101 = vmax.f32 %v2093, 0.0
      %v2102 = vmax.f32 %v2094, 0.0
      %v2103 = vmax.f32 %v2095, 0.0
      %v2104 = vmax.f32 %v2096, 0.0
      %v2106 = vlaneseq
      %v2107 = vshrl.u32 %v2106, 7
      %v2108 = vsub.s32 0, %v2107
      %v2109 = vrot.slane %v2049, %v2108
      %v2110 = vlaneseq
      %v2111 = vshrl.u32 %v2110, 7
      %v2112 = vsub.s32 1, %v2111
      %v2113 = vrot.slane %v2049, %v2112
      %v2114 = vlaneseq
      %v2115 = vshrl.u32 %v2114, 7
      %v2116 = vsub.s32 2, %v2115
      %v2117 = vrot.slane %v2049, %v2116
      %v2118 = vlaneseq
      %v2119 = vshrl.u32 %v2118, 7
      %v2120 = vsub.s32 3, %v2119
      %v2121 = vrot.slane %v2049, %v2120
      %v2126 = vsub.f32 %v335, %v2109
      %v2127 = vsub.f32 %v335, %v2113
      %v2128 = vsub.f32 %v335, %v2117
      %v2129 = vsub.f32 %v335, %v2121
      %v2130 = vsub.f32 %v336, %v2109
      %v2131 = vsub.f32 %v336, %v2113
      %v2132 = vsub.f32 %v336, %v2117
      %v2133 = vsub.f32 %v336, %v2121
      %v2134 = vsub.f32 %v337, %v2109
      %v2135 = vsub.f32 %v337, %v2113
      %v2136 = vsub.f32 %v337, %v2117
      %v2137 = vsub.f32 %v337, %v2121
      %v2138 = vsub.f32 %v338, %v2109
      %v2139 = vsub.f32 %v338, %v2113
      %v2140 = vsub.f32 %v338, %v2117
      %v2141 = vsub.f32 %v338, %v2121
      %v2142 = vsub.f32 %v339, %v2109
      %v2143 = vsub.f32 %v339, %v2113
      %v2144 = vsub.f32 %v339, %v2117
      %v2145 = vsub.f32 %v339, %v2121
      %v2146 = vsub.f32 %v340, %v2109
      %v2147 = vsub.f32 %v340, %v2113
      %v2148 = vsub.f32 %v340, %v2117
      %v2149 = vsub.f32 %v340, %v2121
      %v2150 = vsub.f32 %v341, %v2109
      %v2151 = vsub.f32 %v341, %v2113
      %v2152 = vsub.f32 %v341, %v2117
      %v2153 = vsub.f32 %v341, %v2121
      %v2154 = vsub.f32 %v342, %v2109
      %v2155 = vsub.f32 %v342, %v2113
      %v2156 = vsub.f32 %v342, %v2117
      %v2157 = vsub.f32 %v342, %v2121
      %v2158 = vsub.f32 %v343, %v2109
      %v2159 = vsub.f32 %v343, %v2113
      %v2160 = vsub.f32 %v343, %v2117
      %v2161 = vsub.f32 %v343, %v2121
      %v2162 = vsub.f32 %v344, %v2109
      %v2163 = vsub.f32 %v344, %v2113
      %v2164 = vsub.f32 %v344, %v2117
      %v2165 = vsub.f32 %v344, %v2121
      %v2166 = vsub.f32 %v345, %v2109
      %v2167 = vsub.f32 %v345, %v2113
      %v2168 = vsub.f32 %v345, %v2117
      %v2169 = vsub.f32 %v345, %v2121
      %v2170 = vsub.f32 %v346, %v2109
      %v2171 = vsub.f32 %v346, %v2113
      %v2172 = vsub.f32 %v346, %v2117
      %v2173 = vsub.f32 %v346, %v2121
      %v2174 = vsub.f32 %v347, %v2109
      %v2175 = vsub.f32 %v347, %v2113
      %v2176 = vsub.f32 %v347, %v2117
      %v2177 = vsub.f32 %v347, %v2121
      %v2178 = vsub.f32 %v348, %v2109
      %v2179 = vsub.f32 %v348, %v2113
      %v2180 = vsub.f32 %v348, %v2117
      %v2181 = vsub.f32 %v348, %v2121
      %v2182 = vsub.f32 %v349, %v2109
      %v2183 = vsub.f32 %v349, %v2113
      %v2184 = vsub.f32 %v349, %v2117
      %v2185 = vsub.f32 %v349, %v2121
      %v2186 = vsub.f32 %v350, %v2109
      %v2187 = vsub.f32 %v350, %v2113
      %v2188 = vsub.f32 %v350, %v2117
      %v2189 = vsub.f32 %v350, %v2121
      %v2190 = vand.u32 2147483647, %v2126
      %v2191 = vand.u32 2147483647, %v2127
      %v2192 = vand.u32 2147483647, %v2128
      %v2193 = vand.u32 2147483647, %v2129
      %v2194 = vand.u32 2147483647, %v2130
      %v2195 = vand.u32 2147483647, %v2131
      %v2196 = vand.u32 2147483647, %v2132
      %v2197 = vand.u32 2147483647, %v2133
      %v2198 = vand.u32 2147483647, %v2134
      %v2199 = vand.u32 2147483647, %v2135
      %v2200 = vand.u32 2147483647, %v2136
      %v2201 = vand.u32 2147483647, %v2137
      %v2202 = vand.u32 2147483647, %v2138
      %v2203 = vand.u32 2147483647, %v2139
      %v2204 = vand.u32 2147483647, %v2140
      %v2205 = vand.u32 2147483647, %v2141
      %v2206 = vand.u32 2147483647, %v2142
      %v2207 = vand.u32 2147483647, %v2143
      %v2208 = vand.u32 2147483647, %v2144
      %v2209 = vand.u32 2147483647, %v2145
      %v2210 = vand.u32 2147483647, %v2146
      %v2211 = vand.u32 2147483647, %v2147
      %v2212 = vand.u32 2147483647, %v2148
      %v2213 = vand.u32 2147483647, %v2149
      %v2214 = vand.u32 2147483647, %v2150
      %v2215 = vand.u32 2147483647, %v2151
      %v2216 = vand.u32 2147483647, %v2152
      %v2217 = vand.u32 2147483647, %v2153
      %v2218 = vand.u32 2147483647, %v2154
      %v2219 = vand.u32 2147483647, %v2155
      %v2220 = vand.u32 2147483647, %v2156
      %v2221 = vand.u32 2147483647, %v2157
      %v2222 = vand.u32 2147483647, %v2158
      %v2223 = vand.u32 2147483647, %v2159
      %v2224 = vand.u32 2147483647, %v2160
      %v2225 = vand.u32 2147483647, %v2161
      %v2226 = vand.u32 2147483647, %v2162
      %v2227 = vand.u32 2147483647, %v2163
      %v2228 = vand.u32 2147483647, %v2164
      %v2229 = vand.u32 2147483647, %v2165
      %v2230 = vand.u32 2147483647, %v2166
      %v2231 = vand.u32 2147483647, %v2167
      %v2232 = vand.u32 2147483647, %v2168
      %v2233 = vand.u32 2147483647, %v2169
      %v2234 = vand.u32 2147483647, %v2170
      %v2235 = vand.u32 2147483647, %v2171
      %v2236 = vand.u32 2147483647, %v2172
      %v2237 = vand.u32 2147483647, %v2173
      %v2238 = vand.u32 2147483647, %v2174
      %v2239 = vand.u32 2147483647, %v2175
      %v2240 = vand.u32 2147483647, %v2176
      %v2241 = vand.u32 2147483647, %v2177
      %v2242 = vand.u32 2147483647, %v2178
      %v2243 = vand.u32 2147483647, %v2179
      %v2244 = vand.u32 2147483647, %v2180
      %v2245 = vand.u32 2147483647, %v2181
      %v2246 = vand.u32 2147483647, %v2182
      %v2247 = vand.u32 2147483647, %v2183
      %v2248 = vand.u32 2147483647, %v2184
      %v2249 = vand.u32 2147483647, %v2185
      %v2250 = vand.u32 2147483647, %v2186
      %v2251 = vand.u32 2147483647, %v2187
      %v2252 = vand.u32 2147483647, %v2188
      %v2253 = vand.u32 2147483647, %v2189
      %v2254 = vsub.f32 1.0, %v2190
      %v2255 = vsub.f32 1.0, %v2191
      %v2256 = vsub.f32 1.0, %v2192
      %v2257 = vsub.f32 1.0, %v2193
      %v2258 = vsub.f32 1.0, %v2194
      %v2259 = vsub.f32 1.0, %v2195
      %v2260 = vsub.f32 1.0, %v2196
      %v2261 = vsub.f32 1.0, %v2197
      %v2262 = vsub.f32 1.0, %v2198
      %v2263 = vsub.f32 1.0, %v2199
      %v2264 = vsub.f32 1.0, %v2200
      %v2265 = vsub.f32 1.0, %v2201
      %v2266 = vsub.f32 1.0, %v2202
      %v2267 = vsub.f32 1.0, %v2203
      %v2268 = vsub.f32 1.0, %v2204
      %v2269 = vsub.f32 1.0, %v2205
      %v2270 = vsub.f32 1.0, %v2206
      %v2271 = vsub.f32 1.0, %v2207
      %v2272 = vsub.f32 1.0, %v2208
      %v2273 = vsub.f32 1.0, %v2209
      %v2274 = vsub.f32 1.0, %v2210
      %v2275 = vsub.f32 1.0, %v2211
      %v2276 = vsub.f32 1.0, %v2212
      %v2277 = vsub.f32 1.0, %v2213
      %v2278 = vsub.f32 1.0, %v2214
      %v2279 = vsub.f32 1.0, %v2215
      %v2280 = vsub.f32 1.0, %v2216
      %v2281 = vsub.f32 1.0, %v2217
      %v2282 = vsub.f32 1.0, %v2218
      %v2283 = vsub.f32 1.0, %v2219
      %v2284 = vsub.f32 1.0, %v2220
      %v2285 = vsub.f32 1.0, %v2221
      %v2286 = vsub.f32 1.0, %v2222
      %v2287 = vsub.f32 1.0, %v2223
      %v2288 = vsub.f32 1.0, %v2224
      %v2289 = vsub.f32 1.0, %v2225
      %v2290 = vsub.f32 1.0, %v2226
      %v2291 = vsub.f32 1.0, %v2227
      %v2292 = vsub.f32 1.0, %v2228
      %v2293 = vsub.f32 1.0, %v2229
      %v2294 = vsub.f32 1.0, %v2230
      %v2295 = vsub.f32 1.0, %v2231
      %v2296 = vsub.f32 1.0, %v2232
      %v2297 = vsub.f32 1.0, %v2233
      %v2298 = vsub.f32 1.0, %v2234
      %v2299 = vsub.f32 1.0, %v2235
      %v2300 = vsub.f32 1.0, %v2236
      %v2301 = vsub.f32 1.0, %v2237
      %v2302 = vsub.f32 1.0, %v2238
      %v2303 = vsub.f32 1.0, %v2239
      %v2304 = vsub.f32 1.0, %v2240
      %v2305 = vsub.f32 1.0, %v2241
      %v2306 = vsub.f32 1.0, %v2242
      %v2307 = vsub.f32 1.0, %v2243
      %v2308 = vsub.f32 1.0, %v2244
      %v2309 = vsub.f32 1.0, %v2245
      %v2310 = vsub.f32 1.0, %v2246
      %v2311 = vsub.f32 1.0, %v2247
      %v2312 = vsub.f32 1.0, %v2248
      %v2313 = vsub.f32 1.0, %v2249
      %v2314 = vsub.f32 1.0, %v2250
      %v2315 = vsub.f32 1.0, %v2251
      %v2316 = vsub.f32 1.0, %v2252
      %v2317 = vsub.f32 1.0, %v2253
      %v2318 = vmax.f32 %v2254, 0.0
      %v2319 = vmax.f32 %v2255, 0.0
      %v2320 = vmax.f32 %v2256, 0.0
      %v2321 = vmax.f32 %v2257, 0.0
      %v2322 = vmax.f32 %v2258, 0.0
      %v2323 = vmax.f32 %v2259, 0.0
      %v2324 = vmax.f32 %v2260, 0.0
      %v2325 = vmax.f32 %v2261, 0.0
      %v2326 = vmax.f32 %v2262, 0.0
      %v2327 = vmax.f32 %v2263, 0.0
      %v2328 = vmax.f32 %v2264, 0.0
      %v2329 = vmax.f32 %v2265, 0.0
      %v2330 = vmax.f32 %v2266, 0.0
      %v2331 = vmax.f32 %v2267, 0.0
      %v2332 = vmax.f32 %v2268, 0.0
      %v2333 = vmax.f32 %v2269, 0.0
      %v2334 = vmax.f32 %v2270, 0.0
      %v2335 = vmax.f32 %v2271, 0.0
      %v2336 = vmax.f32 %v2272, 0.0
      %v2337 = vmax.f32 %v2273, 0.0
      %v2338 = vmax.f32 %v2274, 0.0
      %v2339 = vmax.f32 %v2275, 0.0
      %v2340 = vmax.f32 %v2276, 0.0
      %v2341 = vmax.f32 %v2277, 0.0
      %v2342 = vmax.f32 %v2278, 0.0
      %v2343 = vmax.f32 %v2279, 0.0
      %v2344 = vmax.f32 %v2280, 0.0
      %v2345 = vmax.f32 %v2281, 0.0
      %v2346 = vmax.f32 %v2282, 0.0
      %v2347 = vmax.f32 %v2283, 0.0
      %v2348 = vmax.f32 %v2284, 0.0
      %v2349 = vmax.f32 %v2285, 0.0
      %v2350 = vmax.f32 %v2286, 0.0
      %v2351 = vmax.f32 %v2287, 0.0
      %v2352 = vmax.f32 %v2288, 0.0
      %v2353 = vmax.f32 %v2289, 0.0
      %v2354 = vmax.f32 %v2290, 0.0
      %v2355 = vmax.f32 %v2291, 0.0
      %v2356 = vmax.f32 %v2292, 0.0
      %v2357 = vmax.f32 %v2293, 0.0
      %v2358 = vmax.f32 %v2294, 0.0
      %v2359 = vmax.f32 %v2295, 0.0
      %v2360 = vmax.f32 %v2296, 0.0
      %v2361 = vmax.f32 %v2297, 0.0
      %v2362 = vmax.f32 %v2298, 0.0
      %v2363 = vmax.f32 %v2299, 0.0
      %v2364 = vmax.f32 %v2300, 0.0
      %v2365 = vmax.f32 %v2301, 0.0
      %v2366 = vmax.f32 %v2302, 0.0
      %v2367 = vmax.f32 %v2303, 0.0
      %v2368 = vmax.f32 %v2304, 0.0
      %v2369 = vmax.f32 %v2305, 0.0
      %v2370 = vmax.f32 %v2306, 0.0
      %v2371 = vmax.f32 %v2307, 0.0
      %v2372 = vmax.f32 %v2308, 0.0
      %v2373 = vmax.f32 %v2309, 0.0
      %v2374 = vmax.f32 %v2310, 0.0
      %v2375 = vmax.f32 %v2311, 0.0
      %v2376 = vmax.f32 %v2312, 0.0
      %v2377 = vmax.f32 %v2313, 0.0
      %v2378 = vmax.f32 %v2314, 0.0
      %v2379 = vmax.f32 %v2315, 0.0
      %v2380 = vmax.f32 %v2316, 0.0
      %v2381 = vmax.f32 %v2317, 0.0
      %s2382 = scalar_lea.vmem %s1, 256
      %v2383 = vld [vmem:[%s2382] sm:$0xff]
      %v2384 = vld [vmem:[%s2382 + $0x8] sm:$0xff]
      %v2385 = vld [vmem:[%s2382 + $0x10] sm:$0xff]
      %v2386 = vld [vmem:[%s2382 + $0x18] sm:$0xff]
      %v2387 = vld [vmem:[%s2382 + $0x20] sm:$0xff]
      %v2388 = vld [vmem:[%s2382 + $0x28] sm:$0xff]
      %v2389 = vld [vmem:[%s2382 + $0x30] sm:$0xff]
      %v2390 = vld [vmem:[%s2382 + $0x38] sm:$0xff]
      %v2391 = vld [vmem:[%s2382 + $0x40] sm:$0xff]
      %v2392 = vld [vmem:[%s2382 + $0x48] sm:$0xff]
      %v2393 = vld [vmem:[%s2382 + $0x50] sm:$0xff]
      %v2394 = vld [vmem:[%s2382 + $0x58] sm:$0xff]
      %v2395 = vld [vmem:[%s2382 + $0x60] sm:$0xff]
      %v2396 = vld [vmem:[%s2382 + $0x68] sm:$0xff]
      %v2397 = vld [vmem:[%s2382 + $0x70] sm:$0xff]
      %v2398 = vld [vmem:[%s2382 + $0x78] sm:$0xff]
      %v2400 = vsel %vm700, %v2383, 0
      %v2403 = vsel %vm700, %v2384, 0
      %v2406 = vsel %vm700, %v2385, 0
      %v2409 = vsel %vm700, %v2386, 0
      %v2412 = vsel %vm700, %v2387, 0
      %v2415 = vsel %vm700, %v2388, 0
      %v2418 = vsel %vm700, %v2389, 0
      %v2421 = vsel %vm700, %v2390, 0
      %v2424 = vsel %vm700, %v2391, 0
      %v2427 = vsel %vm700, %v2392, 0
      %v2430 = vsel %vm700, %v2393, 0
      %v2433 = vsel %vm700, %v2394, 0
      %v2436 = vsel %vm700, %v2395, 0
      %v2439 = vsel %vm700, %v2396, 0
      %v2442 = vsel %vm700, %v2397, 0
      %v2445 = vsel %vm700, %v2398, 0
      %2447 = vmatprep.subr.mxu0 0.0
      %2448 = vmatpush1.msra.mxu0 0.0
      %2449 = vmatprep.subr.mxu0 0.0
      %2450 = vmatpush1.msra.mxu0 0.0
      %2451 = vmatprep.subr.mxu0 0.0
      %2452 = vmatpush1.msra.mxu0 0.0
      %2453 = vmatprep.subr.mxu0 0.0
      %2454 = vmatpush1.msra.mxu0 0.0
      %2455 = vmatprep.subr.mxu0 0.0
      %2456 = vmatpush1.msra.mxu0 0.0
      %2457 = vmatprep.subr.mxu0 0.0
      %2458 = vmatpush1.msra.mxu0 0.0
      %2459 = vmatprep.subr.mxu0 0.0
      %2460 = vmatpush1.msra.mxu0 0.0
      %2461 = vmatprep.subr.mxu0 0.0
      %2462 = vmatpush1.msra.mxu0 0.0
      %2463 = vmatprep.subr.mxu0 0.0
      %2464 = vmatpush1.msra.mxu0 0.0
      %2465 = vmatprep.subr.mxu0 0.0
      %2466 = vmatpush1.msra.mxu0 0.0
      %2467 = vmatprep.subr.mxu0 0.0
      %2468 = vmatpush1.msra.mxu0 0.0
      %2469 = vmatprep.subr.mxu0 0.0
      %2470 = vmatpush1.msra.mxu0 0.0
      %2471 = vmatprep.subr.mxu0 0.0
      %2472 = vmatpush1.msra.mxu0 0.0
      %2473 = vmatprep.subr.mxu0 0.0
      %2474 = vmatpush1.msra.mxu0 0.0
      %2475 = vmatprep.subr.mxu0 %v2102
      %2476 = vmatpush1.msra.mxu0 %v2101
      %2477 = vmatprep.subr.mxu0 %v2098
      %2478 = vmatpush1.msra.mxu0 %v2097
      %2479 = vmatprep.subr.mxu0 0.0
      %2480 = vmatpush2.msra.mxu0 0.0
      %2481 = vmatprep.subr.mxu0 0.0
      %2482 = vmatpush2.msra.mxu0 0.0
      %2483 = vmatprep.subr.mxu0 0.0
      %2484 = vmatpush2.msra.mxu0 0.0
      %2485 = vmatprep.subr.mxu0 0.0
      %2486 = vmatpush2.msra.mxu0 0.0
      %2487 = vmatprep.subr.mxu0 0.0
      %2488 = vmatpush2.msra.mxu0 0.0
      %2489 = vmatprep.subr.mxu0 0.0
      %2490 = vmatpush2.msra.mxu0 0.0
      %2491 = vmatprep.subr.mxu0 0.0
      %2492 = vmatpush2.msra.mxu0 0.0
      %2493 = vmatprep.subr.mxu0 0.0
      %2494 = vmatpush2.msra.mxu0 0.0
      %2495 = vmatprep.subr.mxu0 0.0
      %2496 = vmatpush2.msra.mxu0 0.0
      %2497 = vmatprep.subr.mxu0 0.0
      %2498 = vmatpush2.msra.mxu0 0.0
      %2499 = vmatprep.subr.mxu0 0.0
      %2500 = vmatpush2.msra.mxu0 0.0
      %2501 = vmatprep.subr.mxu0 0.0
      %2502 = vmatpush2.msra.mxu0 0.0
      %2503 = vmatprep.subr.mxu0 0.0
      %2504 = vmatpush2.msra.mxu0 0.0
      %2505 = vmatprep.subr.mxu0 0.0
      %2506 = vmatpush2.msra.mxu0 0.0
      %2507 = vmatprep.subr.mxu0 0.0
      %2508 = vmatpush2.msra.mxu0 0.0
      %2509 = vmatprep.subr.mxu0 0.0
      %2510 = vmatpush2.msra.mxu0 0.0
      %2511 = vmatprep.mubr.f32.mxu0 0.0
      %2512 = vmatmul.mubr.f32.gmra.mxu0 %v2400
      %v2513 = vpop.f32.mrf.mxu0
      %v2514 = vadd.f32 0.0, %v2513
      %v2515 = vpop.f32.mrf.mxu0
      %v2516 = vadd.f32 0.0, %v2515
      %2517 = vmatprep.mubr.f32.mxu0 0.0
      %2518 = vmatmul.mubr.f32.gmra.mxu0 %v2403
      %v2519 = vpop.f32.mrf.mxu0
      %v2520 = vadd.f32 0.0, %v2519
      %v2521 = vpop.f32.mrf.mxu0
      %v2522 = vadd.f32 0.0, %v2521
      %2523 = vmatprep.mubr.f32.mxu0 0.0
      %2524 = vmatmul.mubr.f32.gmra.mxu0 %v2406
      %v2525 = vpop.f32.mrf.mxu0
      %v2526 = vadd.f32 0.0, %v2525
      %v2527 = vpop.f32.mrf.mxu0
      %v2528 = vadd.f32 0.0, %v2527
      %2529 = vmatprep.mubr.f32.mxu0 0.0
      %2530 = vmatmul.mubr.f32.gmra.mxu0 %v2409
      %v2531 = vpop.f32.mrf.mxu0
      %v2532 = vadd.f32 0.0, %v2531
      %v2533 = vpop.f32.mrf.mxu0
      %v2534 = vadd.f32 0.0, %v2533
      %2535 = vmatprep.mubr.f32.mxu0 0.0
      %2536 = vmatmul.mubr.f32.gmra.mxu0 %v2412
      %v2537 = vpop.f32.mrf.mxu0
      %v2538 = vadd.f32 0.0, %v2537
      %v2539 = vpop.f32.mrf.mxu0
      %v2540 = vadd.f32 0.0, %v2539
      %2541 = vmatprep.mubr.f32.mxu0 0.0
      %2542 = vmatmul.mubr.f32.gmra.mxu0 %v2415
      %v2543 = vpop.f32.mrf.mxu0
      %v2544 = vadd.f32 0.0, %v2543
      %v2545 = vpop.f32.mrf.mxu0
      %v2546 = vadd.f32 0.0, %v2545
      %2547 = vmatprep.mubr.f32.mxu0 0.0
      %2548 = vmatmul.mubr.f32.gmra.mxu0 %v2418
      %v2549 = vpop.f32.mrf.mxu0
      %v2550 = vadd.f32 0.0, %v2549
      %v2551 = vpop.f32.mrf.mxu0
      %v2552 = vadd.f32 0.0, %v2551
      %2553 = vmatprep.mubr.f32.mxu0 0.0
      %2554 = vmatmul.mubr.f32.gmra.mxu0 %v2421
      %v2555 = vpop.f32.mrf.mxu0
      %v2556 = vadd.f32 0.0, %v2555
      %v2557 = vpop.f32.mrf.mxu0
      %v2558 = vadd.f32 0.0, %v2557
      %2559 = vmatprep.mubr.f32.mxu0 0.0
      %2560 = vmatmul.mubr.f32.gmra.mxu0 %v2424
      %v2561 = vpop.f32.mrf.mxu0
      %v2562 = vadd.f32 0.0, %v2561
      %v2563 = vpop.f32.mrf.mxu0
      %v2564 = vadd.f32 0.0, %v2563
      %2565 = vmatprep.mubr.f32.mxu0 0.0
      %2566 = vmatmul.mubr.f32.gmra.mxu0 %v2427
      %v2567 = vpop.f32.mrf.mxu0
      %v2568 = vadd.f32 0.0, %v2567
      %v2569 = vpop.f32.mrf.mxu0
      %v2570 = vadd.f32 0.0, %v2569
      %2571 = vmatprep.mubr.f32.mxu0 0.0
      %2572 = vmatmul.mubr.f32.gmra.mxu0 %v2430
      %v2573 = vpop.f32.mrf.mxu0
      %v2574 = vadd.f32 0.0, %v2573
      %v2575 = vpop.f32.mrf.mxu0
      %v2576 = vadd.f32 0.0, %v2575
      %2577 = vmatprep.mubr.f32.mxu0 0.0
      %2578 = vmatmul.mubr.f32.gmra.mxu0 %v2433
      %v2579 = vpop.f32.mrf.mxu0
      %v2580 = vadd.f32 0.0, %v2579
      %v2581 = vpop.f32.mrf.mxu0
      %v2582 = vadd.f32 0.0, %v2581
      %2583 = vmatprep.mubr.f32.mxu0 0.0
      %2584 = vmatmul.mubr.f32.gmra.mxu0 %v2436
      %v2585 = vpop.f32.mrf.mxu0
      %v2586 = vadd.f32 0.0, %v2585
      %v2587 = vpop.f32.mrf.mxu0
      %v2588 = vadd.f32 0.0, %v2587
      %2589 = vmatprep.mubr.f32.mxu0 0.0
      %2590 = vmatmul.mubr.f32.gmra.mxu0 %v2439
      %v2591 = vpop.f32.mrf.mxu0
      %v2592 = vadd.f32 0.0, %v2591
      %v2593 = vpop.f32.mrf.mxu0
      %v2594 = vadd.f32 0.0, %v2593
      %2595 = vmatprep.mubr.f32.mxu0 0.0
      %2596 = vmatmul.mubr.f32.gmra.mxu0 %v2442
      %v2597 = vpop.f32.mrf.mxu0
      %v2598 = vadd.f32 0.0, %v2597
      %v2599 = vpop.f32.mrf.mxu0
      %v2600 = vadd.f32 0.0, %v2599
      %2601 = vmatprep.mubr.f32.mxu0 0.0
      %2602 = vmatmul.mubr.f32.gmra.mxu0 %v2445
      %v2603 = vpop.f32.mrf.mxu0
      %v2604 = vadd.f32 0.0, %v2603
      %v2605 = vpop.f32.mrf.mxu0
      %v2606 = vadd.f32 0.0, %v2605
      %2607 = vdwg.mxu0
      %2608 = vmatprep.subr.mxu0 0.0
      %2609 = vmatpush1.msra.mxu0 0.0
      %2610 = vmatprep.subr.mxu0 0.0
      %2611 = vmatpush1.msra.mxu0 0.0
      %2612 = vmatprep.subr.mxu0 0.0
      %2613 = vmatpush1.msra.mxu0 0.0
      %2614 = vmatprep.subr.mxu0 0.0
      %2615 = vmatpush1.msra.mxu0 0.0
      %2616 = vmatprep.subr.mxu0 0.0
      %2617 = vmatpush1.msra.mxu0 0.0
      %2618 = vmatprep.subr.mxu0 0.0
      %2619 = vmatpush1.msra.mxu0 0.0
      %2620 = vmatprep.subr.mxu0 0.0
      %2621 = vmatpush1.msra.mxu0 0.0
      %2622 = vmatprep.subr.mxu0 0.0
      %2623 = vmatpush1.msra.mxu0 0.0
      %2624 = vmatprep.subr.mxu0 0.0
      %2625 = vmatpush1.msra.mxu0 0.0
      %2626 = vmatprep.subr.mxu0 0.0
      %2627 = vmatpush1.msra.mxu0 0.0
      %2628 = vmatprep.subr.mxu0 0.0
      %2629 = vmatpush1.msra.mxu0 0.0
      %2630 = vmatprep.subr.mxu0 0.0
      %2631 = vmatpush1.msra.mxu0 0.0
      %2632 = vmatprep.subr.mxu0 0.0
      %2633 = vmatpush1.msra.mxu0 0.0
      %2634 = vmatprep.subr.mxu0 0.0
      %2635 = vmatpush1.msra.mxu0 0.0
      %2636 = vmatprep.subr.mxu0 %v2104
      %2637 = vmatpush1.msra.mxu0 %v2103
      %2638 = vmatprep.subr.mxu0 %v2100
      %2639 = vmatpush1.msra.mxu0 %v2099
      %2640 = vmatprep.subr.mxu0 0.0
      %2641 = vmatpush2.msra.mxu0 0.0
      %2642 = vmatprep.subr.mxu0 0.0
      %2643 = vmatpush2.msra.mxu0 0.0
      %2644 = vmatprep.subr.mxu0 0.0
      %2645 = vmatpush2.msra.mxu0 0.0
      %2646 = vmatprep.subr.mxu0 0.0
      %2647 = vmatpush2.msra.mxu0 0.0
      %2648 = vmatprep.subr.mxu0 0.0
      %2649 = vmatpush2.msra.mxu0 0.0
      %2650 = vmatprep.subr.mxu0 0.0
      %2651 = vmatpush2.msra.mxu0 0.0
      %2652 = vmatprep.subr.mxu0 0.0
      %2653 = vmatpush2.msra.mxu0 0.0
      %2654 = vmatprep.subr.mxu0 0.0
      %2655 = vmatpush2.msra.mxu0 0.0
      %2656 = vmatprep.subr.mxu0 0.0
      %2657 = vmatpush2.msra.mxu0 0.0
      %2658 = vmatprep.subr.mxu0 0.0
      %2659 = vmatpush2.msra.mxu0 0.0
      %2660 = vmatprep.subr.mxu0 0.0
      %2661 = vmatpush2.msra.mxu0 0.0
      %2662 = vmatprep.subr.mxu0 0.0
      %2663 = vmatpush2.msra.mxu0 0.0
      %2664 = vmatprep.subr.mxu0 0.0
      %2665 = vmatpush2.msra.mxu0 0.0
      %2666 = vmatprep.subr.mxu0 0.0
      %2667 = vmatpush2.msra.mxu0 0.0
      %2668 = vmatprep.subr.mxu0 0.0
      %2669 = vmatpush2.msra.mxu0 0.0
      %2670 = vmatprep.subr.mxu0 0.0
      %2671 = vmatpush2.msra.mxu0 0.0
      %2672 = vmatprep.mubr.f32.mxu0 0.0
      %2673 = vmatmul.mubr.f32.gmra.mxu0 %v2400
      %v2674 = vpop.f32.mrf.mxu0
      %v2675 = vadd.f32 0.0, %v2674
      %v2676 = vpop.f32.mrf.mxu0
      %v2677 = vadd.f32 0.0, %v2676
      %2678 = vmatprep.mubr.f32.mxu0 0.0
      %2679 = vmatmul.mubr.f32.gmra.mxu0 %v2403
      %v2680 = vpop.f32.mrf.mxu0
      %v2681 = vadd.f32 0.0, %v2680
      %v2682 = vpop.f32.mrf.mxu0
      %v2683 = vadd.f32 0.0, %v2682
      %2684 = vmatprep.mubr.f32.mxu0 0.0
      %2685 = vmatmul.mubr.f32.gmra.mxu0 %v2406
      %v2686 = vpop.f32.mrf.mxu0
      %v2687 = vadd.f32 0.0, %v2686
      %v2688 = vpop.f32.mrf.mxu0
      %v2689 = vadd.f32 0.0, %v2688
      %2690 = vmatprep.mubr.f32.mxu0 0.0
      %2691 = vmatmul.mubr.f32.gmra.mxu0 %v2409
      %v2692 = vpop.f32.mrf.mxu0
      %v2693 = vadd.f32 0.0, %v2692
      %v2694 = vpop.f32.mrf.mxu0
      %v2695 = vadd.f32 0.0, %v2694
      %2696 = vmatprep.mubr.f32.mxu0 0.0
      %2697 = vmatmul.mubr.f32.gmra.mxu0 %v2412
      %v2698 = vpop.f32.mrf.mxu0
      %v2699 = vadd.f32 0.0, %v2698
      %v2700 = vpop.f32.mrf.mxu0
      %v2701 = vadd.f32 0.0, %v2700
      %2702 = vmatprep.mubr.f32.mxu0 0.0
      %2703 = vmatmul.mubr.f32.gmra.mxu0 %v2415
      %v2704 = vpop.f32.mrf.mxu0
      %v2705 = vadd.f32 0.0, %v2704
      %v2706 = vpop.f32.mrf.mxu0
      %v2707 = vadd.f32 0.0, %v2706
      %2708 = vmatprep.mubr.f32.mxu0 0.0
      %2709 = vmatmul.mubr.f32.gmra.mxu0 %v2418
      %v2710 = vpop.f32.mrf.mxu0
      %v2711 = vadd.f32 0.0, %v2710
      %v2712 = vpop.f32.mrf.mxu0
      %v2713 = vadd.f32 0.0, %v2712
      %2714 = vmatprep.mubr.f32.mxu0 0.0
      %2715 = vmatmul.mubr.f32.gmra.mxu0 %v2421
      %v2716 = vpop.f32.mrf.mxu0
      %v2717 = vadd.f32 0.0, %v2716
      %v2718 = vpop.f32.mrf.mxu0
      %v2719 = vadd.f32 0.0, %v2718
      %2720 = vmatprep.mubr.f32.mxu0 0.0
      %2721 = vmatmul.mubr.f32.gmra.mxu0 %v2424
      %v2722 = vpop.f32.mrf.mxu0
      %v2723 = vadd.f32 0.0, %v2722
      %v2724 = vpop.f32.mrf.mxu0
      %v2725 = vadd.f32 0.0, %v2724
      %2726 = vmatprep.mubr.f32.mxu0 0.0
      %2727 = vmatmul.mubr.f32.gmra.mxu0 %v2427
      %v2728 = vpop.f32.mrf.mxu0
      %v2729 = vadd.f32 0.0, %v2728
      %v2730 = vpop.f32.mrf.mxu0
      %v2731 = vadd.f32 0.0, %v2730
      %2732 = vmatprep.mubr.f32.mxu0 0.0
      %2733 = vmatmul.mubr.f32.gmra.mxu0 %v2430
      %v2734 = vpop.f32.mrf.mxu0
      %v2735 = vadd.f32 0.0, %v2734
      %v2736 = vpop.f32.mrf.mxu0
      %v2737 = vadd.f32 0.0, %v2736
      %2738 = vmatprep.mubr.f32.mxu0 0.0
      %2739 = vmatmul.mubr.f32.gmra.mxu0 %v2433
      %v2740 = vpop.f32.mrf.mxu0
      %v2741 = vadd.f32 0.0, %v2740
      %v2742 = vpop.f32.mrf.mxu0
      %v2743 = vadd.f32 0.0, %v2742
      %2744 = vmatprep.mubr.f32.mxu0 0.0
      %2745 = vmatmul.mubr.f32.gmra.mxu0 %v2436
      %v2746 = vpop.f32.mrf.mxu0
      %v2747 = vadd.f32 0.0, %v2746
      %v2748 = vpop.f32.mrf.mxu0
      %v2749 = vadd.f32 0.0, %v2748
      %2750 = vmatprep.mubr.f32.mxu0 0.0
      %2751 = vmatmul.mubr.f32.gmra.mxu0 %v2439
      %v2752 = vpop.f32.mrf.mxu0
      %v2753 = vadd.f32 0.0, %v2752
      %v2754 = vpop.f32.mrf.mxu0
      %v2755 = vadd.f32 0.0, %v2754
      %2756 = vmatprep.mubr.f32.mxu0 0.0
      %2757 = vmatmul.mubr.f32.gmra.mxu0 %v2442
      %v2758 = vpop.f32.mrf.mxu0
      %v2759 = vadd.f32 0.0, %v2758
      %v2760 = vpop.f32.mrf.mxu0
      %v2761 = vadd.f32 0.0, %v2760
      %2762 = vmatprep.mubr.f32.mxu0 0.0
      %2763 = vmatmul.mubr.f32.gmra.mxu0 %v2445
      %v2764 = vpop.f32.mrf.mxu0
      %v2765 = vadd.f32 0.0, %v2764
      %v2766 = vpop.f32.mrf.mxu0
      %v2767 = vadd.f32 0.0, %v2766
      %2768 = vdwg.mxu0
      %v2769 = vmul.f32 %v2514, %v2318
      %v2770 = vmul.f32 %v2516, %v2319
      %v2771 = vmul.f32 %v2675, %v2320
      %v2772 = vmul.f32 %v2677, %v2321
      %v2773 = vmul.f32 %v2520, %v2322
      %v2774 = vmul.f32 %v2522, %v2323
      %v2775 = vmul.f32 %v2681, %v2324
      %v2776 = vmul.f32 %v2683, %v2325
      %v2777 = vmul.f32 %v2526, %v2326
      %v2778 = vmul.f32 %v2528, %v2327
      %v2779 = vmul.f32 %v2687, %v2328
      %v2780 = vmul.f32 %v2689, %v2329
      %v2781 = vmul.f32 %v2532, %v2330
      %v2782 = vmul.f32 %v2534, %v2331
      %v2783 = vmul.f32 %v2693, %v2332
      %v2784 = vmul.f32 %v2695, %v2333
      %v2785 = vmul.f32 %v2538, %v2334
      %v2786 = vmul.f32 %v2540, %v2335
      %v2787 = vmul.f32 %v2699, %v2336
      %v2788 = vmul.f32 %v2701, %v2337
      %v2789 = vmul.f32 %v2544, %v2338
      %v2790 = vmul.f32 %v2546, %v2339
      %v2791 = vmul.f32 %v2705, %v2340
      %v2792 = vmul.f32 %v2707, %v2341
      %v2793 = vmul.f32 %v2550, %v2342
      %v2794 = vmul.f32 %v2552, %v2343
      %v2795 = vmul.f32 %v2711, %v2344
      %v2796 = vmul.f32 %v2713, %v2345
      %v2797 = vmul.f32 %v2556, %v2346
      %v2798 = vmul.f32 %v2558, %v2347
      %v2799 = vmul.f32 %v2717, %v2348
      %v2800 = vmul.f32 %v2719, %v2349
      %v2801 = vmul.f32 %v2562, %v2350
      %v2802 = vmul.f32 %v2564, %v2351
      %v2803 = vmul.f32 %v2723, %v2352
      %v2804 = vmul.f32 %v2725, %v2353
      %v2805 = vmul.f32 %v2568, %v2354
      %v2806 = vmul.f32 %v2570, %v2355
      %v2807 = vmul.f32 %v2729, %v2356
      %v2808 = vmul.f32 %v2731, %v2357
      %v2809 = vmul.f32 %v2574, %v2358
      %v2810 = vmul.f32 %v2576, %v2359
      %v2811 = vmul.f32 %v2735, %v2360
      %v2812 = vmul.f32 %v2737, %v2361
      %v2813 = vmul.f32 %v2580, %v2362
      %v2814 = vmul.f32 %v2582, %v2363
      %v2815 = vmul.f32 %v2741, %v2364
      %v2816 = vmul.f32 %v2743, %v2365
      %v2817 = vmul.f32 %v2586, %v2366
      %v2818 = vmul.f32 %v2588, %v2367
      %v2819 = vmul.f32 %v2747, %v2368
      %v2820 = vmul.f32 %v2749, %v2369
      %v2821 = vmul.f32 %v2592, %v2370
      %v2822 = vmul.f32 %v2594, %v2371
      %v2823 = vmul.f32 %v2753, %v2372
      %v2824 = vmul.f32 %v2755, %v2373
      %v2825 = vmul.f32 %v2598, %v2374
      %v2826 = vmul.f32 %v2600, %v2375
      %v2827 = vmul.f32 %v2759, %v2376
      %v2828 = vmul.f32 %v2761, %v2377
      %v2829 = vmul.f32 %v2604, %v2378
      %v2830 = vmul.f32 %v2606, %v2379
      %v2831 = vmul.f32 %v2765, %v2380
      %v2832 = vmul.f32 %v2767, %v2381
      %v2833 = vadd.f32 %v2044, %v2769
      %v2834 = vadd.f32 %v2045, %v2770
      %v2835 = vadd.f32 %v2046, %v2771
      %v2836 = vadd.f32 %v2047, %v2772
      %v2837 = vadd.f32 %v2833, %v2773
      %v2838 = vadd.f32 %v2834, %v2774
      %v2839 = vadd.f32 %v2835, %v2775
      %v2840 = vadd.f32 %v2836, %v2776
      %v2841 = vadd.f32 %v2837, %v2777
      %v2842 = vadd.f32 %v2838, %v2778
      %v2843 = vadd.f32 %v2839, %v2779
      %v2844 = vadd.f32 %v2840, %v2780
      %v2845 = vadd.f32 %v2841, %v2781
      %v2846 = vadd.f32 %v2842, %v2782
      %v2847 = vadd.f32 %v2843, %v2783
      %v2848 = vadd.f32 %v2844, %v2784
      %v2849 = vadd.f32 %v2845, %v2785
      %v2850 = vadd.f32 %v2846, %v2786
      %v2851 = vadd.f32 %v2847, %v2787
      %v2852 = vadd.f32 %v2848, %v2788
      %v2853 = vadd.f32 %v2849, %v2789
      %v2854 = vadd.f32 %v2850, %v2790
      %v2855 = vadd.f32 %v2851, %v2791
      %v2856 = vadd.f32 %v2852, %v2792
      %v2857 = vadd.f32 %v2853, %v2793
      %v2858 = vadd.f32 %v2854, %v2794
      %v2859 = vadd.f32 %v2855, %v2795
      %v2860 = vadd.f32 %v2856, %v2796
      %v2861 = vadd.f32 %v2857, %v2797
      %v2862 = vadd.f32 %v2858, %v2798
      %v2863 = vadd.f32 %v2859, %v2799
      %v2864 = vadd.f32 %v2860, %v2800
      %v2865 = vadd.f32 %v2861, %v2801
      %v2866 = vadd.f32 %v2862, %v2802
      %v2867 = vadd.f32 %v2863, %v2803
      %v2868 = vadd.f32 %v2864, %v2804
      %v2869 = vadd.f32 %v2865, %v2805
      %v2870 = vadd.f32 %v2866, %v2806
      %v2871 = vadd.f32 %v2867, %v2807
      %v2872 = vadd.f32 %v2868, %v2808
      %v2873 = vadd.f32 %v2869, %v2809
      %v2874 = vadd.f32 %v2870, %v2810
      %v2875 = vadd.f32 %v2871, %v2811
      %v2876 = vadd.f32 %v2872, %v2812
      %v2877 = vadd.f32 %v2873, %v2813
      %v2878 = vadd.f32 %v2874, %v2814
      %v2879 = vadd.f32 %v2875, %v2815
      %v2880 = vadd.f32 %v2876, %v2816
      %v2881 = vadd.f32 %v2877, %v2817
      %v2882 = vadd.f32 %v2878, %v2818
      %v2883 = vadd.f32 %v2879, %v2819
      %v2884 = vadd.f32 %v2880, %v2820
      %v2885 = vadd.f32 %v2881, %v2821
      %v2886 = vadd.f32 %v2882, %v2822
      %v2887 = vadd.f32 %v2883, %v2823
      %v2888 = vadd.f32 %v2884, %v2824
      %v2889 = vadd.f32 %v2885, %v2825
      %v2890 = vadd.f32 %v2886, %v2826
      %v2891 = vadd.f32 %v2887, %v2827
      %v2892 = vadd.f32 %v2888, %v2828
      %v2893 = vadd.f32 %v2889, %v2829
      %v2894 = vadd.f32 %v2890, %v2830
      %v2895 = vadd.f32 %v2891, %v2831
      %v2896 = vadd.f32 %v2892, %v2832
      %v2897 = vmul.f32 %v2893, 0.33333334
      %v2898 = vmul.f32 %v2894, 0.33333334
      %v2899 = vmul.f32 %v2895, 0.33333334
      %v2900 = vmul.f32 %v2896, 0.33333334
      %v2901 = vld [vmem:[%s2] sm:$0xff]
      %v2902 = vld [vmem:[%s2 + $0x8] sm:$0xff]
      %v2903 = vld [vmem:[%s2 + $0x10] sm:$0xff]
      %v2904 = vld [vmem:[%s2 + $0x18] sm:$0xff]
      %v2905 = vld [vmem:[%s3] sm:$0xff]
      %v2906 = vld [vmem:[%s3 + $0x8] sm:$0xff]
      %v2907 = vld [vmem:[%s3 + $0x10] sm:$0xff]
      %v2908 = vld [vmem:[%s3 + $0x18] sm:$0xff]
      %2910 = vset.pattern.permute.xlu0 0
      %2911 = vperm.xlu0 %2910, %v2905
      %v2912 = vpop.permute.xlu0 %2911
      %2915 = vset.pattern.permute.xlu0 0
      %2916 = vperm.xlu0 %2915, %v2906
      %v2917 = vpop.permute.xlu0 %2916
      %2920 = vset.pattern.permute.xlu0 0
      %2921 = vperm.xlu0 %2920, %v2907
      %v2922 = vpop.permute.xlu0 %2921
      %2925 = vset.pattern.permute.xlu0 0
      %2926 = vperm.xlu0 %2925, %v2908
      %v2927 = vpop.permute.xlu0 %2926
      %vm2929 = vcmask 64512
      %v2931 = vsel %vm2929, %v2901, 0
      %v2934 = vsel %vm2929, %v2902, 0
      %v2937 = vsel %vm2929, %v2903, 0
      %v2940 = vsel %vm2929, %v2904, 0
      %2942 = vmatprep.subr.mxu0 0.0
      %2943 = vmatpush1.msra.mxu0 0.0
      %2944 = vmatprep.subr.mxu0 0.0
      %2945 = vmatpush1.msra.mxu0 0.0
      %2946 = vmatprep.subr.mxu0 0.0
      %2947 = vmatpush1.msra.mxu0 0.0
      %2948 = vmatprep.subr.mxu0 0.0
      %2949 = vmatpush1.msra.mxu0 0.0
      %2950 = vmatprep.subr.mxu0 0.0
      %2951 = vmatpush1.msra.mxu0 0.0
      %2952 = vmatprep.subr.mxu0 0.0
      %2953 = vmatpush1.msra.mxu0 0.0
      %2954 = vmatprep.subr.mxu0 0.0
      %2955 = vmatpush1.msra.mxu0 0.0
      %2956 = vmatprep.subr.mxu0 0.0
      %2957 = vmatpush1.msra.mxu0 0.0
      %2958 = vmatprep.subr.mxu0 0.0
      %2959 = vmatpush1.msra.mxu0 0.0
      %2960 = vmatprep.subr.mxu0 0.0
      %2961 = vmatpush1.msra.mxu0 0.0
      %2962 = vmatprep.subr.mxu0 0.0
      %2963 = vmatpush1.msra.mxu0 0.0
      %2964 = vmatprep.subr.mxu0 0.0
      %2965 = vmatpush1.msra.mxu0 0.0
      %2966 = vmatprep.subr.mxu0 0.0
      %2967 = vmatpush1.msra.mxu0 0.0
      %2968 = vmatprep.subr.mxu0 0.0
      %2969 = vmatpush1.msra.mxu0 0.0
      %2970 = vmatprep.subr.mxu0 0.0
      %2971 = vmatpush1.msra.mxu0 0.0
      %2972 = vmatprep.subr.mxu0 %v2898
      %2973 = vmatpush1.msra.mxu0 %v2897
      %2974 = vmatprep.subr.mxu0 0.0
      %2975 = vmatpush2.msra.mxu0 0.0
      %2976 = vmatprep.subr.mxu0 0.0
      %2977 = vmatpush2.msra.mxu0 0.0
      %2978 = vmatprep.subr.mxu0 0.0
      %2979 = vmatpush2.msra.mxu0 0.0
      %2980 = vmatprep.subr.mxu0 0.0
      %2981 = vmatpush2.msra.mxu0 0.0
      %2982 = vmatprep.subr.mxu0 0.0
      %2983 = vmatpush2.msra.mxu0 0.0
      %2984 = vmatprep.subr.mxu0 0.0
      %2985 = vmatpush2.msra.mxu0 0.0
      %2986 = vmatprep.subr.mxu0 0.0
      %2987 = vmatpush2.msra.mxu0 0.0
      %2988 = vmatprep.subr.mxu0 0.0
      %2989 = vmatpush2.msra.mxu0 0.0
      %2990 = vmatprep.subr.mxu0 0.0
      %2991 = vmatpush2.msra.mxu0 0.0
      %2992 = vmatprep.subr.mxu0 0.0
      %2993 = vmatpush2.msra.mxu0 0.0
      %2994 = vmatprep.subr.mxu0 0.0
      %2995 = vmatpush2.msra.mxu0 0.0
      %2996 = vmatprep.subr.mxu0 0.0
      %2997 = vmatpush2.msra.mxu0 0.0
      %2998 = vmatprep.subr.mxu0 0.0
      %2999 = vmatpush2.msra.mxu0 0.0
      %3000 = vmatprep.subr.mxu0 0.0
      %3001 = vmatpush2.msra.mxu0 0.0
      %3002 = vmatprep.subr.mxu0 0.0
      %3003 = vmatpush2.msra.mxu0 0.0
      %3004 = vmatprep.subr.mxu0 0.0
      %3005 = vmatpush2.msra.mxu0 0.0
      %3006 = vmatprep.mubr.f32.mxu0 0.0
      %3007 = vmatmul.mubr.f32.gmra.mxu0 %v2931
      %v3008 = vpop.f32.mrf.mxu0
      %v3009 = vadd.f32 %v2912, %v3008
      %v3010 = vpop.f32.mrf.mxu0
      %v3011 = vadd.f32 %v2912, %v3010
      %3012 = vmatprep.mubr.f32.mxu0 0.0
      %3013 = vmatmul.mubr.f32.gmra.mxu0 %v2934
      %v3014 = vpop.f32.mrf.mxu0
      %v3015 = vadd.f32 %v2917, %v3014
      %v3016 = vpop.f32.mrf.mxu0
      %v3017 = vadd.f32 %v2917, %v3016
      %3018 = vmatprep.mubr.f32.mxu0 0.0
      %3019 = vmatmul.mubr.f32.gmra.mxu0 %v2937
      %v3020 = vpop.f32.mrf.mxu0
      %v3021 = vadd.f32 %v2922, %v3020
      %v3022 = vpop.f32.mrf.mxu0
      %v3023 = vadd.f32 %v2922, %v3022
      %3024 = vmatprep.mubr.f32.mxu0 0.0
      %3025 = vmatmul.mubr.f32.gmra.mxu0 %v2940
      %v3026 = vpop.f32.mrf.mxu0
      %v3027 = vadd.f32 %v2927, %v3026
      %v3028 = vpop.f32.mrf.mxu0
      %v3029 = vadd.f32 %v2927, %v3028
      %3030 = vdwg.mxu0
      %3031 = vmatprep.subr.mxu0 0.0
      %3032 = vmatpush1.msra.mxu0 0.0
      %3033 = vmatprep.subr.mxu0 0.0
      %3034 = vmatpush1.msra.mxu0 0.0
      %3035 = vmatprep.subr.mxu0 0.0
      %3036 = vmatpush1.msra.mxu0 0.0
      %3037 = vmatprep.subr.mxu0 0.0
      %3038 = vmatpush1.msra.mxu0 0.0
      %3039 = vmatprep.subr.mxu0 0.0
      %3040 = vmatpush1.msra.mxu0 0.0
      %3041 = vmatprep.subr.mxu0 0.0
      %3042 = vmatpush1.msra.mxu0 0.0
      %3043 = vmatprep.subr.mxu0 0.0
      %3044 = vmatpush1.msra.mxu0 0.0
      %3045 = vmatprep.subr.mxu0 0.0
      %3046 = vmatpush1.msra.mxu0 0.0
      %3047 = vmatprep.subr.mxu0 0.0
      %3048 = vmatpush1.msra.mxu0 0.0
      %3049 = vmatprep.subr.mxu0 0.0
      %3050 = vmatpush1.msra.mxu0 0.0
      %3051 = vmatprep.subr.mxu0 0.0
      %3052 = vmatpush1.msra.mxu0 0.0
      %3053 = vmatprep.subr.mxu0 0.0
      %3054 = vmatpush1.msra.mxu0 0.0
      %3055 = vmatprep.subr.mxu0 0.0
      %3056 = vmatpush1.msra.mxu0 0.0
      %3057 = vmatprep.subr.mxu0 0.0
      %3058 = vmatpush1.msra.mxu0 0.0
      %3059 = vmatprep.subr.mxu0 0.0
      %3060 = vmatpush1.msra.mxu0 0.0
      %3061 = vmatprep.subr.mxu0 %v2900
      %3062 = vmatpush1.msra.mxu0 %v2899
      %3063 = vmatprep.subr.mxu0 0.0
      %3064 = vmatpush2.msra.mxu0 0.0
      %3065 = vmatprep.subr.mxu0 0.0
      %3066 = vmatpush2.msra.mxu0 0.0
      %3067 = vmatprep.subr.mxu0 0.0
      %3068 = vmatpush2.msra.mxu0 0.0
      %3069 = vmatprep.subr.mxu0 0.0
      %3070 = vmatpush2.msra.mxu0 0.0
      %3071 = vmatprep.subr.mxu0 0.0
      %3072 = vmatpush2.msra.mxu0 0.0
      %3073 = vmatprep.subr.mxu0 0.0
      %3074 = vmatpush2.msra.mxu0 0.0
      %3075 = vmatprep.subr.mxu0 0.0
      %3076 = vmatpush2.msra.mxu0 0.0
      %3077 = vmatprep.subr.mxu0 0.0
      %3078 = vmatpush2.msra.mxu0 0.0
      %3079 = vmatprep.subr.mxu0 0.0
      %3080 = vmatpush2.msra.mxu0 0.0
      %3081 = vmatprep.subr.mxu0 0.0
      %3082 = vmatpush2.msra.mxu0 0.0
      %3083 = vmatprep.subr.mxu0 0.0
      %3084 = vmatpush2.msra.mxu0 0.0
      %3085 = vmatprep.subr.mxu0 0.0
      %3086 = vmatpush2.msra.mxu0 0.0
      %3087 = vmatprep.subr.mxu0 0.0
      %3088 = vmatpush2.msra.mxu0 0.0
      %3089 = vmatprep.subr.mxu0 0.0
      %3090 = vmatpush2.msra.mxu0 0.0
      %3091 = vmatprep.subr.mxu0 0.0
      %3092 = vmatpush2.msra.mxu0 0.0
      %3093 = vmatprep.subr.mxu0 0.0
      %3094 = vmatpush2.msra.mxu0 0.0
      %3095 = vmatprep.mubr.f32.mxu0 0.0
      %3096 = vmatmul.mubr.f32.gmra.mxu0 %v2931
      %v3097 = vpop.f32.mrf.mxu0
      %v3098 = vadd.f32 %v2912, %v3097
      %v3099 = vpop.f32.mrf.mxu0
      %v3100 = vadd.f32 %v2912, %v3099
      %3101 = vmatprep.mubr.f32.mxu0 0.0
      %3102 = vmatmul.mubr.f32.gmra.mxu0 %v2934
      %v3103 = vpop.f32.mrf.mxu0
      %v3104 = vadd.f32 %v2917, %v3103
      %v3105 = vpop.f32.mrf.mxu0
      %v3106 = vadd.f32 %v2917, %v3105
      %3107 = vmatprep.mubr.f32.mxu0 0.0
      %3108 = vmatmul.mubr.f32.gmra.mxu0 %v2937
      %v3109 = vpop.f32.mrf.mxu0
      %v3110 = vadd.f32 %v2922, %v3109
      %v3111 = vpop.f32.mrf.mxu0
      %v3112 = vadd.f32 %v2922, %v3111
      %3113 = vmatprep.mubr.f32.mxu0 0.0
      %3114 = vmatmul.mubr.f32.gmra.mxu0 %v2940
      %v3115 = vpop.f32.mrf.mxu0
      %v3116 = vadd.f32 %v2927, %v3115
      %v3117 = vpop.f32.mrf.mxu0
      %v3118 = vadd.f32 %v2927, %v3117
      %3119 = vdwg.mxu0
      %v3120 = vmax.f32 %v3009, 0.0
      %v3121 = vmax.f32 %v3011, 0.0
      %v3122 = vmax.f32 %v3098, 0.0
      %v3123 = vmax.f32 %v3100, 0.0
      %v3124 = vmax.f32 %v3015, 0.0
      %v3125 = vmax.f32 %v3017, 0.0
      %v3126 = vmax.f32 %v3104, 0.0
      %v3127 = vmax.f32 %v3106, 0.0
      %v3128 = vmax.f32 %v3021, 0.0
      %v3129 = vmax.f32 %v3023, 0.0
      %v3130 = vmax.f32 %v3110, 0.0
      %v3131 = vmax.f32 %v3112, 0.0
      %v3132 = vmax.f32 %v3027, 0.0
      %v3133 = vmax.f32 %v3029, 0.0
      %v3134 = vmax.f32 %v3116, 0.0
      %v3135 = vmax.f32 %v3118, 0.0
      %v3136 = vld [vmem:[%s4] sm:$0xf]
      %v3137 = vld [vmem:[%s5] sm:$0xf]
      %3139 = vset.pattern.permute.xlu0 0
      %3140 = vperm.xlu0 %3139, %v3137
      %v3141 = vpop.permute.xlu0 %3140
      %vm3143 = vcmask 261120
      %v3145 = vsel %vm3143, %v3136, 0
      %3147 = vmatprep.subr.mxu0 0.0
      %3148 = vmatpush1.msra.mxu0 0.0
      %3149 = vmatprep.subr.mxu0 0.0
      %3150 = vmatpush1.msra.mxu0 0.0
      %3151 = vmatprep.subr.mxu0 0.0
      %3152 = vmatpush1.msra.mxu0 0.0
      %3153 = vmatprep.subr.mxu0 0.0
      %3154 = vmatpush1.msra.mxu0 0.0
      %3155 = vmatprep.subr.mxu0 0.0
      %3156 = vmatpush1.msra.mxu0 0.0
      %3157 = vmatprep.subr.mxu0 0.0
      %3158 = vmatpush1.msra.mxu0 0.0
      %3159 = vmatprep.subr.mxu0 0.0
      %3160 = vmatpush1.msra.mxu0 0.0
      %3161 = vmatprep.subr.mxu0 0.0
      %3162 = vmatpush1.msra.mxu0 0.0
      %3163 = vmatprep.subr.mxu0 0.0
      %3164 = vmatpush1.msra.mxu0 0.0
      %3165 = vmatprep.subr.mxu0 0.0
      %3166 = vmatpush1.msra.mxu0 0.0
      %3167 = vmatprep.subr.mxu0 0.0
      %3168 = vmatpush1.msra.mxu0 0.0
      %3169 = vmatprep.subr.mxu0 0.0
      %3170 = vmatpush1.msra.mxu0 0.0
      %3171 = vmatprep.subr.mxu0 %v3133
      %3172 = vmatpush1.msra.mxu0 %v3132
      %3173 = vmatprep.subr.mxu0 %v3129
      %3174 = vmatpush1.msra.mxu0 %v3128
      %3175 = vmatprep.subr.mxu0 %v3125
      %3176 = vmatpush1.msra.mxu0 %v3124
      %3177 = vmatprep.subr.mxu0 %v3121
      %3178 = vmatpush1.msra.mxu0 %v3120
      %3179 = vmatprep.subr.mxu0 0.0
      %3180 = vmatpush2.msra.mxu0 0.0
      %3181 = vmatprep.subr.mxu0 0.0
      %3182 = vmatpush2.msra.mxu0 0.0
      %3183 = vmatprep.subr.mxu0 0.0
      %3184 = vmatpush2.msra.mxu0 0.0
      %3185 = vmatprep.subr.mxu0 0.0
      %3186 = vmatpush2.msra.mxu0 0.0
      %3187 = vmatprep.subr.mxu0 0.0
      %3188 = vmatpush2.msra.mxu0 0.0
      %3189 = vmatprep.subr.mxu0 0.0
      %3190 = vmatpush2.msra.mxu0 0.0
      %3191 = vmatprep.subr.mxu0 0.0
      %3192 = vmatpush2.msra.mxu0 0.0
      %3193 = vmatprep.subr.mxu0 0.0
      %3194 = vmatpush2.msra.mxu0 0.0
      %3195 = vmatprep.subr.mxu0 0.0
      %3196 = vmatpush2.msra.mxu0 0.0
      %3197 = vmatprep.subr.mxu0 0.0
      %3198 = vmatpush2.msra.mxu0 0.0
      %3199 = vmatprep.subr.mxu0 0.0
      %3200 = vmatpush2.msra.mxu0 0.0
      %3201 = vmatprep.subr.mxu0 0.0
      %3202 = vmatpush2.msra.mxu0 0.0
      %3203 = vmatprep.subr.mxu0 0.0
      %3204 = vmatpush2.msra.mxu0 0.0
      %3205 = vmatprep.subr.mxu0 0.0
      %3206 = vmatpush2.msra.mxu0 0.0
      %3207 = vmatprep.subr.mxu0 0.0
      %3208 = vmatpush2.msra.mxu0 0.0
      %3209 = vmatprep.subr.mxu0 0.0
      %3210 = vmatpush2.msra.mxu0 0.0
      %3211 = vmatprep.mubr.f32.mxu0 0.0
      %3212 = vmatmul.mubr.f32.gmra.mxu0 %v3145
      %v3213 = vpop.f32.mrf.mxu0
      %v3214 = vadd.f32 %v3141, %v3213
      %v3215 = vpop.f32.mrf.mxu0
      %v3216 = vadd.f32 %v3141, %v3215
      %3217 = vdwg.mxu0
      %3218 = vmatprep.subr.mxu0 0.0
      %3219 = vmatpush1.msra.mxu0 0.0
      %3220 = vmatprep.subr.mxu0 0.0
      %3221 = vmatpush1.msra.mxu0 0.0
      %3222 = vmatprep.subr.mxu0 0.0
      %3223 = vmatpush1.msra.mxu0 0.0
      %3224 = vmatprep.subr.mxu0 0.0
      %3225 = vmatpush1.msra.mxu0 0.0
      %3226 = vmatprep.subr.mxu0 0.0
      %3227 = vmatpush1.msra.mxu0 0.0
      %3228 = vmatprep.subr.mxu0 0.0
      %3229 = vmatpush1.msra.mxu0 0.0
      %3230 = vmatprep.subr.mxu0 0.0
      %3231 = vmatpush1.msra.mxu0 0.0
      %3232 = vmatprep.subr.mxu0 0.0
      %3233 = vmatpush1.msra.mxu0 0.0
      %3234 = vmatprep.subr.mxu0 0.0
      %3235 = vmatpush1.msra.mxu0 0.0
      %3236 = vmatprep.subr.mxu0 0.0
      %3237 = vmatpush1.msra.mxu0 0.0
      %3238 = vmatprep.subr.mxu0 0.0
      %3239 = vmatpush1.msra.mxu0 0.0
      %3240 = vmatprep.subr.mxu0 0.0
      %3241 = vmatpush1.msra.mxu0 0.0
      %3242 = vmatprep.subr.mxu0 %v3135
      %3243 = vmatpush1.msra.mxu0 %v3134
      %3244 = vmatprep.subr.mxu0 %v3131
      %3245 = vmatpush1.msra.mxu0 %v3130
      %3246 = vmatprep.subr.mxu0 %v3127
      %3247 = vmatpush1.msra.mxu0 %v3126
      %3248 = vmatprep.subr.mxu0 %v3123
      %3249 = vmatpush1.msra.mxu0 %v3122
      %3250 = vmatprep.subr.mxu0 0.0
      %3251 = vmatpush2.msra.mxu0 0.0
      %3252 = vmatprep.subr.mxu0 0.0
      %3253 = vmatpush2.msra.mxu0 0.0
      %3254 = vmatprep.subr.mxu0 0.0
      %3255 = vmatpush2.msra.mxu0 0.0
      %3256 = vmatprep.subr.mxu0 0.0
      %3257 = vmatpush2.msra.mxu0 0.0
      %3258 = vmatprep.subr.mxu0 0.0
      %3259 = vmatpush2.msra.mxu0 0.0
      %3260 = vmatprep.subr.mxu0 0.0
      %3261 = vmatpush2.msra.mxu0 0.0
      %3262 = vmatprep.subr.mxu0 0.0
      %3263 = vmatpush2.msra.mxu0 0.0
      %3264 = vmatprep.subr.mxu0 0.0
      %3265 = vmatpush2.msra.mxu0 0.0
      %3266 = vmatprep.subr.mxu0 0.0
      %3267 = vmatpush2.msra.mxu0 0.0
      %3268 = vmatprep.subr.mxu0 0.0
      %3269 = vmatpush2.msra.mxu0 0.0
      %3270 = vmatprep.subr.mxu0 0.0
      %3271 = vmatpush2.msra.mxu0 0.0
      %3272 = vmatprep.subr.mxu0 0.0
      %3273 = vmatpush2.msra.mxu0 0.0
      %3274 = vmatprep.subr.mxu0 0.0
      %3275 = vmatpush2.msra.mxu0 0.0
      %3276 = vmatprep.subr.mxu0 0.0
      %3277 = vmatpush2.msra.mxu0 0.0
      %3278 = vmatprep.subr.mxu0 0.0
      %3279 = vmatpush2.msra.mxu0 0.0
      %3280 = vmatprep.subr.mxu0 0.0
      %3281 = vmatpush2.msra.mxu0 0.0
      %3282 = vmatprep.mubr.f32.mxu0 0.0
      %3283 = vmatmul.mubr.f32.gmra.mxu0 %v3145
      %v3284 = vpop.f32.mrf.mxu0
      %v3285 = vadd.f32 %v3141, %v3284
      %v3286 = vpop.f32.mrf.mxu0
      %v3287 = vadd.f32 %v3141, %v3286
      %3288 = vdwg.mxu0
      %v3289 = vsub.f32 0.0, %v3214
      %v3290 = vsub.f32 0.0, %v3216
      %v3291 = vsub.f32 0.0, %v3285
      %v3292 = vsub.f32 0.0, %v3287
      %v3293 = vmul.f32 %v3289, 1.442695
      %v3294 = vpow.pop %v3293
      %v3295 = vmul.f32 %v3290, 1.442695
      %v3296 = vpow.pop %v3295
      %v3297 = vmul.f32 %v3291, 1.442695
      %v3298 = vpow.pop %v3297
      %v3299 = vmul.f32 %v3292, 1.442695
      %v3300 = vpow.pop %v3299
      %v3301 = vadd.f32 %v3294, 1.0
      %v3302 = vadd.f32 %v3296, 1.0
      %v3303 = vadd.f32 %v3298, 1.0
      %v3304 = vadd.f32 %v3300, 1.0
      %v3305 = vrcp.pop %v3301
      %v3306 = vrcp.pop %v3302
      %v3307 = vrcp.pop %v3303
      %v3308 = vrcp.pop %v3304
      %v3309 = vmul.f32 %v3305, 1.002
      %v3310 = vmul.f32 %v3306, 1.002
      %v3311 = vmul.f32 %v3307, 1.002
      %v3312 = vmul.f32 %v3308, 1.002
      %v3313 = vsub.f32 %v3309, 0.001
      %v3314 = vsub.f32 %v3310, 0.001
      %v3315 = vsub.f32 %v3311, 0.001
      %v3316 = vsub.f32 %v3312, 0.001
      %vm3317 = vcmp.eq.s32.totalorder %v287, 0
      %v3318 = vsel %vm3317, %v3214, %v3313
      %v3319 = vsel %vm3317, %v3216, %v3314
      %v3320 = vsel %vm3317, %v3285, %v3315
      %v3321 = vsel %vm3317, %v3287, %v3316
      %v3326 = vcombine.low %v3318, %v3319
      %v3327 = vcombine.low %v3320, %v3321
      %3330 = vst [vmem:[#allocation2] sm:$0xff] %v3326
      %3331 = vst [vmem:[#allocation2 + $0x8] sm:$0xff] %v3327
      %v3332 = vld [vmem:[#allocation2] sm:$0x1]
      %v3333 = vld [vmem:[#allocation2] sm:$0xe]
      %v3334 = vsub.f32 %v3332, 1.0
      %v3335 = vmax.f32 %v3334, 0.0
      %v3336 = vand.u32 2147483647, %v3334
      %v3337 = vsub.f32 0.0, %v3336
      %v3338 = vmul.f32 %v3337, 1.442695
      %v3339 = vpow.pop %v3338
      %v3340 = vadd.f32 %v3339, 1.0
      %v3341 = vlog2.pop %v3340
      %v3342 = vmul.f32 %v3341, 0.6931472
      %v3343 = vadd.f32 %v3335, %v3342
      %v3344 = vsub.f32 0.0, %v3343
      %v3345 = vmul.f32 %v3344, 0.28571427
      %v3346 = vmul.f32 %v3345, 1.442695
      %v3347 = vpow.pop %v3346
      %v3348 = vsub.f32 1.0, %v3347
      %v3349 = vlaneseq
      %v3350 = vshrl.u32 %v3349, 7
      %v3351 = vsub.s32 0, %v3350
      %v3352 = vrot.slane %v3348, %v3351
      %v3354 = vrot.slane %v3333, 1
      %v3356 = vmul.f32 %v3352, %v3354
      %v3357 = vadd.f32 %v3356, 0.0
      %v3358 = vadd.f32 %v3348, 0.0
      %v3359 = vsub.f32 1.0, %v3348
      %v3360 = vadd.f32 %v3359, 1e-10
      %3362 = vrot.lane.b32.xlu0 %v3360, 64
      %v3363 = vpop.permute.xlu0 %3362
      %v3365 = vmul.f32 %v3348, %v3363
      %v3366 = vlaneseq
      %v3367 = vshrl.u32 %v3366, 7
      %v3368 = vsub.s32 0, %v3367
      %v3369 = vrot.slane %v3365, %v3368
      %v3370 = vmul.f32 %v3369, %v3354
      %3372 = vrot.lane.b32.xlu0 %v3370, 64
      %v3373 = vpop.permute.xlu0 %3372
      %v3375 = vadd.f32 %v3357, %v3373
      %v3376 = vmul.f32 %v3365, 1.2857143
      %3378 = vrot.lane.b32.xlu0 %v3376, 64
      %v3379 = vpop.permute.xlu0 %3378
      %v3381 = vadd.f32 %v3358, %v3379
      %3383 = vrot.lane.b32.xlu0 %v3365, 64
      %v3384 = vpop.permute.xlu0 %3383
      %v3386 = vadd.f32 %v3358, %v3384
      %v3387 = vmul.f32 %v3360, %v3363
      %v3388 = vld [vmem:[#allocation2 + $0x4] sm:$0x1]
      %v3389 = vld [vmem:[#allocation2 + $0x4] sm:$0xe]
      %v3390 = vsub.f32 %v3388, 1.0
      %v3391 = vmax.f32 %v3390, 0.0
      %v3392 = vand.u32 2147483647, %v3390
      %v3393 = vsub.f32 0.0, %v3392
      %v3394 = vmul.f32 %v3393, 1.442695
      %v3395 = vpow.pop %v3394
      %v3396 = vadd.f32 %v3395, 1.0
      %v3397 = vlog2.pop %v3396
      %v3398 = vmul.f32 %v3397, 0.6931472
      %v3399 = vadd.f32 %v3391, %v3398
      %v3400 = vsub.f32 0.0, %v3399
      %v3401 = vmul.f32 %v3400, 0.28571427
      %v3402 = vmul.f32 %v3401, 1.442695
      %v3403 = vpow.pop %v3402
      %v3404 = vsub.f32 1.0, %v3403
      %v3405 = vmul.f32 %v3404, %v3387
      %v3406 = vlaneseq
      %v3407 = vshrl.u32 %v3406, 7
      %v3408 = vsub.s32 0, %v3407
      %v3409 = vrot.slane %v3405, %v3408
      %v3411 = vrot.slane %v3389, 1
      %v3413 = vmul.f32 %v3409, %v3411
      %v3414 = vadd.f32 %v3375, %v3413
      %v3415 = vmul.f32 %v3405, 1.5714285
      %v3416 = vadd.f32 %v3381, %v3415
      %v3417 = vadd.f32 %v3386, %v3405
      %v3418 = vsub.f32 1.0, %v3404
      %v3419 = vadd.f32 %v3418, 1e-10
      %v3420 = vmul.f32 %v3387, %v3419
      %3422 = vrot.lane.b32.xlu0 %v3420, 64
      %v3423 = vpop.permute.xlu0 %3422
      %v3425 = vmul.f32 %v3404, %v3423
      %v3426 = vlaneseq
      %v3427 = vshrl.u32 %v3426, 7
      %v3428 = vsub.s32 0, %v3427
      %v3429 = vrot.slane %v3425, %v3428
      %v3430 = vmul.f32 %v3429, %v3411
      %3432 = vrot.lane.b32.xlu0 %v3430, 64
      %v3433 = vpop.permute.xlu0 %3432
      %v3435 = vadd.f32 %v3414, %v3433
      %v3436 = vmul.f32 %v3425, 1.8571428
      %3438 = vrot.lane.b32.xlu0 %v3436, 64
      %v3439 = vpop.permute.xlu0 %3438
      %v3441 = vadd.f32 %v3416, %v3439
      %3443 = vrot.lane.b32.xlu0 %v3425, 64
      %v3444 = vpop.permute.xlu0 %3443
      %v3446 = vadd.f32 %v3417, %v3444
      %3448 = vrot.lane.b32.xlu0 %v3419, 64
      %v3449 = vpop.permute.xlu0 %3448
      %v3451 = vmul.f32 %v3420, %v3449
      %v3452 = vld [vmem:[#allocation2 + $0x8] sm:$0x1]
      %v3453 = vld [vmem:[#allocation2 + $0x8] sm:$0xe]
      %v3454 = vsub.f32 %v3452, 1.0
      %v3455 = vmax.f32 %v3454, 0.0
      %v3456 = vand.u32 2147483647, %v3454
      %v3457 = vsub.f32 0.0, %v3456
      %v3458 = vmul.f32 %v3457, 1.442695
      %v3459 = vpow.pop %v3458
      %v3460 = vadd.f32 %v3459, 1.0
      %v3461 = vlog2.pop %v3460
      %v3462 = vmul.f32 %v3461, 0.6931472
      %v3463 = vadd.f32 %v3455, %v3462
      %v3464 = vsub.f32 0.0, %v3463
      %v3465 = vmul.f32 %v3464, 0.2857144
      %v3466 = vmul.f32 %v3465, 1.442695
      %v3467 = vpow.pop %v3466
      %v3468 = vsub.f32 1.0, %v3467
      %v3469 = vmul.f32 %v3468, %v3451
      %v3470 = vlaneseq
      %v3471 = vshrl.u32 %v3470, 7
      %v3472 = vsub.s32 0, %v3471
      %v3473 = vrot.slane %v3469, %v3472
      %v3475 = vrot.slane %v3453, 1
      %v3477 = vmul.f32 %v3473, %v3475
      %v3478 = vadd.f32 %v3435, %v3477
      %v3479 = vmul.f32 %v3469, 2.142857
      %v3480 = vadd.f32 %v3441, %v3479
      %v3481 = vadd.f32 %v3446, %v3469
      %v3482 = vsub.f32 1.0, %v3468
      %v3483 = vadd.f32 %v3482, 1e-10
      %v3484 = vmul.f32 %v3451, %v3483
      %v3485 = vmul.f32 %v3464, 0.28571415
      %v3486 = vmul.f32 %v3485, 1.442695
      %v3487 = vpow.pop %v3486
      %v3488 = vsub.f32 1.0, %v3487
      %3490 = vrot.lane.b32.xlu0 %v3484, 64
      %v3491 = vpop.permute.xlu0 %3490
      %v3493 = vmul.f32 %v3488, %v3491
      %v3494 = vlaneseq
      %v3495 = vshrl.u32 %v3494, 7
      %v3496 = vsub.s32 0, %v3495
      %v3497 = vrot.slane %v3493, %v3496
      %v3498 = vmul.f32 %v3497, %v3475
      %3500 = vrot.lane.b32.xlu0 %v3498, 64
      %v3501 = vpop.permute.xlu0 %3500
      %v3503 = vadd.f32 %v3478, %v3501
      %v3504 = vmul.f32 %v3493, 2.4285715
      %3506 = vrot.lane.b32.xlu0 %v3504, 64
      %v3507 = vpop.permute.xlu0 %3506
      %v3509 = vadd.f32 %v3480, %v3507
      %3511 = vrot.lane.b32.xlu0 %v3493, 64
      %v3512 = vpop.permute.xlu0 %3511
      %v3514 = vadd.f32 %v3481, %v3512
      %v3515 = vsub.f32 1.0, %v3488
      %v3516 = vadd.f32 %v3515, 1e-10
      %3518 = vrot.lane.b32.xlu0 %v3516, 64
      %v3519 = vpop.permute.xlu0 %3518
      %v3521 = vmul.f32 %v3484, %v3519
      %v3522 = vld [vmem:[#allocation2 + $0xc] sm:$0x1]
      %v3523 = vld [vmem:[#allocation2 + $0xc] sm:$0xe]
      %v3524 = vsub.f32 %v3522, 1.0
      %v3525 = vmax.f32 %v3524, 0.0
      %v3526 = vand.u32 2147483647, %v3524
      %v3527 = vsub.f32 0.0, %v3526
      %v3528 = vmul.f32 %v3527, 1.442695
      %v3529 = vpow.pop %v3528
      %v3530 = vadd.f32 %v3529, 1.0
      %v3531 = vlog2.pop %v3530
      %v3532 = vmul.f32 %v3531, 0.6931472
      %v3533 = vadd.f32 %v3525, %v3532
      %v3534 = vsub.f32 0.0, %v3533
      %v3535 = vmul.f32 %v3534, 0.2857144
      %v3536 = vmul.f32 %v3535, 1.442695
      %v3537 = vpow.pop %v3536
      %v3538 = vsub.f32 1.0, %v3537
      %v3539 = vmul.f32 %v3538, %v3521
      %v3540 = vlaneseq
      %v3541 = vshrl.u32 %v3540, 7
      %v3542 = vsub.s32 0, %v3541
      %v3543 = vrot.slane %v3539, %v3542
      %v3545 = vrot.slane %v3523, 1
      %v3547 = vmul.f32 %v3543, %v3545
      %v3548 = vadd.f32 %v3503, %v3547
      %v3549 = vmul.f32 %v3539, 2.7142856
      %v3550 = vadd.f32 %v3509, %v3549
      %v3551 = vadd.f32 %v3514, %v3539
      %v3552 = vsub.f32 1.0, %v3538
      %v3553 = vadd.f32 %v3552, 1e-10
      %v3554 = vmul.f32 %v3521, %v3553
      %v3555 = vmul.f32 %v3534, 0.0
      %v3556 = vmul.f32 %v3555, 1.442695
      %v3557 = vpow.pop %v3556
      %v3558 = vsub.f32 1.0, %v3557
      %3560 = vrot.lane.b32.xlu0 %v3554, 64
      %v3561 = vpop.permute.xlu0 %3560
      %v3563 = vmul.f32 %v3558, %v3561
      %v3564 = vlaneseq
      %v3565 = vshrl.u32 %v3564, 7
      %v3566 = vsub.s32 0, %v3565
      %v3567 = vrot.slane %v3563, %v3566
      %v3568 = vmul.f32 %v3567, %v3545
      %3570 = vrot.lane.b32.xlu0 %v3568, 64
      %v3571 = vpop.permute.xlu0 %3570
      %v3573 = vadd.f32 %v3548, %v3571
      %v3574 = vmul.f32 %v3563, 3.0
      %3576 = vrot.lane.b32.xlu0 %v3574, 64
      %v3577 = vpop.permute.xlu0 %3576
      %v3579 = vadd.f32 %v3550, %v3577
      %3581 = vrot.lane.b32.xlu0 %v3563, 64
      %v3582 = vpop.permute.xlu0 %3581
      %v3584 = vadd.f32 %v3551, %v3582
      %v3585 = vmul.f32 %v3573, 2.0
      %v3586 = vsub.f32 %v3585, 1.0
      %vm3587 = vcmask 518144
      %3588 = vst.msk [vmem:[%s282] sm:$0x7] %vm3587, %v3586
      %v3589 = vsub.f32 1.0, %v3584
      %v3590 = vmul.f32 %v3589, 3.0
      %v3591 = vadd.f32 %v3579, %v3590
      %vm3592 = vcmask 516096
      %3593 = vst.msk [vmem:[%s285] sm:$0x1] %vm3592, %v3591
      %p3594 = scmp.lt.s32.totalorder %s19, 1
      %s3595 = scalar_select %p3594, %s19, 1
      %s3596 = smul.addr %s3595, 4
      %s3597 = scalar_lea.vmem %s6, %s3596
      %p3598 = scmp.lt.s32.totalorder %s19, 1
      %s3599 = scalar_select %p3598, %s19, 1
      %s3600 = scalar_lea.vmem %s7, %s3599
      // Predicated region
      $region45: #{pixel_nerf_forward.1} parent=43 // pred_check
        %p3601 = pneg %p168
      $region46: #{pixel_nerf_forward.1} parent=43 // pred_check_branch
        %3603 = sbr.rel (%p3601) target = $region48
      $region47: #{pixel_nerf_forward.1} parent=43 // pred_region
        _
      $region48: #{pixel_nerf_forward.1} parent=43 // pred_fallthru
        _
      // Predicated region
      $region49: #{pixel_nerf_forward.1} parent=43 // pred_check
        %p3604 = pneg %p194
      $region50: #{pixel_nerf_forward.1} parent=43 // pred_check_branch
        %3606 = sbr.rel (%p3604) target = $region52
      $region51: #{pixel_nerf_forward.1} parent=43 // pred_region
        _
      $region52: #{pixel_nerf_forward.1} parent=43 // pred_fallthru
        _
    $region44: #{pixel_nerf_forward.1} parent=5 // pred_fallthru
      _
    %p3607 = scmp.le.s32.totalorder 2, %s14
    // Predicated region
    $region53: #{pixel_nerf_forward.1} parent=5 // pred_check
      %p3608 = pneg %p3607
    $region54: #{pixel_nerf_forward.1} parent=5 // pred_check_branch
      %3610 = sbr.rel (%p3608) target = $region56
    $region55: #{pixel_nerf_forward.1} parent=5 // pred_region
      %s3611 = ssub.s32 %s14, 2
      // Predicated region
      $region57: #{pixel_nerf_forward.1} parent=55 // pred_check
        %p3612 = pneg %p174
      $region58: #{pixel_nerf_forward.1} parent=55 // pred_check_branch
        %3614 = sbr.rel (%p3612) target = $region60
      $region59: #{pixel_nerf_forward.1} parent=55 // pred_region
        %p3615 = scmp.lt.s32.totalorder %s20, 1
        %s3616 = scalar_select %p3615, %s20, 1
        %s3617 = smul.addr %s3616, 4
        %s3618 = scalar_lea.vmem %s6, %s3617
      $region60: #{pixel_nerf_forward.1} parent=55 // pred_fallthru
        _
      // Predicated region
      $region61: #{pixel_nerf_forward.1} parent=55 // pred_check
        %p3619 = pneg %p200
      $region62: #{pixel_nerf_forward.1} parent=55 // pred_check_branch
        %3621 = sbr.rel (%p3619) target = $region64
      $region63: #{pixel_nerf_forward.1} parent=55 // pred_region
        %p3622 = scmp.lt.s32.totalorder %s20, 1
        %s3623 = scalar_select %p3622, %s20, 1
        %s3624 = scalar_lea.vmem %s7, %s3623
      $region64: #{pixel_nerf_forward.1} parent=55 // pred_fallthru
        _
    $region56: #{pixel_nerf_forward.1} parent=5 // pred_fallthru
      _
  $region6: #{pixel_nerf_forward.1} parent=0 // loop_footer
    %s18 = sadd.s32 1, %s14
  $region7: #{pixel_nerf_forward.1} parent=0 // loop_footer_branch
    %13 = sbr.rel target = $region3
  $region8: #{pixel_nerf_forward.1} parent=0 // loop_exit
    _

</llo_original>
